<compile_context>
chip_gen: v5e
topology: v5e:2x2
jax: 0.10.0
libtpu: 0.0.40
codegen_flags: <defaults>
</compile_context>

<pallas_src>
import functools
import math

import jax
import jax.numpy as jnp
from jax import lax
from jax.experimental import pallas as pl
from jax.experimental.pallas import tpu as pltpu


# ----------------------------------------------------------------------------- in-kernel helpers

def _mha(x_q, x_kv, mask, wq, bq, wk, bk, wv, bv, wo, bo, *, num_heads):
    """Multi-head attention for one batch element, head-batched on the MXU.

    x_q (S,E) f32, x_kv (Skv,E) f32, mask (S,Skv) additive f32.
    Weight matrices are bf16 (MXU fast path); biases f32; softmax math in f32.
    """
    E = wq.shape[1]
    d_head = E // num_heads
    scale = 1.0 / math.sqrt(d_head)

    xq16 = x_q.astype(jnp.bfloat16)
    xkv16 = x_kv.astype(jnp.bfloat16)

    # Full-depth (E-deep) QKV projections; fold 1/sqrt(d_head) into q once.
    q = (jnp.dot(xq16, wq, preferred_element_type=jnp.float32) + bq) * scale
    k = jnp.dot(xkv16, wk, preferred_element_type=jnp.float32) + bk
    v = jnp.dot(xkv16, wv, preferred_element_type=jnp.float32) + bv

    # Re-pack heads once to a leading batch dim (H, S, Dh).  This replaces the
    # previous per-head Python loop (H live intermediates + final lane concat)
    # with two batched matmuls; live ranges are bounded to 3 stacked arrays.
    q16 = q.astype(jnp.bfloat16)
    k16 = k.astype(jnp.bfloat16)
    v16 = v.astype(jnp.bfloat16)
    qh = jnp.stack([q16[:, h * d_head:(h + 1) * d_head] for h in range(num_heads)], axis=0)
    kh = jnp.stack([k16[:, h * d_head:(h + 1) * d_head] for h in range(num_heads)], axis=0)
    vh = jnp.stack([v16[:, h * d_head:(h + 1) * d_head] for h in range(num_heads)], axis=0)

    # ONE batched QK^T over all heads (no materialized transpose) ...
    scores = jnp.einsum("hqd,hkd->hqk", qh, kh,
                        preferred_element_type=jnp.float32) + mask[None, :, :]
    scores = scores - jnp.max(scores, axis=-1, keepdims=True)
    p = jnp.exp(scores)
    p = p * pl.reciprocal(jnp.sum(p, axis=-1, keepdims=True), approx=True)

    # ... and ONE batched P@V over all heads.
    ctx = jnp.einsum("hqk,hkd->hqd", p.astype(jnp.bfloat16), vh,
                     preferred_element_type=jnp.float32)           # (H, S, Dh)

    # Re-pack heads along lanes -> single full-depth (E) output projection.
    ctx = jnp.concatenate([ctx[h] for h in range(num_heads)], axis=-1)   # (S, E)
    return jnp.dot(ctx.astype(jnp.bfloat16), wo, preferred_element_type=jnp.float32) + bo


def _add_ln(y, skip, gamma, beta, eps):
    """Residual add + LayerNorm over the last axis (f32)."""
    z = y + skip
    mean = jnp.mean(z, axis=-1, keepdims=True)
    var = jnp.mean(jnp.square(z - mean), axis=-1, keepdims=True)
    return (z - mean) * lax.rsqrt(var + eps) * gamma + beta


# ----------------------------------------------------------------------------- fused kernel

def _decoder_layer_kernel(
        x_ref, enc_ref, smask_ref, cmask_ref,
        # self-attention weights / ln1
        swq, sbq, swk, sbk, swv, sbv, swo, sbo, g1, be1,
        # cross-attention weights / ln2
        cwq, cbq, cwk, cbk, cwv, cbv, cwo, cbo, g2, be2,
        # feed-forward weights / ln3
        fw1, fb1, fw2, fb2, g3, be3,
        out_ref, *, num_heads, eps):
    x = x_ref[0].astype(jnp.float32)                 # (S, E)
    enc = enc_ref[0].astype(jnp.float32)             # (Senc, E)
    smask = smask_ref[0].astype(jnp.float32)         # (S, S)    additive
    cmask = cmask_ref[0].astype(jnp.float32)         # (S, Senc) additive

    # self-attention block (K/V derived from same tensor); dropout_1 = identity
    y = _mha(x, x, smask,
             swq[...], sbq[...], swk[...], sbk[...], swv[...], sbv[...],
             swo[...], sbo[...], num_heads=num_heads)
    y = _add_ln(y, x, g1[...], be1[...], eps)

    # cross-attention block (Q from decoder state, K/V from encoder output); dropout_2 = identity
    y2 = _mha(y, enc, cmask,
              cwq[...], cbq[...], cwk[...], cbk[...], cwv[...], cbv[...],
              cwo[...], cbo[...], num_heads=num_heads)
    y2 = _add_ln(y2, y, g2[...], be2[...], eps)

    # feed-forward block: Linear -> ReLU -> Linear; dropout_3 = identity
    h = jnp.dot(y2.astype(jnp.bfloat16), fw1[...], preferred_element_type=jnp.float32) + fb1[...]
    h = jnp.maximum(h, 0.0)
    ff = jnp.dot(h.astype(jnp.bfloat16), fw2[...], preferred_element_type=jnp.float32) + fb2[...]
    out = _add_ln(ff, y2, g3[...], be3[...], eps)

    out_ref[0] = out.astype(out_ref.dtype)


# ----------------------------------------------------------------------------- wrapper

def _full_spec(shape):
    nd = len(shape)
    return pl.BlockSpec(shape, lambda b: (0,) * nd)


def _vmem_limit_bytes(S, S_enc, E, F, num_heads):
    """Explicit VMEM budget from actual residency (weights are double-buffered
    by default; add working set + headroom), clamped to a v7x-safe 64 MiB."""
    bf, f4 = 2, 4
    weights = (8 * E * E + 2 * E * F) * bf                 # ten bf16 matmul weights
    smalls = (10 * E + F + 6 * E) * f4                     # biases + LN params
    io_blk = (2 * S * E + S_enc * E) * f4 + (S * S + S * S_enc) * bf
    skv = max(S, S_enc)
    working = (3 * skv * E + 2 * num_heads * S * skv + S * F + 6 * S * E) * f4
    est = 2 * (weights + smalls + io_blk) + working
    return int(min(max(2 * est, 24 * 2**20), 64 * 2**20))


def prepare_params(params):
    """Cast the ten matmul weight matrices to bf16 ONCE, outside the per-call
    hot path (avoids per-forward f32->bf16 convert traffic)."""
    bf16 = jnp.bfloat16

    def _attn(p):
        return {**p, "wq": p["wq"].astype(bf16), "wk": p["wk"].astype(bf16),
                "wv": p["wv"].astype(bf16), "wo": p["wo"].astype(bf16)}

    out = dict(params)
    out["self_attn"] = _attn(params["self_attn"])
    out["cross_attn"] = _attn(params["cross_attn"])
    out["ffn"] = {**params["ffn"],
                  "w1": params["ffn"]["w1"].astype(bf16),
                  "w2": params["ffn"]["w2"].astype(bf16)}
    return out


def decoder_layer_pallas(encoder_output, x, self_mask, cross_mask, params, num_heads, eps=1e-5):
    """params must come from prepare_params (bf16 matmul weights, f32 biases/LN)."""
    B, S, E = x.shape
    S_enc = encoder_output.shape[1]
    F = params["ffn"]["w1"].shape[1]
    assert E % num_heads == 0, "embedding dim must be divisible by num_heads"

    sa, ca, fp = params["self_attn"], params["cross_attn"], params["ffn"]

    args = (
        x, encoder_output, self_mask, cross_mask,
        sa["wq"], sa["bq"], sa["wk"], sa["bk"], sa["wv"], sa["bv"], sa["wo"], sa["bo"],
        params["ln1"]["gamma"], params["ln1"]["beta"],
        ca["wq"], ca["bq"], ca["wk"], ca["bk"], ca["wv"], ca["bv"], ca["wo"], ca["bo"],
        params["ln2"]["gamma"], params["ln2"]["beta"],
        fp["w1"], fp["b1"], fp["w2"], fp["b2"],
        params["ln3"]["gamma"], params["ln3"]["beta"],
    )

    attn_w_specs = [_full_spec((E, E)), _full_spec((1, E))] * 4   # W, b interleaved (q,k,v,o)
    ln_specs = [_full_spec((1, E)), _full_spec((1, E))]

    in_specs = (
        [pl.BlockSpec((1, S, E), lambda b: (b, 0, 0)),
         pl.BlockSpec((1, S_enc, E), lambda b: (b, 0, 0)),
         pl.BlockSpec((1, S, S), lambda b: (b, 0, 0)),
         pl.BlockSpec((1, S, S_enc), lambda b: (b, 0, 0))]
        + attn_w_specs + ln_specs          # self-attention + ln1
        + attn_w_specs + ln_specs          # cross-attention + ln2
        + [_full_spec((E, F)), _full_spec((1, F)),
           _full_spec((F, E)), _full_spec((1, E))]
        + ln_specs                         # ffn + ln3
    )

    kernel = functools.partial(_decoder_layer_kernel, num_heads=num_heads, eps=eps)
    return pl.pallas_call(
        kernel,
        out_shape=jax.ShapeDtypeStruct((B, S, E), x.dtype),
        grid=(B,),
        in_specs=in_specs,
        out_specs=pl.BlockSpec((1, S, E), lambda b: (b, 0, 0)),
        compiler_params=pltpu.CompilerParams(
            dimension_semantics=("parallel",),
            vmem_limit_bytes=_vmem_limit_bytes(S, S_enc, E, F, num_heads)),
    )(*args)


# ----------------------------------------------------------------------------- reference (plain JAX, f32)

def _ref_mha(q_in, kv_in, mask, p, num_heads):
    B, S, E = q_in.shape
    Skv = kv_in.shape[1]
    Dh = E // num_heads
    q = q_in @ p["wq"] + p["bq"]
    k = kv_in @ p["wk"] + p["bk"]
    v = kv_in @ p["wv"] + p["bv"]
    q = q.reshape(B, S, num_heads, Dh).transpose(0, 2, 1, 3)
    k = k.reshape(B, Skv, num_heads, Dh).transpose(0, 2, 1, 3)
    v = v.reshape(B, Skv, num_heads, Dh).transpose(0, 2, 1, 3)
    scores = jnp.einsum("bhsd,bhtd->bhst", q, k) / jnp.sqrt(Dh) + mask[:, None]
    attn = jax.nn.softmax(scores, axis=-1)
    out = jnp.einsum("bhst,bhtd->bhsd", attn, v)
    out = out.transpose(0, 2, 1, 3).reshape(B, S, E)
    return out @ p["wo"] + p["bo"]


def _ref_add_ln(x, skip, p, eps=1e-5):
    y = x + skip
    mean = jnp.mean(y, axis=-1, keepdims=True)
    var = jnp.mean(jnp.square(y - mean), axis=-1, keepdims=True)
    return (y - mean) * jax.lax.rsqrt(var + eps) * p["gamma"] + p["beta"]


def _ref_decoder_layer(encoder_output, x, self_mask, cross_mask, params, num_heads):
    y = _ref_add_ln(_ref_mha(x, x, self_mask, params["self_attn"], num_heads), x, params["ln1"])
    y2 = _ref_add_ln(_ref_mha(y, encoder_output, cross_mask, params["cross_attn"], num_heads),
                     y, params["ln2"])
    h = jnp.maximum(y2 @ params["ffn"]["w1"] + params["ffn"]["b1"], 0.0)
    ff = h @ params["ffn"]["w2"] + params["ffn"]["b2"]
    return _ref_add_ln(ff, y2, params["ln3"])


# ----------------------------------------------------------------------------- parameter init

def init_params(key, E, F):
    ks = jax.random.split(key, 4)

    def attn_params(k):
        k1, k2, k3, k4 = jax.random.split(k, 4)
        return {
            "wq": 0.05 * jax.random.normal(k1, (E, E), jnp.float32), "bq": jnp.zeros((1, E), jnp.float32),
            "wk": 0.05 * jax.random.normal(k2, (E, E), jnp.float32), "bk": jnp.zeros((1, E), jnp.float32),
            "wv": 0.05 * jax.random.normal(k3, (E, E), jnp.float32), "bv": jnp.zeros((1, E), jnp.float32),
            "wo": 0.05 * jax.random.normal(k4, (E, E), jnp.float32), "bo": jnp.zeros((1, E), jnp.float32),
        }

    def ln_params():
        return {"gamma": jnp.ones((1, E), jnp.float32), "beta": jnp.zeros((1, E), jnp.float32)}

    return {
        "self_attn": attn_params(ks[0]),
        "cross_attn": attn_params(ks[1]),
        "ln1": ln_params(), "ln2": ln_params(), "ln3": ln_params(),
        "ffn": {
            "w1": 0.05 * jax.random.normal(ks[2], (E, F), jnp.float32), "b1": jnp.zeros((1, F), jnp.float32),
            "w2": 0.05 * jax.random.normal(ks[3], (F, E), jnp.float32), "b2": jnp.zeros((1, E), jnp.float32),
        },
    }


# ----------------------------------------------------------------------------- main

if __name__ == "__main__":
    # E chosen as a multiple of 128 so activations / stores are lane-dense.
    B, S_DEC, S_ENC, E, H, F = 2, 8, 16, 128, 4, 256

    key = jax.random.PRNGKey(0)
    k_x, k_enc, k_p = jax.random.split(key, 3)

    x = jax.random.normal(k_x, (B, S_DEC, E), jnp.float32)            # decoder input
    encoder_output = jax.random.normal(k_enc, (B, S_ENC, E), jnp.float32)
    params = init_params(k_p, E, F)
    fast_params = prepare_params(params)      # bf16 weight master copies (cast once, not per call)

    # additive masks, built directly in bf16 (halves mask DMA; 0 / -1e9 are exact enough):
    # causal for self-attention; mask last 4 encoder positions of batch 1 for cross-attention.
    causal = jnp.where(jnp.tril(jnp.ones((S_DEC, S_DEC), jnp.bool_)), 0.0, -1e9).astype(jnp.bfloat16)
    self_mask = jnp.broadcast_to(causal, (B, S_DEC, S_DEC))
    cross_mask = jnp.zeros((B, S_DEC, S_ENC), jnp.bfloat16)
    cross_mask = cross_mask.at[1, :, S_ENC - 4:].set(-1e9)

    out = decoder_layer_pallas(encoder_output, x, self_mask, cross_mask, fast_params, H)
    out = jax.block_until_ready(out)

    ref = _ref_decoder_layer(encoder_output, x,
                             self_mask.astype(jnp.float32), cross_mask.astype(jnp.float32),
                             params, H)
    assert out.shape == (B, S_DEC, E)
    # Tolerance accounts for bf16 MXU operands + approximate EUP reciprocal in the
    # softmax denominator (intended: inference semantics) vs the pure-f32 reference.
    assert jnp.allclose(out, ref, atol=3e-2, rtol=3e-2), "Pallas output mismatch vs JAX reference"

    print("KERNEL_OK")
</pallas_src>

<mosaic_0001>
module attributes {stable_mosaic.version = 11 : i64} {
  func.func @_decoder_layer_kernel(%arg0: i32, %arg1: memref<1x8x128xf32, #tpu.memory_space<vmem>>, %arg2: memref<1x16x128xf32, #tpu.memory_space<vmem>>, %arg3: memref<1x8x8xbf16, #tpu.memory_space<vmem>>, %arg4: memref<1x8x16xbf16, #tpu.memory_space<vmem>>, %arg5: memref<128x128xbf16, #tpu.memory_space<vmem>>, %arg6: memref<1x128xf32, #tpu.memory_space<vmem>>, %arg7: memref<128x128xbf16, #tpu.memory_space<vmem>>, %arg8: memref<1x128xf32, #tpu.memory_space<vmem>>, %arg9: memref<128x128xbf16, #tpu.memory_space<vmem>>, %arg10: memref<1x128xf32, #tpu.memory_space<vmem>>, %arg11: memref<128x128xbf16, #tpu.memory_space<vmem>>, %arg12: memref<1x128xf32, #tpu.memory_space<vmem>>, %arg13: memref<1x128xf32, #tpu.memory_space<vmem>>, %arg14: memref<1x128xf32, #tpu.memory_space<vmem>>, %arg15: memref<128x128xbf16, #tpu.memory_space<vmem>>, %arg16: memref<1x128xf32, #tpu.memory_space<vmem>>, %arg17: memref<128x128xbf16, #tpu.memory_space<vmem>>, %arg18: memref<1x128xf32, #tpu.memory_space<vmem>>, %arg19: memref<128x128xbf16, #tpu.memory_space<vmem>>, %arg20: memref<1x128xf32, #tpu.memory_space<vmem>>, %arg21: memref<128x128xbf16, #tpu.memory_space<vmem>>, %arg22: memref<1x128xf32, #tpu.memory_space<vmem>>, %arg23: memref<1x128xf32, #tpu.memory_space<vmem>>, %arg24: memref<1x128xf32, #tpu.memory_space<vmem>>, %arg25: memref<128x256xbf16, #tpu.memory_space<vmem>>, %arg26: memref<1x256xf32, #tpu.memory_space<vmem>>, %arg27: memref<256x128xbf16, #tpu.memory_space<vmem>>, %arg28: memref<1x128xf32, #tpu.memory_space<vmem>>, %arg29: memref<1x128xf32, #tpu.memory_space<vmem>>, %arg30: memref<1x128xf32, #tpu.memory_space<vmem>>, %arg31: memref<1x8x128xf32, #tpu.memory_space<vmem>>) attributes {dimension_semantics = [#tpu.dimension_semantics<parallel>], iteration_bounds = array<i64: 2>, scalar_prefetch = 0 : i64, scratch_operands = 0 : i64, tpu.core_type = #tpu.core_type<tc>, window_params = [{transform_indices = @transform_0, window_bounds = array<i64: 1, 8, 128>}, {transform_indices = @transform_1, window_bounds = array<i64: 1, 16, 128>}, {transform_indices = @transform_2, window_bounds = array<i64: 1, 8, 8>}, {transform_indices = @transform_3, window_bounds = array<i64: 1, 8, 16>}, {pipeline_mode = #tpu.pipeline_mode<synchronous>, transform_indices = @transform_4, window_bounds = array<i64: 128, 128>}, {pipeline_mode = #tpu.pipeline_mode<synchronous>, transform_indices = @transform_5, window_bounds = array<i64: 1, 128>}, {pipeline_mode = #tpu.pipeline_mode<synchronous>, transform_indices = @transform_6, window_bounds = array<i64: 128, 128>}, {pipeline_mode = #tpu.pipeline_mode<synchronous>, transform_indices = @transform_7, window_bounds = array<i64: 1, 128>}, {pipeline_mode = #tpu.pipeline_mode<synchronous>, transform_indices = @transform_8, window_bounds = array<i64: 128, 128>}, {pipeline_mode = #tpu.pipeline_mode<synchronous>, transform_indices = @transform_9, window_bounds = array<i64: 1, 128>}, {pipeline_mode = #tpu.pipeline_mode<synchronous>, transform_indices = @transform_10, window_bounds = array<i64: 128, 128>}, {pipeline_mode = #tpu.pipeline_mode<synchronous>, transform_indices = @transform_11, window_bounds = array<i64: 1, 128>}, {pipeline_mode = #tpu.pipeline_mode<synchronous>, transform_indices = @transform_12, window_bounds = array<i64: 1, 128>}, {pipeline_mode = #tpu.pipeline_mode<synchronous>, transform_indices = @transform_13, window_bounds = array<i64: 1, 128>}, {pipeline_mode = #tpu.pipeline_mode<synchronous>, transform_indices = @transform_14, window_bounds = array<i64: 128, 128>}, {pipeline_mode = #tpu.pipeline_mode<synchronous>, transform_indices = @transform_15, window_bounds = array<i64: 1, 128>}, {pipeline_mode = #tpu.pipeline_mode<synchronous>, transform_indices = @transform_16, window_bounds = array<i64: 128, 128>}, {pipeline_mode = #tpu.pipeline_mode<synchronous>, transform_indices = @transform_17, window_bounds = array<i64: 1, 128>}, {pipeline_mode = #tpu.pipeline_mode<synchronous>, transform_indices = @transform_18, window_bounds = array<i64: 128, 128>}, {pipeline_mode = #tpu.pipeline_mode<synchronous>, transform_indices = @transform_19, window_bounds = array<i64: 1, 128>}, {pipeline_mode = #tpu.pipeline_mode<synchronous>, transform_indices = @transform_20, window_bounds = array<i64: 128, 128>}, {pipeline_mode = #tpu.pipeline_mode<synchronous>, transform_indices = @transform_21, window_bounds = array<i64: 1, 128>}, {pipeline_mode = #tpu.pipeline_mode<synchronous>, transform_indices = @transform_22, window_bounds = array<i64: 1, 128>}, {pipeline_mode = #tpu.pipeline_mode<synchronous>, transform_indices = @transform_23, window_bounds = array<i64: 1, 128>}, {pipeline_mode = #tpu.pipeline_mode<synchronous>, transform_indices = @transform_24, window_bounds = array<i64: 128, 256>}, {pipeline_mode = #tpu.pipeline_mode<synchronous>, transform_indices = @transform_25, window_bounds = array<i64: 1, 256>}, {pipeline_mode = #tpu.pipeline_mode<synchronous>, transform_indices = @transform_26, window_bounds = array<i64: 256, 128>}, {pipeline_mode = #tpu.pipeline_mode<synchronous>, transform_indices = @transform_27, window_bounds = array<i64: 1, 128>}, {pipeline_mode = #tpu.pipeline_mode<synchronous>, transform_indices = @transform_28, window_bounds = array<i64: 1, 128>}, {pipeline_mode = #tpu.pipeline_mode<synchronous>, transform_indices = @transform_29, window_bounds = array<i64: 1, 128>}, {transform_indices = @transform_30, window_bounds = array<i64: 1, 8, 128>}]} {
    %c0 = arith.constant 0 : index
    %c0_0 = arith.constant 0 : index
    %c0_1 = arith.constant 0 : index
    %0 = vector.load %arg1[%c0, %c0_0, %c0_1] : memref<1x8x128xf32, #tpu.memory_space<vmem>>, vector<1x8x128xf32>
    %1 = vector.shape_cast %0 : vector<1x8x128xf32> to vector<8x128xf32>
    %c0_2 = arith.constant 0 : index
    %c0_3 = arith.constant 0 : index
    %c0_4 = arith.constant 0 : index
    %2 = vector.load %arg2[%c0_2, %c0_3, %c0_4] : memref<1x16x128xf32, #tpu.memory_space<vmem>>, vector<1x16x128xf32>
    %3 = vector.shape_cast %2 : vector<1x16x128xf32> to vector<16x128xf32>
    %c0_5 = arith.constant 0 : index
    %c0_6 = arith.constant 0 : index
    %c0_7 = arith.constant 0 : index
    %4 = vector.load %arg3[%c0_5, %c0_6, %c0_7] : memref<1x8x8xbf16, #tpu.memory_space<vmem>>, vector<1x8x8xbf16>
    %5 = vector.shape_cast %4 : vector<1x8x8xbf16> to vector<8x8xbf16>
    %6 = arith.extf %5 : vector<8x8xbf16> to vector<8x8xf32>
    %c0_8 = arith.constant 0 : index
    %c0_9 = arith.constant 0 : index
    %c0_10 = arith.constant 0 : index
    %7 = vector.load %arg4[%c0_8, %c0_9, %c0_10] : memref<1x8x16xbf16, #tpu.memory_space<vmem>>, vector<1x8x16xbf16>
    %8 = vector.shape_cast %7 : vector<1x8x16xbf16> to vector<8x16xbf16>
    %9 = arith.extf %8 : vector<8x16xbf16> to vector<8x16xf32>
    %c0_11 = arith.constant 0 : index
    %c0_12 = arith.constant 0 : index
    %10 = vector.load %arg5[%c0_11, %c0_12] : memref<128x128xbf16, #tpu.memory_space<vmem>>, vector<128x128xbf16>
    %c0_13 = arith.constant 0 : index
    %c0_14 = arith.constant 0 : index
    %11 = vector.load %arg6[%c0_13, %c0_14] : memref<1x128xf32, #tpu.memory_space<vmem>>, vector<1x128xf32>
    %c0_15 = arith.constant 0 : index
    %c0_16 = arith.constant 0 : index
    %12 = vector.load %arg7[%c0_15, %c0_16] : memref<128x128xbf16, #tpu.memory_space<vmem>>, vector<128x128xbf16>
    %c0_17 = arith.constant 0 : index
    %c0_18 = arith.constant 0 : index
    %13 = vector.load %arg8[%c0_17, %c0_18] : memref<1x128xf32, #tpu.memory_space<vmem>>, vector<1x128xf32>
    %c0_19 = arith.constant 0 : index
    %c0_20 = arith.constant 0 : index
    %14 = vector.load %arg9[%c0_19, %c0_20] : memref<128x128xbf16, #tpu.memory_space<vmem>>, vector<128x128xbf16>
    %c0_21 = arith.constant 0 : index
    %c0_22 = arith.constant 0 : index
    %15 = vector.load %arg10[%c0_21, %c0_22] : memref<1x128xf32, #tpu.memory_space<vmem>>, vector<1x128xf32>
    %c0_23 = arith.constant 0 : index
    %c0_24 = arith.constant 0 : index
    %16 = vector.load %arg11[%c0_23, %c0_24] : memref<128x128xbf16, #tpu.memory_space<vmem>>, vector<128x128xbf16>
    %c0_25 = arith.constant 0 : index
    %c0_26 = arith.constant 0 : index
    %17 = vector.load %arg12[%c0_25, %c0_26] : memref<1x128xf32, #tpu.memory_space<vmem>>, vector<1x128xf32>
    %18 = arith.truncf %1 : vector<8x128xf32> to vector<8x128xbf16>
    %19 = arith.truncf %1 : vector<8x128xf32> to vector<8x128xbf16>
    %cst = arith.constant dense<0.000000e+00> : vector<8x128xf32>
    %20 = tpu.matmul %18, %10, %cst {dimension_numbers = #tpu.dot_dimension_numbers<[1], [0], [0], [1], [0, 0, 1, 1], [], []>} : vector<8x128xbf16>, vector<128x128xbf16>, vector<8x128xf32> -> vector<8x128xf32>
    %21 = vector.broadcast %11 : vector<1x128xf32> to vector<8x128xf32>
    %22 = arith.addf %20, %21 : vector<8x128xf32>
    %cst_27 = arith.constant 0.176776692 : f32
    %23 = vector.broadcast %cst_27 : f32 to vector<8x128xf32>
    %24 = arith.mulf %22, %23 : vector<8x128xf32>
    %cst_28 = arith.constant dense<0.000000e+00> : vector<8x128xf32>
    %25 = tpu.matmul %19, %12, %cst_28 {dimension_numbers = #tpu.dot_dimension_numbers<[1], [0], [0], [1], [0, 0, 1, 1], [], []>} : vector<8x128xbf16>, vector<128x128xbf16>, vector<8x128xf32> -> vector<8x128xf32>
    %26 = vector.broadcast %13 : vector<1x128xf32> to vector<8x128xf32>
    %27 = arith.addf %25, %26 : vector<8x128xf32>
    %cst_29 = arith.constant dense<0.000000e+00> : vector<8x128xf32>
    %28 = tpu.matmul %19, %14, %cst_29 {dimension_numbers = #tpu.dot_dimension_numbers<[1], [0], [0], [1], [0, 0, 1, 1], [], []>} : vector<8x128xbf16>, vector<128x128xbf16>, vector<8x128xf32> -> vector<8x128xf32>
    %29 = vector.broadcast %15 : vector<1x128xf32> to vector<8x128xf32>
    %30 = arith.addf %28, %29 : vector<8x128xf32>
    %31 = arith.truncf %24 : vector<8x128xf32> to vector<8x128xbf16>
    %32 = arith.truncf %27 : vector<8x128xf32> to vector<8x128xbf16>
    %33 = arith.truncf %30 : vector<8x128xf32> to vector<8x128xbf16>
    %34 = vector.extract_strided_slice %31 {offsets = [0, 0], sizes = [8, 32], strides = [1, 1]} : vector<8x128xbf16> to vector<8x32xbf16>
    %35 = vector.extract_strided_slice %31 {offsets = [0, 32], sizes = [8, 32], strides = [1, 1]} : vector<8x128xbf16> to vector<8x32xbf16>
    %36 = vector.extract_strided_slice %31 {offsets = [0, 64], sizes = [8, 32], strides = [1, 1]} : vector<8x128xbf16> to vector<8x32xbf16>
    %37 = vector.extract_strided_slice %31 {offsets = [0, 96], sizes = [8, 32], strides = [1, 1]} : vector<8x128xbf16> to vector<8x32xbf16>
    %38 = vector.shape_cast %34 : vector<8x32xbf16> to vector<1x8x32xbf16>
    %39 = vector.shape_cast %35 : vector<8x32xbf16> to vector<1x8x32xbf16>
    %40 = vector.shape_cast %36 : vector<8x32xbf16> to vector<1x8x32xbf16>
    %41 = vector.shape_cast %37 : vector<8x32xbf16> to vector<1x8x32xbf16>
    %42 = tpu.concatenate %38, %39, %40, %41 in 0 : vector<1x8x32xbf16>, vector<1x8x32xbf16>, vector<1x8x32xbf16>, vector<1x8x32xbf16> -> vector<4x8x32xbf16>
    %43 = vector.extract_strided_slice %32 {offsets = [0, 0], sizes = [8, 32], strides = [1, 1]} : vector<8x128xbf16> to vector<8x32xbf16>
    %44 = vector.extract_strided_slice %32 {offsets = [0, 32], sizes = [8, 32], strides = [1, 1]} : vector<8x128xbf16> to vector<8x32xbf16>
    %45 = vector.extract_strided_slice %32 {offsets = [0, 64], sizes = [8, 32], strides = [1, 1]} : vector<8x128xbf16> to vector<8x32xbf16>
    %46 = vector.extract_strided_slice %32 {offsets = [0, 96], sizes = [8, 32], strides = [1, 1]} : vector<8x128xbf16> to vector<8x32xbf16>
    %47 = vector.shape_cast %43 : vector<8x32xbf16> to vector<1x8x32xbf16>
    %48 = vector.shape_cast %44 : vector<8x32xbf16> to vector<1x8x32xbf16>
    %49 = vector.shape_cast %45 : vector<8x32xbf16> to vector<1x8x32xbf16>
    %50 = vector.shape_cast %46 : vector<8x32xbf16> to vector<1x8x32xbf16>
    %51 = tpu.concatenate %47, %48, %49, %50 in 0 : vector<1x8x32xbf16>, vector<1x8x32xbf16>, vector<1x8x32xbf16>, vector<1x8x32xbf16> -> vector<4x8x32xbf16>
    %52 = vector.extract_strided_slice %33 {offsets = [0, 0], sizes = [8, 32], strides = [1, 1]} : vector<8x128xbf16> to vector<8x32xbf16>
    %53 = vector.extract_strided_slice %33 {offsets = [0, 32], sizes = [8, 32], strides = [1, 1]} : vector<8x128xbf16> to vector<8x32xbf16>
    %54 = vector.extract_strided_slice %33 {offsets = [0, 64], sizes = [8, 32], strides = [1, 1]} : vector<8x128xbf16> to vector<8x32xbf16>
    %55 = vector.extract_strided_slice %33 {offsets = [0, 96], sizes = [8, 32], strides = [1, 1]} : vector<8x128xbf16> to vector<8x32xbf16>
    %56 = vector.shape_cast %52 : vector<8x32xbf16> to vector<1x8x32xbf16>
    %57 = vector.shape_cast %53 : vector<8x32xbf16> to vector<1x8x32xbf16>
    %58 = vector.shape_cast %54 : vector<8x32xbf16> to vector<1x8x32xbf16>
    %59 = vector.shape_cast %55 : vector<8x32xbf16> to vector<1x8x32xbf16>
    %60 = tpu.concatenate %56, %57, %58, %59 in 0 : vector<1x8x32xbf16>, vector<1x8x32xbf16>, vector<1x8x32xbf16>, vector<1x8x32xbf16> -> vector<4x8x32xbf16>
    "tpu.trace_start"() <{level = 10 : i32, message = "hqd,hkd->hqk"}> : () -> ()
    %cst_30 = arith.constant dense<0.000000e+00> : vector<4x8x8xf32>
    %61 = tpu.matmul %42, %51, %cst_30 {dimension_numbers = #tpu.dot_dimension_numbers<[2], [2], [1], [1], [0, 0, 0, 1, 1, 1], [0], [0]>} : vector<4x8x32xbf16>, vector<4x8x32xbf16>, vector<4x8x8xf32> -> vector<4x8x8xf32>
    "tpu.trace_stop"() : () -> ()
    %62 = vector.shape_cast %6 : vector<8x8xf32> to vector<1x8x8xf32>
    %63 = vector.broadcast %62 : vector<1x8x8xf32> to vector<4x8x8xf32>
    %64 = arith.addf %61, %63 : vector<4x8x8xf32>
    %cst_31 = arith.constant dense<0xFF800000> : vector<4x8xf32>
    %65 = vector.multi_reduction <maximumf>, %64, %cst_31 [2] : vector<4x8x8xf32> to vector<4x8xf32>
    %66 = vector.shape_cast %65 : vector<4x8xf32> to vector<4x8x1xf32>
    %67 = vector.broadcast %66 : vector<4x8x1xf32> to vector<4x8x8xf32>
    %68 = arith.subf %64, %67 : vector<4x8x8xf32>
    %69 = math.exp %68 : vector<4x8x8xf32>
    %cst_32 = arith.constant dense<0.000000e+00> : vector<4x8xf32>
    %70 = vector.multi_reduction <add>, %69, %cst_32 [2] : vector<4x8x8xf32> to vector<4x8xf32>
    %71 = vector.shape_cast %70 : vector<4x8xf32> to vector<4x8x1xf32>
    %72 = tpu.reciprocal %71 {approx = true} : vector<4x8x1xf32> -> vector<4x8x1xf32>
    %73 = vector.broadcast %72 : vector<4x8x1xf32> to vector<4x8x8xf32>
    %74 = arith.mulf %69, %73 : vector<4x8x8xf32>
    %75 = arith.truncf %74 : vector<4x8x8xf32> to vector<4x8x8xbf16>
    "tpu.trace_start"() <{level = 10 : i32, message = "hqk,hkd->hqd"}> : () -> ()
    %cst_33 = arith.constant dense<0.000000e+00> : vector<4x8x32xf32>
    %76 = tpu.matmul %75, %60, %cst_33 {dimension_numbers = #tpu.dot_dimension_numbers<[2], [1], [1], [2], [0, 0, 0, 1, 1, 2], [0], [0]>} : vector<4x8x8xbf16>, vector<4x8x32xbf16>, vector<4x8x32xf32> -> vector<4x8x32xf32>
    "tpu.trace_stop"() : () -> ()
    %77 = vector.extract_strided_slice %76 {offsets = [0, 0, 0], sizes = [1, 8, 32], strides = [1, 1, 1]} : vector<4x8x32xf32> to vector<1x8x32xf32>
    %78 = vector.shape_cast %77 : vector<1x8x32xf32> to vector<8x32xf32>
    %79 = vector.extract_strided_slice %76 {offsets = [1, 0, 0], sizes = [1, 8, 32], strides = [1, 1, 1]} : vector<4x8x32xf32> to vector<1x8x32xf32>
    %80 = vector.shape_cast %79 : vector<1x8x32xf32> to vector<8x32xf32>
    %81 = vector.extract_strided_slice %76 {offsets = [2, 0, 0], sizes = [1, 8, 32], strides = [1, 1, 1]} : vector<4x8x32xf32> to vector<1x8x32xf32>
    %82 = vector.shape_cast %81 : vector<1x8x32xf32> to vector<8x32xf32>
    %83 = vector.extract_strided_slice %76 {offsets = [3, 0, 0], sizes = [1, 8, 32], strides = [1, 1, 1]} : vector<4x8x32xf32> to vector<1x8x32xf32>
    %84 = vector.shape_cast %83 : vector<1x8x32xf32> to vector<8x32xf32>
    %85 = tpu.concatenate %78, %80, %82, %84 in 1 : vector<8x32xf32>, vector<8x32xf32>, vector<8x32xf32>, vector<8x32xf32> -> vector<8x128xf32>
    %86 = arith.truncf %85 : vector<8x128xf32> to vector<8x128xbf16>
    %cst_34 = arith.constant dense<0.000000e+00> : vector<8x128xf32>
    %87 = tpu.matmul %86, %16, %cst_34 {dimension_numbers = #tpu.dot_dimension_numbers<[1], [0], [0], [1], [0, 0, 1, 1], [], []>} : vector<8x128xbf16>, vector<128x128xbf16>, vector<8x128xf32> -> vector<8x128xf32>
    %88 = vector.broadcast %17 : vector<1x128xf32> to vector<8x128xf32>
    %89 = arith.addf %87, %88 : vector<8x128xf32>
    %c0_35 = arith.constant 0 : index
    %c0_36 = arith.constant 0 : index
    %90 = vector.load %arg13[%c0_35, %c0_36] : memref<1x128xf32, #tpu.memory_space<vmem>>, vector<1x128xf32>
    %c0_37 = arith.constant 0 : index
    %c0_38 = arith.constant 0 : index
    %91 = vector.load %arg14[%c0_37, %c0_38] : memref<1x128xf32, #tpu.memory_space<vmem>>, vector<1x128xf32>
    %92 = arith.addf %89, %1 : vector<8x128xf32>
    %cst_39 = arith.constant dense<0.000000e+00> : vector<8xf32>
    %93 = vector.multi_reduction <add>, %92, %cst_39 [1] : vector<8x128xf32> to vector<8xf32>
    %94 = vector.shape_cast %93 : vector<8xf32> to vector<8x1xf32>
    %cst_40 = arith.constant 1.280000e+02 : f32
    %95 = vector.broadcast %cst_40 : f32 to vector<8x1xf32>
    %96 = arith.divf %94, %95 : vector<8x1xf32>
    %97 = vector.broadcast %96 : vector<8x1xf32> to vector<8x128xf32>
    %98 = arith.subf %92, %97 : vector<8x128xf32>
    %99 = arith.mulf %98, %98 : vector<8x128xf32>
    %cst_41 = arith.constant dense<0.000000e+00> : vector<8xf32>
    %100 = vector.multi_reduction <add>, %99, %cst_41 [1] : vector<8x128xf32> to vector<8xf32>
    %101 = vector.shape_cast %100 : vector<8xf32> to vector<8x1xf32>
    %cst_42 = arith.constant 1.280000e+02 : f32
    %102 = vector.broadcast %cst_42 : f32 to vector<8x1xf32>
    %103 = arith.divf %101, %102 : vector<8x1xf32>
    %104 = vector.broadcast %96 : vector<8x1xf32> to vector<8x128xf32>
    %105 = arith.subf %92, %104 : vector<8x128xf32>
    %cst_43 = arith.constant 9.99999974E-6 : f32
    %106 = vector.broadcast %cst_43 : f32 to vector<8x1xf32>
    %107 = arith.addf %103, %106 : vector<8x1xf32>
    %108 = math.rsqrt %107 : vector<8x1xf32>
    %109 = vector.broadcast %108 : vector<8x1xf32> to vector<8x128xf32>
    %110 = arith.mulf %105, %109 : vector<8x128xf32>
    %111 = vector.broadcast %90 : vector<1x128xf32> to vector<8x128xf32>
    %112 = arith.mulf %110, %111 : vector<8x128xf32>
    %113 = vector.broadcast %91 : vector<1x128xf32> to vector<8x128xf32>
    %114 = arith.addf %112, %113 : vector<8x128xf32>
    %c0_44 = arith.constant 0 : index
    %c0_45 = arith.constant 0 : index
    %115 = vector.load %arg15[%c0_44, %c0_45] : memref<128x128xbf16, #tpu.memory_space<vmem>>, vector<128x128xbf16>
    %c0_46 = arith.constant 0 : index
    %c0_47 = arith.constant 0 : index
    %116 = vector.load %arg16[%c0_46, %c0_47] : memref<1x128xf32, #tpu.memory_space<vmem>>, vector<1x128xf32>
    %c0_48 = arith.constant 0 : index
    %c0_49 = arith.constant 0 : index
    %117 = vector.load %arg17[%c0_48, %c0_49] : memref<128x128xbf16, #tpu.memory_space<vmem>>, vector<128x128xbf16>
    %c0_50 = arith.constant 0 : index
    %c0_51 = arith.constant 0 : index
    %118 = vector.load %arg18[%c0_50, %c0_51] : memref<1x128xf32, #tpu.memory_space<vmem>>, vector<1x128xf32>
    %c0_52 = arith.constant 0 : index
    %c0_53 = arith.constant 0 : index
    %119 = vector.load %arg19[%c0_52, %c0_53] : memref<128x128xbf16, #tpu.memory_space<vmem>>, vector<128x128xbf16>
    %c0_54 = arith.constant 0 : index
    %c0_55 = arith.constant 0 : index
    %120 = vector.load %arg20[%c0_54, %c0_55] : memref<1x128xf32, #tpu.memory_space<vmem>>, vector<1x128xf32>
    %c0_56 = arith.constant 0 : index
    %c0_57 = arith.constant 0 : index
    %121 = vector.load %arg21[%c0_56, %c0_57] : memref<128x128xbf16, #tpu.memory_space<vmem>>, vector<128x128xbf16>
    %c0_58 = arith.constant 0 : index
    %c0_59 = arith.constant 0 : index
    %122 = vector.load %arg22[%c0_58, %c0_59] : memref<1x128xf32, #tpu.memory_space<vmem>>, vector<1x128xf32>
    %123 = arith.truncf %114 : vector<8x128xf32> to vector<8x128xbf16>
    %124 = arith.truncf %3 : vector<16x128xf32> to vector<16x128xbf16>
    %cst_60 = arith.constant dense<0.000000e+00> : vector<8x128xf32>
    %125 = tpu.matmul %123, %115, %cst_60 {dimension_numbers = #tpu.dot_dimension_numbers<[1], [0], [0], [1], [0, 0, 1, 1], [], []>} : vector<8x128xbf16>, vector<128x128xbf16>, vector<8x128xf32> -> vector<8x128xf32>
    %126 = vector.broadcast %116 : vector<1x128xf32> to vector<8x128xf32>
    %127 = arith.addf %125, %126 : vector<8x128xf32>
    %cst_61 = arith.constant 0.176776692 : f32
    %128 = vector.broadcast %cst_61 : f32 to vector<8x128xf32>
    %129 = arith.mulf %127, %128 : vector<8x128xf32>
    %cst_62 = arith.constant dense<0.000000e+00> : vector<16x128xf32>
    %130 = tpu.matmul %124, %117, %cst_62 {dimension_numbers = #tpu.dot_dimension_numbers<[1], [0], [0], [1], [0, 0, 1, 1], [], []>} : vector<16x128xbf16>, vector<128x128xbf16>, vector<16x128xf32> -> vector<16x128xf32>
    %131 = vector.broadcast %118 : vector<1x128xf32> to vector<16x128xf32>
    %132 = arith.addf %130, %131 : vector<16x128xf32>
    %cst_63 = arith.constant dense<0.000000e+00> : vector<16x128xf32>
    %133 = tpu.matmul %124, %119, %cst_63 {dimension_numbers = #tpu.dot_dimension_numbers<[1], [0], [0], [1], [0, 0, 1, 1], [], []>} : vector<16x128xbf16>, vector<128x128xbf16>, vector<16x128xf32> -> vector<16x128xf32>
    %134 = vector.broadcast %120 : vector<1x128xf32> to vector<16x128xf32>
    %135 = arith.addf %133, %134 : vector<16x128xf32>
    %136 = arith.truncf %129 : vector<8x128xf32> to vector<8x128xbf16>
    %137 = arith.truncf %132 : vector<16x128xf32> to vector<16x128xbf16>
    %138 = arith.truncf %135 : vector<16x128xf32> to vector<16x128xbf16>
    %139 = vector.extract_strided_slice %136 {offsets = [0, 0], sizes = [8, 32], strides = [1, 1]} : vector<8x128xbf16> to vector<8x32xbf16>
    %140 = vector.extract_strided_slice %136 {offsets = [0, 32], sizes = [8, 32], strides = [1, 1]} : vector<8x128xbf16> to vector<8x32xbf16>
    %141 = vector.extract_strided_slice %136 {offsets = [0, 64], sizes = [8, 32], strides = [1, 1]} : vector<8x128xbf16> to vector<8x32xbf16>
    %142 = vector.extract_strided_slice %136 {offsets = [0, 96], sizes = [8, 32], strides = [1, 1]} : vector<8x128xbf16> to vector<8x32xbf16>
    %143 = vector.shape_cast %139 : vector<8x32xbf16> to vector<1x8x32xbf16>
    %144 = vector.shape_cast %140 : vector<8x32xbf16> to vector<1x8x32xbf16>
    %145 = vector.shape_cast %141 : vector<8x32xbf16> to vector<1x8x32xbf16>
    %146 = vector.shape_cast %142 : vector<8x32xbf16> to vector<1x8x32xbf16>
    %147 = tpu.concatenate %143, %144, %145, %146 in 0 : vector<1x8x32xbf16>, vector<1x8x32xbf16>, vector<1x8x32xbf16>, vector<1x8x32xbf16> -> vector<4x8x32xbf16>
    %148 = vector.extract_strided_slice %137 {offsets = [0, 0], sizes = [16, 32], strides = [1, 1]} : vector<16x128xbf16> to vector<16x32xbf16>
    %149 = vector.extract_strided_slice %137 {offsets = [0, 32], sizes = [16, 32], strides = [1, 1]} : vector<16x128xbf16> to vector<16x32xbf16>
    %150 = vector.extract_strided_slice %137 {offsets = [0, 64], sizes = [16, 32], strides = [1, 1]} : vector<16x128xbf16> to vector<16x32xbf16>
    %151 = vector.extract_strided_slice %137 {offsets = [0, 96], sizes = [16, 32], strides = [1, 1]} : vector<16x128xbf16> to vector<16x32xbf16>
    %152 = vector.shape_cast %148 : vector<16x32xbf16> to vector<1x16x32xbf16>
    %153 = vector.shape_cast %149 : vector<16x32xbf16> to vector<1x16x32xbf16>
    %154 = vector.shape_cast %150 : vector<16x32xbf16> to vector<1x16x32xbf16>
    %155 = vector.shape_cast %151 : vector<16x32xbf16> to vector<1x16x32xbf16>
    %156 = tpu.concatenate %152, %153, %154, %155 in 0 : vector<1x16x32xbf16>, vector<1x16x32xbf16>, vector<1x16x32xbf16>, vector<1x16x32xbf16> -> vector<4x16x32xbf16>
    %157 = vector.extract_strided_slice %138 {offsets = [0, 0], sizes = [16, 32], strides = [1, 1]} : vector<16x128xbf16> to vector<16x32xbf16>
    %158 = vector.extract_strided_slice %138 {offsets = [0, 32], sizes = [16, 32], strides = [1, 1]} : vector<16x128xbf16> to vector<16x32xbf16>
    %159 = vector.extract_strided_slice %138 {offsets = [0, 64], sizes = [16, 32], strides = [1, 1]} : vector<16x128xbf16> to vector<16x32xbf16>
    %160 = vector.extract_strided_slice %138 {offsets = [0, 96], sizes = [16, 32], strides = [1, 1]} : vector<16x128xbf16> to vector<16x32xbf16>
    %161 = vector.shape_cast %157 : vector<16x32xbf16> to vector<1x16x32xbf16>
    %162 = vector.shape_cast %158 : vector<16x32xbf16> to vector<1x16x32xbf16>
    %163 = vector.shape_cast %159 : vector<16x32xbf16> to vector<1x16x32xbf16>
    %164 = vector.shape_cast %160 : vector<16x32xbf16> to vector<1x16x32xbf16>
    %165 = tpu.concatenate %161, %162, %163, %164 in 0 : vector<1x16x32xbf16>, vector<1x16x32xbf16>, vector<1x16x32xbf16>, vector<1x16x32xbf16> -> vector<4x16x32xbf16>
    "tpu.trace_start"() <{level = 10 : i32, message = "hqd,hkd->hqk"}> : () -> ()
    %cst_64 = arith.constant dense<0.000000e+00> : vector<4x8x16xf32>
    %166 = tpu.matmul %147, %156, %cst_64 {dimension_numbers = #tpu.dot_dimension_numbers<[2], [2], [1], [1], [0, 0, 0, 1, 1, 1], [0], [0]>} : vector<4x8x32xbf16>, vector<4x16x32xbf16>, vector<4x8x16xf32> -> vector<4x8x16xf32>
    "tpu.trace_stop"() : () -> ()
    %167 = vector.shape_cast %9 : vector<8x16xf32> to vector<1x8x16xf32>
    %168 = vector.broadcast %167 : vector<1x8x16xf32> to vector<4x8x16xf32>
    %169 = arith.addf %166, %168 : vector<4x8x16xf32>
    %cst_65 = arith.constant dense<0xFF800000> : vector<4x8xf32>
    %170 = vector.multi_reduction <maximumf>, %169, %cst_65 [2] : vector<4x8x16xf32> to vector<4x8xf32>
    %171 = vector.shape_cast %170 : vector<4x8xf32> to vector<4x8x1xf32>
    %172 = vector.broadcast %171 : vector<4x8x1xf32> to vector<4x8x16xf32>
    %173 = arith.subf %169, %172 : vector<4x8x16xf32>
    %174 = math.exp %173 : vector<4x8x16xf32>
    %cst_66 = arith.constant dense<0.000000e+00> : vector<4x8xf32>
    %175 = vector.multi_reduction <add>, %174, %cst_66 [2] : vector<4x8x16xf32> to vector<4x8xf32>
    %176 = vector.shape_cast %175 : vector<4x8xf32> to vector<4x8x1xf32>
    %177 = tpu.reciprocal %176 {approx = true} : vector<4x8x1xf32> -> vector<4x8x1xf32>
    %178 = vector.broadcast %177 : vector<4x8x1xf32> to vector<4x8x16xf32>
    %179 = arith.mulf %174, %178 : vector<4x8x16xf32>
    %180 = arith.truncf %179 : vector<4x8x16xf32> to vector<4x8x16xbf16>
    "tpu.trace_start"() <{level = 10 : i32, message = "hqk,hkd->hqd"}> : () -> ()
    %cst_67 = arith.constant dense<0.000000e+00> : vector<4x8x32xf32>
    %181 = tpu.matmul %180, %165, %cst_67 {dimension_numbers = #tpu.dot_dimension_numbers<[2], [1], [1], [2], [0, 0, 0, 1, 1, 2], [0], [0]>} : vector<4x8x16xbf16>, vector<4x16x32xbf16>, vector<4x8x32xf32> -> vector<4x8x32xf32>
    "tpu.trace_stop"() : () -> ()
    %182 = vector.extract_strided_slice %181 {offsets = [0, 0, 0], sizes = [1, 8, 32], strides = [1, 1, 1]} : vector<4x8x32xf32> to vector<1x8x32xf32>
    %183 = vector.shape_cast %182 : vector<1x8x32xf32> to vector<8x32xf32>
    %184 = vector.extract_strided_slice %181 {offsets = [1, 0, 0], sizes = [1, 8, 32], strides = [1, 1, 1]} : vector<4x8x32xf32> to vector<1x8x32xf32>
    %185 = vector.shape_cast %184 : vector<1x8x32xf32> to vector<8x32xf32>
    %186 = vector.extract_strided_slice %181 {offsets = [2, 0, 0], sizes = [1, 8, 32], strides = [1, 1, 1]} : vector<4x8x32xf32> to vector<1x8x32xf32>
    %187 = vector.shape_cast %186 : vector<1x8x32xf32> to vector<8x32xf32>
    %188 = vector.extract_strided_slice %181 {offsets = [3, 0, 0], sizes = [1, 8, 32], strides = [1, 1, 1]} : vector<4x8x32xf32> to vector<1x8x32xf32>
    %189 = vector.shape_cast %188 : vector<1x8x32xf32> to vector<8x32xf32>
    %190 = tpu.concatenate %183, %185, %187, %189 in 1 : vector<8x32xf32>, vector<8x32xf32>, vector<8x32xf32>, vector<8x32xf32> -> vector<8x128xf32>
    %191 = arith.truncf %190 : vector<8x128xf32> to vector<8x128xbf16>
    %cst_68 = arith.constant dense<0.000000e+00> : vector<8x128xf32>
    %192 = tpu.matmul %191, %121, %cst_68 {dimension_numbers = #tpu.dot_dimension_numbers<[1], [0], [0], [1], [0, 0, 1, 1], [], []>} : vector<8x128xbf16>, vector<128x128xbf16>, vector<8x128xf32> -> vector<8x128xf32>
    %193 = vector.broadcast %122 : vector<1x128xf32> to vector<8x128xf32>
    %194 = arith.addf %192, %193 : vector<8x128xf32>
    %c0_69 = arith.constant 0 : index
    %c0_70 = arith.constant 0 : index
    %195 = vector.load %arg23[%c0_69, %c0_70] : memref<1x128xf32, #tpu.memory_space<vmem>>, vector<1x128xf32>
    %c0_71 = arith.constant 0 : index
    %c0_72 = arith.constant 0 : index
    %196 = vector.load %arg24[%c0_71, %c0_72] : memref<1x128xf32, #tpu.memory_space<vmem>>, vector<1x128xf32>
    %197 = arith.addf %194, %114 : vector<8x128xf32>
    %cst_73 = arith.constant dense<0.000000e+00> : vector<8xf32>
    %198 = vector.multi_reduction <add>, %197, %cst_73 [1] : vector<8x128xf32> to vector<8xf32>
    %199 = vector.shape_cast %198 : vector<8xf32> to vector<8x1xf32>
    %cst_74 = arith.constant 1.280000e+02 : f32
    %200 = vector.broadcast %cst_74 : f32 to vector<8x1xf32>
    %201 = arith.divf %199, %200 : vector<8x1xf32>
    %202 = vector.broadcast %201 : vector<8x1xf32> to vector<8x128xf32>
    %203 = arith.subf %197, %202 : vector<8x128xf32>
    %204 = arith.mulf %203, %203 : vector<8x128xf32>
    %cst_75 = arith.constant dense<0.000000e+00> : vector<8xf32>
    %205 = vector.multi_reduction <add>, %204, %cst_75 [1] : vector<8x128xf32> to vector<8xf32>
    %206 = vector.shape_cast %205 : vector<8xf32> to vector<8x1xf32>
    %cst_76 = arith.constant 1.280000e+02 : f32
    %207 = vector.broadcast %cst_76 : f32 to vector<8x1xf32>
    %208 = arith.divf %206, %207 : vector<8x1xf32>
    %209 = vector.broadcast %201 : vector<8x1xf32> to vector<8x128xf32>
    %210 = arith.subf %197, %209 : vector<8x128xf32>
    %cst_77 = arith.constant 9.99999974E-6 : f32
    %211 = vector.broadcast %cst_77 : f32 to vector<8x1xf32>
    %212 = arith.addf %208, %211 : vector<8x1xf32>
    %213 = math.rsqrt %212 : vector<8x1xf32>
    %214 = vector.broadcast %213 : vector<8x1xf32> to vector<8x128xf32>
    %215 = arith.mulf %210, %214 : vector<8x128xf32>
    %216 = vector.broadcast %195 : vector<1x128xf32> to vector<8x128xf32>
    %217 = arith.mulf %215, %216 : vector<8x128xf32>
    %218 = vector.broadcast %196 : vector<1x128xf32> to vector<8x128xf32>
    %219 = arith.addf %217, %218 : vector<8x128xf32>
    %220 = arith.truncf %219 : vector<8x128xf32> to vector<8x128xbf16>
    %c0_78 = arith.constant 0 : index
    %c0_79 = arith.constant 0 : index
    %221 = vector.load %arg25[%c0_78, %c0_79] : memref<128x256xbf16, #tpu.memory_space<vmem>>, vector<128x256xbf16>
    %cst_80 = arith.constant dense<0.000000e+00> : vector<8x256xf32>
    %222 = tpu.matmul %220, %221, %cst_80 {dimension_numbers = #tpu.dot_dimension_numbers<[1], [0], [0], [1], [0, 0, 1, 1], [], []>} : vector<8x128xbf16>, vector<128x256xbf16>, vector<8x256xf32> -> vector<8x256xf32>
    %c0_81 = arith.constant 0 : index
    %c0_82 = arith.constant 0 : index
    %223 = vector.load %arg26[%c0_81, %c0_82] : memref<1x256xf32, #tpu.memory_space<vmem>>, vector<1x256xf32>
    %224 = vector.broadcast %223 : vector<1x256xf32> to vector<8x256xf32>
    %225 = arith.addf %222, %224 : vector<8x256xf32>
    %cst_83 = arith.constant 0.000000e+00 : f32
    %226 = vector.broadcast %cst_83 : f32 to vector<8x256xf32>
    %227 = arith.maximumf %225, %226 : vector<8x256xf32>
    %228 = arith.truncf %227 : vector<8x256xf32> to vector<8x256xbf16>
    %c0_84 = arith.constant 0 : index
    %c0_85 = arith.constant 0 : index
    %229 = vector.load %arg27[%c0_84, %c0_85] : memref<256x128xbf16, #tpu.memory_space<vmem>>, vector<256x128xbf16>
    %cst_86 = arith.constant dense<0.000000e+00> : vector<8x128xf32>
    %230 = tpu.matmul %228, %229, %cst_86 {dimension_numbers = #tpu.dot_dimension_numbers<[1], [0], [0], [1], [0, 0, 1, 1], [], []>} : vector<8x256xbf16>, vector<256x128xbf16>, vector<8x128xf32> -> vector<8x128xf32>
    %c0_87 = arith.constant 0 : index
    %c0_88 = arith.constant 0 : index
    %231 = vector.load %arg28[%c0_87, %c0_88] : memref<1x128xf32, #tpu.memory_space<vmem>>, vector<1x128xf32>
    %232 = vector.broadcast %231 : vector<1x128xf32> to vector<8x128xf32>
    %233 = arith.addf %230, %232 : vector<8x128xf32>
    %c0_89 = arith.constant 0 : index
    %c0_90 = arith.constant 0 : index
    %234 = vector.load %arg29[%c0_89, %c0_90] : memref<1x128xf32, #tpu.memory_space<vmem>>, vector<1x128xf32>
    %c0_91 = arith.constant 0 : index
    %c0_92 = arith.constant 0 : index
    %235 = vector.load %arg30[%c0_91, %c0_92] : memref<1x128xf32, #tpu.memory_space<vmem>>, vector<1x128xf32>
    %236 = arith.addf %233, %219 : vector<8x128xf32>
    %cst_93 = arith.constant dense<0.000000e+00> : vector<8xf32>
    %237 = vector.multi_reduction <add>, %236, %cst_93 [1] : vector<8x128xf32> to vector<8xf32>
    %238 = vector.shape_cast %237 : vector<8xf32> to vector<8x1xf32>
    %cst_94 = arith.constant 1.280000e+02 : f32
    %239 = vector.broadcast %cst_94 : f32 to vector<8x1xf32>
    %240 = arith.divf %238, %239 : vector<8x1xf32>
    %241 = vector.broadcast %240 : vector<8x1xf32> to vector<8x128xf32>
    %242 = arith.subf %236, %241 : vector<8x128xf32>
    %243 = arith.mulf %242, %242 : vector<8x128xf32>
    %cst_95 = arith.constant dense<0.000000e+00> : vector<8xf32>
    %244 = vector.multi_reduction <add>, %243, %cst_95 [1] : vector<8x128xf32> to vector<8xf32>
    %245 = vector.shape_cast %244 : vector<8xf32> to vector<8x1xf32>
    %cst_96 = arith.constant 1.280000e+02 : f32
    %246 = vector.broadcast %cst_96 : f32 to vector<8x1xf32>
    %247 = arith.divf %245, %246 : vector<8x1xf32>
    %248 = vector.broadcast %240 : vector<8x1xf32> to vector<8x128xf32>
    %249 = arith.subf %236, %248 : vector<8x128xf32>
    %cst_97 = arith.constant 9.99999974E-6 : f32
    %250 = vector.broadcast %cst_97 : f32 to vector<8x1xf32>
    %251 = arith.addf %247, %250 : vector<8x1xf32>
    %252 = math.rsqrt %251 : vector<8x1xf32>
    %253 = vector.broadcast %252 : vector<8x1xf32> to vector<8x128xf32>
    %254 = arith.mulf %249, %253 : vector<8x128xf32>
    %255 = vector.broadcast %234 : vector<1x128xf32> to vector<8x128xf32>
    %256 = arith.mulf %254, %255 : vector<8x128xf32>
    %257 = vector.broadcast %235 : vector<1x128xf32> to vector<8x128xf32>
    %258 = arith.addf %256, %257 : vector<8x128xf32>
    %c0_98 = arith.constant 0 : index
    %c0_99 = arith.constant 0 : index
    %c0_100 = arith.constant 0 : index
    %259 = vector.load %arg31[%c0_98, %c0_99, %c0_100] : memref<1x8x128xf32, #tpu.memory_space<vmem>>, vector<1x8x128xf32>
    %260 = vector.shape_cast %259 : vector<1x8x128xf32> to vector<8x128xf32>
    %261 = vector.shape_cast %258 : vector<8x128xf32> to vector<1x8x128xf32>
    tpu.vector_store %arg31[%c0_98, %c0_99, %c0_100], %261 {strides = array<i32>} : memref<1x8x128xf32, #tpu.memory_space<vmem>>, vector<1x8x128xf32>,
    return
  }
  func.func @transform_0(%arg0: i32) -> (i32, i32, i32) {
    %c0_i32 = arith.constant 0 : i32
    %c0_i32_0 = arith.constant 0 : i32
    %c0_i32_1 = arith.constant 0 : i32
    return %arg0, %c0_i32, %c0_i32_0 : i32, i32, i32
  }
  func.func @transform_1(%arg0: i32) -> (i32, i32, i32) {
    %c0_i32 = arith.constant 0 : i32
    %c0_i32_0 = arith.constant 0 : i32
    %c0_i32_1 = arith.constant 0 : i32
    return %arg0, %c0_i32, %c0_i32_0 : i32, i32, i32
  }
  func.func @transform_2(%arg0: i32) -> (i32, i32, i32) {
    %c0_i32 = arith.constant 0 : i32
    %c0_i32_0 = arith.constant 0 : i32
    %c0_i32_1 = arith.constant 0 : i32
    return %arg0, %c0_i32, %c0_i32_0 : i32, i32, i32
  }
  func.func @transform_3(%arg0: i32) -> (i32, i32, i32) {
    %c0_i32 = arith.constant 0 : i32
    %c0_i32_0 = arith.constant 0 : i32
    %c0_i32_1 = arith.constant 0 : i32
    return %arg0, %c0_i32, %c0_i32_0 : i32, i32, i32
  }
  func.func @transform_4(%arg0: i32) -> (i32, i32) {
    %c0_i32 = arith.constant 0 : i32
    %c0_i32_0 = arith.constant 0 : i32
    %c0_i32_1 = arith.constant 0 : i32
    return %c0_i32, %c0_i32_0 : i32, i32
  }
  func.func @transform_5(%arg0: i32) -> (i32, i32) {
    %c0_i32 = arith.constant 0 : i32
    %c0_i32_0 = arith.constant 0 : i32
    %c0_i32_1 = arith.constant 0 : i32
    return %c0_i32, %c0_i32_0 : i32, i32
  }
  func.func @transform_6(%arg0: i32) -> (i32, i32) {
    %c0_i32 = arith.constant 0 : i32
    %c0_i32_0 = arith.constant 0 : i32
    %c0_i32_1 = arith.constant 0 : i32
    return %c0_i32, %c0_i32_0 : i32, i32
  }
  func.func @transform_7(%arg0: i32) -> (i32, i32) {
    %c0_i32 = arith.constant 0 : i32
    %c0_i32_0 = arith.constant 0 : i32
    %c0_i32_1 = arith.constant 0 : i32
    return %c0_i32, %c0_i32_0 : i32, i32
  }
  func.func @transform_8(%arg0: i32) -> (i32, i32) {
    %c0_i32 = arith.constant 0 : i32
    %c0_i32_0 = arith.constant 0 : i32
    %c0_i32_1 = arith.constant 0 : i32
    return %c0_i32, %c0_i32_0 : i32, i32
  }
  func.func @transform_9(%arg0: i32) -> (i32, i32) {
    %c0_i32 = arith.constant 0 : i32
    %c0_i32_0 = arith.constant 0 : i32
    %c0_i32_1 = arith.constant 0 : i32
    return %c0_i32, %c0_i32_0 : i32, i32
  }
  func.func @transform_10(%arg0: i32) -> (i32, i32) {
    %c0_i32 = arith.constant 0 : i32
    %c0_i32_0 = arith.constant 0 : i32
    %c0_i32_1 = arith.constant 0 : i32
    return %c0_i32, %c0_i32_0 : i32, i32
  }
  func.func @transform_11(%arg0: i32) -> (i32, i32) {
    %c0_i32 = arith.constant 0 : i32
    %c0_i32_0 = arith.constant 0 : i32
    %c0_i32_1 = arith.constant 0 : i32
    return %c0_i32, %c0_i32_0 : i32, i32
  }
  func.func @transform_12(%arg0: i32) -> (i32, i32) {
    %c0_i32 = arith.constant 0 : i32
    %c0_i32_0 = arith.constant 0 : i32
    %c0_i32_1 = arith.constant 0 : i32
    return %c0_i32, %c0_i32_0 : i32, i32
  }
  func.func @transform_13(%arg0: i32) -> (i32, i32) {
    %c0_i32 = arith.constant 0 : i32
    %c0_i32_0 = arith.constant 0 : i32
    %c0_i32_1 = arith.constant 0 : i32
    return %c0_i32, %c0_i32_0 : i32, i32
  }
  func.func @transform_14(%arg0: i32) -> (i32, i32) {
    %c0_i32 = arith.constant 0 : i32
    %c0_i32_0 = arith.constant 0 : i32
    %c0_i32_1 = arith.constant 0 : i32
    return %c0_i32, %c0_i32_0 : i32, i32
  }
  func.func @transform_15(%arg0: i32) -> (i32, i32) {
    %c0_i32 = arith.constant 0 : i32
    %c0_i32_0 = arith.constant 0 : i32
    %c0_i32_1 = arith.constant 0 : i32
    return %c0_i32, %c0_i32_0 : i32, i32
  }
  func.func @transform_16(%arg0: i32) -> (i32, i32) {
    %c0_i32 = arith.constant 0 : i32
    %c0_i32_0 = arith.constant 0 : i32
    %c0_i32_1 = arith.constant 0 : i32
    return %c0_i32, %c0_i32_0 : i32, i32
  }
  func.func @transform_17(%arg0: i32) -> (i32, i32) {
    %c0_i32 = arith.constant 0 : i32
    %c0_i32_0 = arith.constant 0 : i32
    %c0_i32_1 = arith.constant 0 : i32
    return %c0_i32, %c0_i32_0 : i32, i32
  }
  func.func @transform_18(%arg0: i32) -> (i32, i32) {
    %c0_i32 = arith.constant 0 : i32
    %c0_i32_0 = arith.constant 0 : i32
    %c0_i32_1 = arith.constant 0 : i32
    return %c0_i32, %c0_i32_0 : i32, i32
  }
  func.func @transform_19(%arg0: i32) -> (i32, i32) {
    %c0_i32 = arith.constant 0 : i32
    %c0_i32_0 = arith.constant 0 : i32
    %c0_i32_1 = arith.constant 0 : i32
    return %c0_i32, %c0_i32_0 : i32, i32
  }
  func.func @transform_20(%arg0: i32) -> (i32, i32) {
    %c0_i32 = arith.constant 0 : i32
    %c0_i32_0 = arith.constant 0 : i32
    %c0_i32_1 = arith.constant 0 : i32
    return %c0_i32, %c0_i32_0 : i32, i32
  }
  func.func @transform_21(%arg0: i32) -> (i32, i32) {
    %c0_i32 = arith.constant 0 : i32
    %c0_i32_0 = arith.constant 0 : i32
    %c0_i32_1 = arith.constant 0 : i32
    return %c0_i32, %c0_i32_0 : i32, i32
  }
  func.func @transform_22(%arg0: i32) -> (i32, i32) {
    %c0_i32 = arith.constant 0 : i32
    %c0_i32_0 = arith.constant 0 : i32
    %c0_i32_1 = arith.constant 0 : i32
    return %c0_i32, %c0_i32_0 : i32, i32
  }
  func.func @transform_23(%arg0: i32) -> (i32, i32) {
    %c0_i32 = arith.constant 0 : i32
    %c0_i32_0 = arith.constant 0 : i32
    %c0_i32_1 = arith.constant 0 : i32
    return %c0_i32, %c0_i32_0 : i32, i32
  }
  func.func @transform_24(%arg0: i32) -> (i32, i32) {
    %c0_i32 = arith.constant 0 : i32
    %c0_i32_0 = arith.constant 0 : i32
    %c0_i32_1 = arith.constant 0 : i32
    return %c0_i32, %c0_i32_0 : i32, i32
  }
  func.func @transform_25(%arg0: i32) -> (i32, i32) {
    %c0_i32 = arith.constant 0 : i32
    %c0_i32_0 = arith.constant 0 : i32
    %c0_i32_1 = arith.constant 0 : i32
    return %c0_i32, %c0_i32_0 : i32, i32
  }
  func.func @transform_26(%arg0: i32) -> (i32, i32) {
    %c0_i32 = arith.constant 0 : i32
    %c0_i32_0 = arith.constant 0 : i32
    %c0_i32_1 = arith.constant 0 : i32
    return %c0_i32, %c0_i32_0 : i32, i32
  }
  func.func @transform_27(%arg0: i32) -> (i32, i32) {
    %c0_i32 = arith.constant 0 : i32
    %c0_i32_0 = arith.constant 0 : i32
    %c0_i32_1 = arith.constant 0 : i32
    return %c0_i32, %c0_i32_0 : i32, i32
  }
  func.func @transform_28(%arg0: i32) -> (i32, i32) {
    %c0_i32 = arith.constant 0 : i32
    %c0_i32_0 = arith.constant 0 : i32
    %c0_i32_1 = arith.constant 0 : i32
    return %c0_i32, %c0_i32_0 : i32, i32
  }
  func.func @transform_29(%arg0: i32) -> (i32, i32) {
    %c0_i32 = arith.constant 0 : i32
    %c0_i32_0 = arith.constant 0 : i32
    %c0_i32_1 = arith.constant 0 : i32
    return %c0_i32, %c0_i32_0 : i32, i32
  }
  func.func @transform_30(%arg0: i32) -> (i32, i32, i32) {
    %c0_i32 = arith.constant 0 : i32
    %c0_i32_0 = arith.constant 0 : i32
    %c0_i32_1 = arith.constant 0 : i32
    return %arg0, %c0_i32, %c0_i32_0 : i32, i32, i32
  }
}

</mosaic_0001>

<llo_original>
// kernel: tpu_custom_call.1
$region0: #{tpu_custom_call.1}
  #allocation0 [shape = 'u32[]', space=smem, size = 0x4, offset = 0x4, fixed_abs, tag = 'smem constant byte address 0x4 - core index']
  #allocation1 [shape = 'u32[72,128]{1,0:T(1,128)}', space=vmem, size = 0x9000, scoped, tag = 'internal scratch']
  %s0 = inlined_call_operand.smem [shape: u32[31], index: -1, kind: input, shape index: {}]
  %s1 = sld [smem:[%s0]]
  %s2 = scalar_lea.smem %s0, 1
  %s3 = sld [smem:[%s2]]
  %s4 = scalar_lea.smem %s0, 2
  %s5 = sld [smem:[%s4]]
  %s6 = scalar_lea.smem %s0, 3
  %s7 = sld [smem:[%s6]]
  %s8 = scalar_lea.smem %s0, 4
  %s9 = sld [smem:[%s8]]
  %s10 = scalar_lea.smem %s0, 5
  %s11 = sld [smem:[%s10]]
  %s12 = scalar_lea.smem %s0, 6
  %s13 = sld [smem:[%s12]]
  %s14 = scalar_lea.smem %s0, 7
  %s15 = sld [smem:[%s14]]
  %s16 = scalar_lea.smem %s0, 8
  %s17 = sld [smem:[%s16]]
  %s18 = scalar_lea.smem %s0, 9
  %s19 = sld [smem:[%s18]]
  %s20 = scalar_lea.smem %s0, 10
  %s21 = sld [smem:[%s20]]
  %s22 = scalar_lea.smem %s0, 11
  %s23 = sld [smem:[%s22]]
  %s24 = scalar_lea.smem %s0, 12
  %s25 = sld [smem:[%s24]]
  %s26 = scalar_lea.smem %s0, 13
  %s27 = sld [smem:[%s26]]
  %s28 = scalar_lea.smem %s0, 14
  %s29 = sld [smem:[%s28]]
  %s30 = scalar_lea.smem %s0, 15
  %s31 = sld [smem:[%s30]]
  %s32 = scalar_lea.smem %s0, 16
  %s33 = sld [smem:[%s32]]
  %s34 = scalar_lea.smem %s0, 17
  %s35 = sld [smem:[%s34]]
  %s36 = scalar_lea.smem %s0, 18
  %s37 = sld [smem:[%s36]]
  %s38 = scalar_lea.smem %s0, 19
  %s39 = sld [smem:[%s38]]
  %s40 = scalar_lea.smem %s0, 20
  %s41 = sld [smem:[%s40]]
  %s42 = scalar_lea.smem %s0, 21
  %s43 = sld [smem:[%s42]]
  %s44 = scalar_lea.smem %s0, 22
  %s45 = sld [smem:[%s44]]
  %s46 = scalar_lea.smem %s0, 23
  %s47 = sld [smem:[%s46]]
  %s48 = scalar_lea.smem %s0, 24
  %s49 = sld [smem:[%s48]]
  %s50 = scalar_lea.smem %s0, 25
  %s51 = sld [smem:[%s50]]
  %s52 = scalar_lea.smem %s0, 26
  %s53 = sld [smem:[%s52]]
  %s54 = scalar_lea.smem %s0, 27
  %s55 = sld [smem:[%s54]]
  %s56 = scalar_lea.smem %s0, 28
  %s57 = sld [smem:[%s56]]
  %s58 = scalar_lea.smem %s0, 29
  %s59 = sld [smem:[%s58]]
  %s60 = scalar_lea.smem %s0, 30
  %s61 = sld [smem:[%s60]]
  %s62 = sld [smem:[#allocation0]]
  $region209: #{tpu_custom_call.1} parent=0
    _
  %s64 = ssub.s32 1, %s62
  %s65 = scalar_select 0, %s64, %s62
  $region1: #{tpu_custom_call.1} parent=0
    #allocation2 [shape = 'u8[8192]{0}', space=vmem, size = 0x2000, scoped, tag = 'input window, operand 0']
    #allocation3 [shape = 's32[2]{0}', space=sflag, size = 0x8, scoped, tag = 'scoped memory for tpu_custom_call.1']
    #allocation4 [shape = 's32[2]{0}', space=sflag, size = 0x8, scoped, tag = 'scoped memory for tpu_custom_call.1']
    #allocation5 [shape = 'u8[16384]{0}', space=vmem, size = 0x4000, scoped, tag = 'input window, operand 1']
    #allocation6 [shape = 's32[2]{0}', space=sflag, size = 0x8, scoped, tag = 'scoped memory for tpu_custom_call.1']
    #allocation7 [shape = 'u8[4096]{0}', space=vmem, size = 0x1000, scoped, tag = 'input window, operand 2']
    #allocation8 [shape = 'u8[4096]{0}', space=vmem, size = 0x1000, scoped, tag = 'input window, operand 3']
    #allocation9 [shape = 's32[2]{0}', space=sflag, size = 0x8, scoped, tag = 'scoped memory for tpu_custom_call.1']
    #allocation10 [shape = 'u8[32768]{0}', space=vmem, size = 0x8000, scoped, tag = 'input window, operand 4, single buffered']
    #allocation11 [shape = 'u8[32768]{0}', space=vmem, size = 0x8000, scoped, tag = 'input window, operand 6, single buffered']
    #allocation12 [shape = 's32[1]{0}', space=sflag, size = 0x4, scoped, tag = 'scoped memory for tpu_custom_call.1']
    #allocation13 [shape = 'u8[32768]{0}', space=vmem, size = 0x8000, scoped, tag = 'input window, operand 8, single buffered']
    #allocation14 [shape = 'u8[32768]{0}', space=vmem, size = 0x8000, scoped, tag = 'input window, operand 10, single buffered']
    #allocation15 [shape = 's32[1]{0}', space=sflag, size = 0x4, scoped, tag = 'scoped memory for tpu_custom_call.1']
    #allocation16 [shape = 'u8[32768]{0}', space=vmem, size = 0x8000, scoped, tag = 'input window, operand 14, single buffered']
    #allocation17 [shape = 'u8[32768]{0}', space=vmem, size = 0x8000, scoped, tag = 'input window, operand 16, single buffered']
    #allocation18 [shape = 's32[1]{0}', space=sflag, size = 0x4, scoped, tag = 'scoped memory for tpu_custom_call.1']
    #allocation19 [shape = 'u8[32768]{0}', space=vmem, size = 0x8000, scoped, tag = 'input window, operand 18, single buffered']
    #allocation20 [shape = 'u8[32768]{0}', space=vmem, size = 0x8000, scoped, tag = 'input window, operand 20, single buffered']
    #allocation21 [shape = 's32[1]{0}', space=sflag, size = 0x4, scoped, tag = 'scoped memory for tpu_custom_call.1']
    #allocation22 [shape = 'u8[65536]{0}', space=vmem, size = 0x10000, scoped, tag = 'input window, operand 24, single buffered']
    #allocation23 [shape = 'u8[65536]{0}', space=vmem, size = 0x10000, scoped, tag = 'input window, operand 26, single buffered']
    #allocation24 [shape = 's32[1]{0}', space=sflag, size = 0x4, scoped, tag = 'scoped memory for tpu_custom_call.1']
    #allocation25 [shape = 'u8[8192]{0}', space=vmem, size = 0x2000, scoped, tag = 'output window, operand 0']
    %66 = vsyncpa [#allocation3], 0
    %s67 = scalar_lea.sflag [#allocation3], 1
    %68 = vsyncpa %s67, 0
    %69 = vsyncpa [#allocation6], 0
    %s70 = scalar_lea.sflag [#allocation6], 1
    %71 = vsyncpa %s70, 0
    %72 = vsyncpa [#allocation9], 0
    %s73 = scalar_lea.sflag [#allocation9], 1
    %74 = vsyncpa %s73, 0
    %75 = vsyncpa [#allocation12], 0
    %76 = vsyncpa [#allocation15], 0
    %77 = vsyncpa [#allocation18], 0
    %78 = vsyncpa [#allocation21], 0
    %79 = vsyncpa [#allocation24], 0
    %80 = vsyncpa [#allocation4], 0
    %s81 = scalar_lea.sflag [#allocation4], 1
    %82 = vsyncpa %s81, 0
    loop: start=0, step=1, limit=4
    $region2: #{tpu_custom_call.1} parent=1 // loop_pre_header
      _
    $region3: #{tpu_custom_call.1} parent=1 // loop_header
      %s84 = sphi 0, %s88
      %p85 = scmp.ge.s32.totalorder %s84, 4
      %s94 = sphi 0, %s96
      %s97 = sphi 0, %s94
      %s98 = sphi 0, %s97
      %s114 = sphi 0, %s98
      %s120 = sphi 0, %s122
      %s123 = sphi 0, %s120
      %s124 = sphi 0, %s123
      %s140 = sphi 0, %s124
      %s146 = sphi 0, %s148
      %s149 = sphi 0, %s146
      %s150 = sphi 0, %s149
      %s166 = sphi 0, %s150
      %s172 = sphi 0, %s174
      %s175 = sphi 0, %s172
      %s176 = sphi 0, %s175
      %s192 = sphi 0, %s176
      %s196 = sphi 0, %s196
      %s198 = sphi 0, %s196
      %s199 = sphi 0, %s198
      %s213 = sphi 0, %s199
      %s217 = sphi 0, %s217
      %s219 = sphi 0, %s217
      %s220 = sphi 0, %s219
      %s234 = sphi 0, %s220
      %s238 = sphi 0, %s238
      %s240 = sphi 0, %s238
      %s241 = sphi 0, %s240
      %s255 = sphi 0, %s241
      %s259 = sphi 0, %s259
      %s261 = sphi 0, %s259
      %s262 = sphi 0, %s261
      %s276 = sphi 0, %s262
      %s280 = sphi 0, %s280
      %s282 = sphi 0, %s280
      %s283 = sphi 0, %s282
      %s297 = sphi 0, %s283
      %s301 = sphi 0, %s301
      %s303 = sphi 0, %s301
      %s304 = sphi 0, %s303
      %s318 = sphi 0, %s304
      %s322 = sphi 0, %s322
      %s324 = sphi 0, %s322
      %s325 = sphi 0, %s324
      %s339 = sphi 0, %s325
      %s343 = sphi 0, %s343
      %s345 = sphi 0, %s343
      %s346 = sphi 0, %s345
      %s360 = sphi 0, %s346
      %s364 = sphi 0, %s364
      %s366 = sphi 0, %s364
      %s367 = sphi 0, %s366
      %s381 = sphi 0, %s367
      %s385 = sphi 0, %s385
      %s387 = sphi 0, %s385
      %s388 = sphi 0, %s387
      %s402 = sphi 0, %s388
      %s406 = sphi 0, %s406
      %s408 = sphi 0, %s406
      %s409 = sphi 0, %s408
      %s423 = sphi 0, %s409
      %s427 = sphi 0, %s427
      %s429 = sphi 0, %s427
      %s430 = sphi 0, %s429
      %s444 = sphi 0, %s430
      %s448 = sphi 0, %s448
      %s450 = sphi 0, %s448
      %s451 = sphi 0, %s450
      %s465 = sphi 0, %s451
      %s469 = sphi 0, %s469
      %s471 = sphi 0, %s469
      %s472 = sphi 0, %s471
      %s486 = sphi 0, %s472
      %s490 = sphi 0, %s490
      %s492 = sphi 0, %s490
      %s493 = sphi 0, %s492
      %s507 = sphi 0, %s493
      %s511 = sphi 0, %s511
      %s513 = sphi 0, %s511
      %s514 = sphi 0, %s513
      %s528 = sphi 0, %s514
      %s532 = sphi 0, %s532
      %s534 = sphi 0, %s532
      %s535 = sphi 0, %s534
      %s549 = sphi 0, %s535
      %s553 = sphi 0, %s553
      %s555 = sphi 0, %s553
      %s556 = sphi 0, %s555
      %s570 = sphi 0, %s556
      %s574 = sphi 0, %s574
      %s576 = sphi 0, %s574
      %s577 = sphi 0, %s576
      %s591 = sphi 0, %s577
      %s595 = sphi 0, %s595
      %s597 = sphi 0, %s595
      %s598 = sphi 0, %s597
      %s612 = sphi 0, %s598
      %s616 = sphi 0, %s616
      %s618 = sphi 0, %s616
      %s619 = sphi 0, %s618
      %s633 = sphi 0, %s619
      %s637 = sphi 0, %s637
      %s639 = sphi 0, %s637
      %s640 = sphi 0, %s639
      %s654 = sphi 0, %s640
      %s658 = sphi 0, %s658
      %s660 = sphi 0, %s658
      %s661 = sphi 0, %s660
      %s675 = sphi 0, %s661
      %s679 = sphi 0, %s679
      %s681 = sphi 0, %s679
      %s682 = sphi 0, %s681
      %s696 = sphi 0, %s682
      %s700 = sphi 0, %s700
      %s702 = sphi 0, %s700
      %s703 = sphi 0, %s702
      %s717 = sphi 0, %s703
      %s721 = sphi 0, %s721
      %s723 = sphi 0, %s721
      %s724 = sphi 0, %s723
      %s738 = sphi 0, %s724
      %s744 = sphi 0, %s746
      %s747 = sphi 0, %s744
      %s748 = sphi 0, %s747
      %s764 = sphi 0, %s748
    $region4: #{tpu_custom_call.1} parent=1 // loop_header_branch
      %87 = sbr.rel (%p85) target = $region8
    $region5: #{tpu_custom_call.1} parent=1 // loop_body
      %s89 = ssub.s32 %s84, 1
      %s90 = ssub.s32 %s84, 2
      %s91 = sadd.s32 %s84, 1
      %s92 = ssub.s32 %s84, %s91
      %p93 = scmp.eq.s32.totalorder %s92, 0
      %s95 = sadd.s32 %s94, 1
      %s96 = scalar_select %p93, %s94, %s95
      %p99 = pneg %p93
      %p100 = scmp.eq.s32.totalorder %s84, 1
      %p101 = por %p99, %p100
      %p102 = scmp.ne.s32.totalorder %s94, %s97
      %p103 = scmp.eq.s32.totalorder %s84, 0
      %p104 = por %p102, %p103
      %p105 = scmp.ne.s32.totalorder %s94, %s97
      %p106 = scmp.eq.s32.totalorder %s89, 1
      %p107 = por %p105, %p106
      %p108 = scmp.ne.s32.totalorder %s97, %s98
      %p109 = scmp.eq.s32.totalorder %s89, 0
      %p110 = por %p108, %p109
      %p111 = scmp.ne.s32.totalorder %s97, %s98
      %p112 = scmp.eq.s32.totalorder %s90, 1
      %p113 = por %p111, %p112
      %p115 = scmp.ne.s32.totalorder %s98, %s114
      %p116 = scmp.eq.s32.totalorder %s90, 0
      %p117 = por %p115, %p116
      %s118 = ssub.s32 %s84, %s91
      %p119 = scmp.eq.s32.totalorder %s118, 0
      %s121 = sadd.s32 %s120, 1
      %s122 = scalar_select %p119, %s120, %s121
      %p125 = pneg %p119
      %p126 = scmp.eq.s32.totalorder %s84, 1
      %p127 = por %p125, %p126
      %p128 = scmp.ne.s32.totalorder %s120, %s123
      %p129 = scmp.eq.s32.totalorder %s84, 0
      %p130 = por %p128, %p129
      %p131 = scmp.ne.s32.totalorder %s120, %s123
      %p132 = scmp.eq.s32.totalorder %s89, 1
      %p133 = por %p131, %p132
      %p134 = scmp.ne.s32.totalorder %s123, %s124
      %p135 = scmp.eq.s32.totalorder %s89, 0
      %p136 = por %p134, %p135
      %p137 = scmp.ne.s32.totalorder %s123, %s124
      %p138 = scmp.eq.s32.totalorder %s90, 1
      %p139 = por %p137, %p138
      %p141 = scmp.ne.s32.totalorder %s124, %s140
      %p142 = scmp.eq.s32.totalorder %s90, 0
      %p143 = por %p141, %p142
      %s144 = ssub.s32 %s84, %s91
      %p145 = scmp.eq.s32.totalorder %s144, 0
      %s147 = sadd.s32 %s146, 1
      %s148 = scalar_select %p145, %s146, %s147
      %p151 = pneg %p145
      %p152 = scmp.eq.s32.totalorder %s84, 1
      %p153 = por %p151, %p152
      %p154 = scmp.ne.s32.totalorder %s146, %s149
      %p155 = scmp.eq.s32.totalorder %s84, 0
      %p156 = por %p154, %p155
      %p157 = scmp.ne.s32.totalorder %s146, %s149
      %p158 = scmp.eq.s32.totalorder %s89, 1
      %p159 = por %p157, %p158
      %p160 = scmp.ne.s32.totalorder %s149, %s150
      %p161 = scmp.eq.s32.totalorder %s89, 0
      %p162 = por %p160, %p161
      %p163 = scmp.ne.s32.totalorder %s149, %s150
      %p164 = scmp.eq.s32.totalorder %s90, 1
      %p165 = por %p163, %p164
      %p167 = scmp.ne.s32.totalorder %s150, %s166
      %p168 = scmp.eq.s32.totalorder %s90, 0
      %p169 = por %p167, %p168
      %s170 = ssub.s32 %s84, %s91
      %p171 = scmp.eq.s32.totalorder %s170, 0
      %s173 = sadd.s32 %s172, 1
      %s174 = scalar_select %p171, %s172, %s173
      %p177 = pneg %p171
      %p178 = scmp.eq.s32.totalorder %s84, 1
      %p179 = por %p177, %p178
      %p180 = scmp.ne.s32.totalorder %s172, %s175
      %p181 = scmp.eq.s32.totalorder %s84, 0
      %p182 = por %p180, %p181
      %p183 = scmp.ne.s32.totalorder %s172, %s175
      %p184 = scmp.eq.s32.totalorder %s89, 1
      %p185 = por %p183, %p184
      %p186 = scmp.ne.s32.totalorder %s175, %s176
      %p187 = scmp.eq.s32.totalorder %s89, 0
      %p188 = por %p186, %p187
      %p189 = scmp.ne.s32.totalorder %s175, %s176
      %p190 = scmp.eq.s32.totalorder %s90, 1
      %p191 = por %p189, %p190
      %p193 = scmp.ne.s32.totalorder %s176, %s192
      %p194 = scmp.eq.s32.totalorder %s90, 0
      %p195 = por %p193, %p194
      %s197 = sadd.s32 %s196, 1
      %p200 = scmp.eq.s32.totalorder %s84, 1
      %p201 = scmp.ne.s32.totalorder %s196, %s198
      %p202 = scmp.eq.s32.totalorder %s84, 0
      %p203 = por %p201, %p202
      %p204 = scmp.ne.s32.totalorder %s196, %s198
      %p205 = scmp.eq.s32.totalorder %s89, 1
      %p206 = por %p204, %p205
      %p207 = scmp.ne.s32.totalorder %s198, %s199
      %p208 = scmp.eq.s32.totalorder %s89, 0
      %p209 = por %p207, %p208
      %p210 = scmp.ne.s32.totalorder %s198, %s199
      %p211 = scmp.eq.s32.totalorder %s90, 1
      %p212 = por %p210, %p211
      %p214 = scmp.ne.s32.totalorder %s199, %s213
      %p215 = scmp.eq.s32.totalorder %s90, 0
      %p216 = por %p214, %p215
      %s218 = sadd.s32 %s217, 1
      %p221 = scmp.eq.s32.totalorder %s84, 1
      %p222 = scmp.ne.s32.totalorder %s217, %s219
      %p223 = scmp.eq.s32.totalorder %s84, 0
      %p224 = por %p222, %p223
      %p225 = scmp.ne.s32.totalorder %s217, %s219
      %p226 = scmp.eq.s32.totalorder %s89, 1
      %p227 = por %p225, %p226
      %p228 = scmp.ne.s32.totalorder %s219, %s220
      %p229 = scmp.eq.s32.totalorder %s89, 0
      %p230 = por %p228, %p229
      %p231 = scmp.ne.s32.totalorder %s219, %s220
      %p232 = scmp.eq.s32.totalorder %s90, 1
      %p233 = por %p231, %p232
      %p235 = scmp.ne.s32.totalorder %s220, %s234
      %p236 = scmp.eq.s32.totalorder %s90, 0
      %p237 = por %p235, %p236
      %s239 = sadd.s32 %s238, 1
      %p242 = scmp.eq.s32.totalorder %s84, 1
      %p243 = scmp.ne.s32.totalorder %s238, %s240
      %p244 = scmp.eq.s32.totalorder %s84, 0
      %p245 = por %p243, %p244
      %p246 = scmp.ne.s32.totalorder %s238, %s240
      %p247 = scmp.eq.s32.totalorder %s89, 1
      %p248 = por %p246, %p247
      %p249 = scmp.ne.s32.totalorder %s240, %s241
      %p250 = scmp.eq.s32.totalorder %s89, 0
      %p251 = por %p249, %p250
      %p252 = scmp.ne.s32.totalorder %s240, %s241
      %p253 = scmp.eq.s32.totalorder %s90, 1
      %p254 = por %p252, %p253
      %p256 = scmp.ne.s32.totalorder %s241, %s255
      %p257 = scmp.eq.s32.totalorder %s90, 0
      %p258 = por %p256, %p257
      %s260 = sadd.s32 %s259, 1
      %p263 = scmp.eq.s32.totalorder %s84, 1
      %p264 = scmp.ne.s32.totalorder %s259, %s261
      %p265 = scmp.eq.s32.totalorder %s84, 0
      %p266 = por %p264, %p265
      %p267 = scmp.ne.s32.totalorder %s259, %s261
      %p268 = scmp.eq.s32.totalorder %s89, 1
      %p269 = por %p267, %p268
      %p270 = scmp.ne.s32.totalorder %s261, %s262
      %p271 = scmp.eq.s32.totalorder %s89, 0
      %p272 = por %p270, %p271
      %p273 = scmp.ne.s32.totalorder %s261, %s262
      %p274 = scmp.eq.s32.totalorder %s90, 1
      %p275 = por %p273, %p274
      %p277 = scmp.ne.s32.totalorder %s262, %s276
      %p278 = scmp.eq.s32.totalorder %s90, 0
      %p279 = por %p277, %p278
      %s281 = sadd.s32 %s280, 1
      %p284 = scmp.eq.s32.totalorder %s84, 1
      %p285 = scmp.ne.s32.totalorder %s280, %s282
      %p286 = scmp.eq.s32.totalorder %s84, 0
      %p287 = por %p285, %p286
      %p288 = scmp.ne.s32.totalorder %s280, %s282
      %p289 = scmp.eq.s32.totalorder %s89, 1
      %p290 = por %p288, %p289
      %p291 = scmp.ne.s32.totalorder %s282, %s283
      %p292 = scmp.eq.s32.totalorder %s89, 0
      %p293 = por %p291, %p292
      %p294 = scmp.ne.s32.totalorder %s282, %s283
      %p295 = scmp.eq.s32.totalorder %s90, 1
      %p296 = por %p294, %p295
      %p298 = scmp.ne.s32.totalorder %s283, %s297
      %p299 = scmp.eq.s32.totalorder %s90, 0
      %p300 = por %p298, %p299
      %s302 = sadd.s32 %s301, 1
      %p305 = scmp.eq.s32.totalorder %s84, 1
      %p306 = scmp.ne.s32.totalorder %s301, %s303
      %p307 = scmp.eq.s32.totalorder %s84, 0
      %p308 = por %p306, %p307
      %p309 = scmp.ne.s32.totalorder %s301, %s303
      %p310 = scmp.eq.s32.totalorder %s89, 1
      %p311 = por %p309, %p310
      %p312 = scmp.ne.s32.totalorder %s303, %s304
      %p313 = scmp.eq.s32.totalorder %s89, 0
      %p314 = por %p312, %p313
      %p315 = scmp.ne.s32.totalorder %s303, %s304
      %p316 = scmp.eq.s32.totalorder %s90, 1
      %p317 = por %p315, %p316
      %p319 = scmp.ne.s32.totalorder %s304, %s318
      %p320 = scmp.eq.s32.totalorder %s90, 0
      %p321 = por %p319, %p320
      %s323 = sadd.s32 %s322, 1
      %p326 = scmp.eq.s32.totalorder %s84, 1
      %p327 = scmp.ne.s32.totalorder %s322, %s324
      %p328 = scmp.eq.s32.totalorder %s84, 0
      %p329 = por %p327, %p328
      %p330 = scmp.ne.s32.totalorder %s322, %s324
      %p331 = scmp.eq.s32.totalorder %s89, 1
      %p332 = por %p330, %p331
      %p333 = scmp.ne.s32.totalorder %s324, %s325
      %p334 = scmp.eq.s32.totalorder %s89, 0
      %p335 = por %p333, %p334
      %p336 = scmp.ne.s32.totalorder %s324, %s325
      %p337 = scmp.eq.s32.totalorder %s90, 1
      %p338 = por %p336, %p337
      %p340 = scmp.ne.s32.totalorder %s325, %s339
      %p341 = scmp.eq.s32.totalorder %s90, 0
      %p342 = por %p340, %p341
      %s344 = sadd.s32 %s343, 1
      %p347 = scmp.eq.s32.totalorder %s84, 1
      %p348 = scmp.ne.s32.totalorder %s343, %s345
      %p349 = scmp.eq.s32.totalorder %s84, 0
      %p350 = por %p348, %p349
      %p351 = scmp.ne.s32.totalorder %s343, %s345
      %p352 = scmp.eq.s32.totalorder %s89, 1
      %p353 = por %p351, %p352
      %p354 = scmp.ne.s32.totalorder %s345, %s346
      %p355 = scmp.eq.s32.totalorder %s89, 0
      %p356 = por %p354, %p355
      %p357 = scmp.ne.s32.totalorder %s345, %s346
      %p358 = scmp.eq.s32.totalorder %s90, 1
      %p359 = por %p357, %p358
      %p361 = scmp.ne.s32.totalorder %s346, %s360
      %p362 = scmp.eq.s32.totalorder %s90, 0
      %p363 = por %p361, %p362
      %s365 = sadd.s32 %s364, 1
      %p368 = scmp.eq.s32.totalorder %s84, 1
      %p369 = scmp.ne.s32.totalorder %s364, %s366
      %p370 = scmp.eq.s32.totalorder %s84, 0
      %p371 = por %p369, %p370
      %p372 = scmp.ne.s32.totalorder %s364, %s366
      %p373 = scmp.eq.s32.totalorder %s89, 1
      %p374 = por %p372, %p373
      %p375 = scmp.ne.s32.totalorder %s366, %s367
      %p376 = scmp.eq.s32.totalorder %s89, 0
      %p377 = por %p375, %p376
      %p378 = scmp.ne.s32.totalorder %s366, %s367
      %p379 = scmp.eq.s32.totalorder %s90, 1
      %p380 = por %p378, %p379
      %p382 = scmp.ne.s32.totalorder %s367, %s381
      %p383 = scmp.eq.s32.totalorder %s90, 0
      %p384 = por %p382, %p383
      %s386 = sadd.s32 %s385, 1
      %p389 = scmp.eq.s32.totalorder %s84, 1
      %p390 = scmp.ne.s32.totalorder %s385, %s387
      %p391 = scmp.eq.s32.totalorder %s84, 0
      %p392 = por %p390, %p391
      %p393 = scmp.ne.s32.totalorder %s385, %s387
      %p394 = scmp.eq.s32.totalorder %s89, 1
      %p395 = por %p393, %p394
      %p396 = scmp.ne.s32.totalorder %s387, %s388
      %p397 = scmp.eq.s32.totalorder %s89, 0
      %p398 = por %p396, %p397
      %p399 = scmp.ne.s32.totalorder %s387, %s388
      %p400 = scmp.eq.s32.totalorder %s90, 1
      %p401 = por %p399, %p400
      %p403 = scmp.ne.s32.totalorder %s388, %s402
      %p404 = scmp.eq.s32.totalorder %s90, 0
      %p405 = por %p403, %p404
      %s407 = sadd.s32 %s406, 1
      %p410 = scmp.eq.s32.totalorder %s84, 1
      %p411 = scmp.ne.s32.totalorder %s406, %s408
      %p412 = scmp.eq.s32.totalorder %s84, 0
      %p413 = por %p411, %p412
      %p414 = scmp.ne.s32.totalorder %s406, %s408
      %p415 = scmp.eq.s32.totalorder %s89, 1
      %p416 = por %p414, %p415
      %p417 = scmp.ne.s32.totalorder %s408, %s409
      %p418 = scmp.eq.s32.totalorder %s89, 0
      %p419 = por %p417, %p418
      %p420 = scmp.ne.s32.totalorder %s408, %s409
      %p421 = scmp.eq.s32.totalorder %s90, 1
      %p422 = por %p420, %p421
      %p424 = scmp.ne.s32.totalorder %s409, %s423
      %p425 = scmp.eq.s32.totalorder %s90, 0
      %p426 = por %p424, %p425
      %s428 = sadd.s32 %s427, 1
      %p431 = scmp.eq.s32.totalorder %s84, 1
      %p432 = scmp.ne.s32.totalorder %s427, %s429
      %p433 = scmp.eq.s32.totalorder %s84, 0
      %p434 = por %p432, %p433
      %p435 = scmp.ne.s32.totalorder %s427, %s429
      %p436 = scmp.eq.s32.totalorder %s89, 1
      %p437 = por %p435, %p436
      %p438 = scmp.ne.s32.totalorder %s429, %s430
      %p439 = scmp.eq.s32.totalorder %s89, 0
      %p440 = por %p438, %p439
      %p441 = scmp.ne.s32.totalorder %s429, %s430
      %p442 = scmp.eq.s32.totalorder %s90, 1
      %p443 = por %p441, %p442
      %p445 = scmp.ne.s32.totalorder %s430, %s444
      %p446 = scmp.eq.s32.totalorder %s90, 0
      %p447 = por %p445, %p446
      %s449 = sadd.s32 %s448, 1
      %p452 = scmp.eq.s32.totalorder %s84, 1
      %p453 = scmp.ne.s32.totalorder %s448, %s450
      %p454 = scmp.eq.s32.totalorder %s84, 0
      %p455 = por %p453, %p454
      %p456 = scmp.ne.s32.totalorder %s448, %s450
      %p457 = scmp.eq.s32.totalorder %s89, 1
      %p458 = por %p456, %p457
      %p459 = scmp.ne.s32.totalorder %s450, %s451
      %p460 = scmp.eq.s32.totalorder %s89, 0
      %p461 = por %p459, %p460
      %p462 = scmp.ne.s32.totalorder %s450, %s451
      %p463 = scmp.eq.s32.totalorder %s90, 1
      %p464 = por %p462, %p463
      %p466 = scmp.ne.s32.totalorder %s451, %s465
      %p467 = scmp.eq.s32.totalorder %s90, 0
      %p468 = por %p466, %p467
      %s470 = sadd.s32 %s469, 1
      %p473 = scmp.eq.s32.totalorder %s84, 1
      %p474 = scmp.ne.s32.totalorder %s469, %s471
      %p475 = scmp.eq.s32.totalorder %s84, 0
      %p476 = por %p474, %p475
      %p477 = scmp.ne.s32.totalorder %s469, %s471
      %p478 = scmp.eq.s32.totalorder %s89, 1
      %p479 = por %p477, %p478
      %p480 = scmp.ne.s32.totalorder %s471, %s472
      %p481 = scmp.eq.s32.totalorder %s89, 0
      %p482 = por %p480, %p481
      %p483 = scmp.ne.s32.totalorder %s471, %s472
      %p484 = scmp.eq.s32.totalorder %s90, 1
      %p485 = por %p483, %p484
      %p487 = scmp.ne.s32.totalorder %s472, %s486
      %p488 = scmp.eq.s32.totalorder %s90, 0
      %p489 = por %p487, %p488
      %s491 = sadd.s32 %s490, 1
      %p494 = scmp.eq.s32.totalorder %s84, 1
      %p495 = scmp.ne.s32.totalorder %s490, %s492
      %p496 = scmp.eq.s32.totalorder %s84, 0
      %p497 = por %p495, %p496
      %p498 = scmp.ne.s32.totalorder %s490, %s492
      %p499 = scmp.eq.s32.totalorder %s89, 1
      %p500 = por %p498, %p499
      %p501 = scmp.ne.s32.totalorder %s492, %s493
      %p502 = scmp.eq.s32.totalorder %s89, 0
      %p503 = por %p501, %p502
      %p504 = scmp.ne.s32.totalorder %s492, %s493
      %p505 = scmp.eq.s32.totalorder %s90, 1
      %p506 = por %p504, %p505
      %p508 = scmp.ne.s32.totalorder %s493, %s507
      %p509 = scmp.eq.s32.totalorder %s90, 0
      %p510 = por %p508, %p509
      %s512 = sadd.s32 %s511, 1
      %p515 = scmp.eq.s32.totalorder %s84, 1
      %p516 = scmp.ne.s32.totalorder %s511, %s513
      %p517 = scmp.eq.s32.totalorder %s84, 0
      %p518 = por %p516, %p517
      %p519 = scmp.ne.s32.totalorder %s511, %s513
      %p520 = scmp.eq.s32.totalorder %s89, 1
      %p521 = por %p519, %p520
      %p522 = scmp.ne.s32.totalorder %s513, %s514
      %p523 = scmp.eq.s32.totalorder %s89, 0
      %p524 = por %p522, %p523
      %p525 = scmp.ne.s32.totalorder %s513, %s514
      %p526 = scmp.eq.s32.totalorder %s90, 1
      %p527 = por %p525, %p526
      %p529 = scmp.ne.s32.totalorder %s514, %s528
      %p530 = scmp.eq.s32.totalorder %s90, 0
      %p531 = por %p529, %p530
      %s533 = sadd.s32 %s532, 1
      %p536 = scmp.eq.s32.totalorder %s84, 1
      %p537 = scmp.ne.s32.totalorder %s532, %s534
      %p538 = scmp.eq.s32.totalorder %s84, 0
      %p539 = por %p537, %p538
      %p540 = scmp.ne.s32.totalorder %s532, %s534
      %p541 = scmp.eq.s32.totalorder %s89, 1
      %p542 = por %p540, %p541
      %p543 = scmp.ne.s32.totalorder %s534, %s535
      %p544 = scmp.eq.s32.totalorder %s89, 0
      %p545 = por %p543, %p544
      %p546 = scmp.ne.s32.totalorder %s534, %s535
      %p547 = scmp.eq.s32.totalorder %s90, 1
      %p548 = por %p546, %p547
      %p550 = scmp.ne.s32.totalorder %s535, %s549
      %p551 = scmp.eq.s32.totalorder %s90, 0
      %p552 = por %p550, %p551
      %s554 = sadd.s32 %s553, 1
      %p557 = scmp.eq.s32.totalorder %s84, 1
      %p558 = scmp.ne.s32.totalorder %s553, %s555
      %p559 = scmp.eq.s32.totalorder %s84, 0
      %p560 = por %p558, %p559
      %p561 = scmp.ne.s32.totalorder %s553, %s555
      %p562 = scmp.eq.s32.totalorder %s89, 1
      %p563 = por %p561, %p562
      %p564 = scmp.ne.s32.totalorder %s555, %s556
      %p565 = scmp.eq.s32.totalorder %s89, 0
      %p566 = por %p564, %p565
      %p567 = scmp.ne.s32.totalorder %s555, %s556
      %p568 = scmp.eq.s32.totalorder %s90, 1
      %p569 = por %p567, %p568
      %p571 = scmp.ne.s32.totalorder %s556, %s570
      %p572 = scmp.eq.s32.totalorder %s90, 0
      %p573 = por %p571, %p572
      %s575 = sadd.s32 %s574, 1
      %p578 = scmp.eq.s32.totalorder %s84, 1
      %p579 = scmp.ne.s32.totalorder %s574, %s576
      %p580 = scmp.eq.s32.totalorder %s84, 0
      %p581 = por %p579, %p580
      %p582 = scmp.ne.s32.totalorder %s574, %s576
      %p583 = scmp.eq.s32.totalorder %s89, 1
      %p584 = por %p582, %p583
      %p585 = scmp.ne.s32.totalorder %s576, %s577
      %p586 = scmp.eq.s32.totalorder %s89, 0
      %p587 = por %p585, %p586
      %p588 = scmp.ne.s32.totalorder %s576, %s577
      %p589 = scmp.eq.s32.totalorder %s90, 1
      %p590 = por %p588, %p589
      %p592 = scmp.ne.s32.totalorder %s577, %s591
      %p593 = scmp.eq.s32.totalorder %s90, 0
      %p594 = por %p592, %p593
      %s596 = sadd.s32 %s595, 1
      %p599 = scmp.eq.s32.totalorder %s84, 1
      %p600 = scmp.ne.s32.totalorder %s595, %s597
      %p601 = scmp.eq.s32.totalorder %s84, 0
      %p602 = por %p600, %p601
      %p603 = scmp.ne.s32.totalorder %s595, %s597
      %p604 = scmp.eq.s32.totalorder %s89, 1
      %p605 = por %p603, %p604
      %p606 = scmp.ne.s32.totalorder %s597, %s598
      %p607 = scmp.eq.s32.totalorder %s89, 0
      %p608 = por %p606, %p607
      %p609 = scmp.ne.s32.totalorder %s597, %s598
      %p610 = scmp.eq.s32.totalorder %s90, 1
      %p611 = por %p609, %p610
      %p613 = scmp.ne.s32.totalorder %s598, %s612
      %p614 = scmp.eq.s32.totalorder %s90, 0
      %p615 = por %p613, %p614
      %s617 = sadd.s32 %s616, 1
      %p620 = scmp.eq.s32.totalorder %s84, 1
      %p621 = scmp.ne.s32.totalorder %s616, %s618
      %p622 = scmp.eq.s32.totalorder %s84, 0
      %p623 = por %p621, %p622
      %p624 = scmp.ne.s32.totalorder %s616, %s618
      %p625 = scmp.eq.s32.totalorder %s89, 1
      %p626 = por %p624, %p625
      %p627 = scmp.ne.s32.totalorder %s618, %s619
      %p628 = scmp.eq.s32.totalorder %s89, 0
      %p629 = por %p627, %p628
      %p630 = scmp.ne.s32.totalorder %s618, %s619
      %p631 = scmp.eq.s32.totalorder %s90, 1
      %p632 = por %p630, %p631
      %p634 = scmp.ne.s32.totalorder %s619, %s633
      %p635 = scmp.eq.s32.totalorder %s90, 0
      %p636 = por %p634, %p635
      %s638 = sadd.s32 %s637, 1
      %p641 = scmp.eq.s32.totalorder %s84, 1
      %p642 = scmp.ne.s32.totalorder %s637, %s639
      %p643 = scmp.eq.s32.totalorder %s84, 0
      %p644 = por %p642, %p643
      %p645 = scmp.ne.s32.totalorder %s637, %s639
      %p646 = scmp.eq.s32.totalorder %s89, 1
      %p647 = por %p645, %p646
      %p648 = scmp.ne.s32.totalorder %s639, %s640
      %p649 = scmp.eq.s32.totalorder %s89, 0
      %p650 = por %p648, %p649
      %p651 = scmp.ne.s32.totalorder %s639, %s640
      %p652 = scmp.eq.s32.totalorder %s90, 1
      %p653 = por %p651, %p652
      %p655 = scmp.ne.s32.totalorder %s640, %s654
      %p656 = scmp.eq.s32.totalorder %s90, 0
      %p657 = por %p655, %p656
      %s659 = sadd.s32 %s658, 1
      %p662 = scmp.eq.s32.totalorder %s84, 1
      %p663 = scmp.ne.s32.totalorder %s658, %s660
      %p664 = scmp.eq.s32.totalorder %s84, 0
      %p665 = por %p663, %p664
      %p666 = scmp.ne.s32.totalorder %s658, %s660
      %p667 = scmp.eq.s32.totalorder %s89, 1
      %p668 = por %p666, %p667
      %p669 = scmp.ne.s32.totalorder %s660, %s661
      %p670 = scmp.eq.s32.totalorder %s89, 0
      %p671 = por %p669, %p670
      %p672 = scmp.ne.s32.totalorder %s660, %s661
      %p673 = scmp.eq.s32.totalorder %s90, 1
      %p674 = por %p672, %p673
      %p676 = scmp.ne.s32.totalorder %s661, %s675
      %p677 = scmp.eq.s32.totalorder %s90, 0
      %p678 = por %p676, %p677
      %s680 = sadd.s32 %s679, 1
      %p683 = scmp.eq.s32.totalorder %s84, 1
      %p684 = scmp.ne.s32.totalorder %s679, %s681
      %p685 = scmp.eq.s32.totalorder %s84, 0
      %p686 = por %p684, %p685
      %p687 = scmp.ne.s32.totalorder %s679, %s681
      %p688 = scmp.eq.s32.totalorder %s89, 1
      %p689 = por %p687, %p688
      %p690 = scmp.ne.s32.totalorder %s681, %s682
      %p691 = scmp.eq.s32.totalorder %s89, 0
      %p692 = por %p690, %p691
      %p693 = scmp.ne.s32.totalorder %s681, %s682
      %p694 = scmp.eq.s32.totalorder %s90, 1
      %p695 = por %p693, %p694
      %p697 = scmp.ne.s32.totalorder %s682, %s696
      %p698 = scmp.eq.s32.totalorder %s90, 0
      %p699 = por %p697, %p698
      %s701 = sadd.s32 %s700, 1
      %p704 = scmp.eq.s32.totalorder %s84, 1
      %p705 = scmp.ne.s32.totalorder %s700, %s702
      %p706 = scmp.eq.s32.totalorder %s84, 0
      %p707 = por %p705, %p706
      %p708 = scmp.ne.s32.totalorder %s700, %s702
      %p709 = scmp.eq.s32.totalorder %s89, 1
      %p710 = por %p708, %p709
      %p711 = scmp.ne.s32.totalorder %s702, %s703
      %p712 = scmp.eq.s32.totalorder %s89, 0
      %p713 = por %p711, %p712
      %p714 = scmp.ne.s32.totalorder %s702, %s703
      %p715 = scmp.eq.s32.totalorder %s90, 1
      %p716 = por %p714, %p715
      %p718 = scmp.ne.s32.totalorder %s703, %s717
      %p719 = scmp.eq.s32.totalorder %s90, 0
      %p720 = por %p718, %p719
      %s722 = sadd.s32 %s721, 1
      %p725 = scmp.eq.s32.totalorder %s84, 1
      %p726 = scmp.ne.s32.totalorder %s721, %s723
      %p727 = scmp.eq.s32.totalorder %s84, 0
      %p728 = por %p726, %p727
      %p729 = scmp.ne.s32.totalorder %s721, %s723
      %p730 = scmp.eq.s32.totalorder %s89, 1
      %p731 = por %p729, %p730
      %p732 = scmp.ne.s32.totalorder %s723, %s724
      %p733 = scmp.eq.s32.totalorder %s89, 0
      %p734 = por %p732, %p733
      %p735 = scmp.ne.s32.totalorder %s723, %s724
      %p736 = scmp.eq.s32.totalorder %s90, 1
      %p737 = por %p735, %p736
      %p739 = scmp.ne.s32.totalorder %s724, %s738
      %p740 = scmp.eq.s32.totalorder %s90, 0
      %p741 = por %p739, %p740
      %s742 = ssub.s32 %s84, %s91
      %p743 = scmp.eq.s32.totalorder %s742, 0
      %s745 = sadd.s32 %s744, 1
      %s746 = scalar_select %p743, %s744, %s745
      %p749 = pneg %p743
      %p750 = scmp.eq.s32.totalorder %s84, 1
      %p751 = por %p749, %p750
      %p752 = scmp.ne.s32.totalorder %s744, %s747
      %p753 = scmp.eq.s32.totalorder %s84, 0
      %p754 = por %p752, %p753
      %p755 = scmp.ne.s32.totalorder %s744, %s747
      %p756 = scmp.eq.s32.totalorder %s89, 1
      %p757 = por %p755, %p756
      %p758 = scmp.ne.s32.totalorder %s747, %s748
      %p759 = scmp.eq.s32.totalorder %s89, 0
      %p760 = por %p758, %p759
      %p761 = scmp.ne.s32.totalorder %s747, %s748
      %p762 = scmp.eq.s32.totalorder %s90, 1
      %p763 = por %p761, %p762
      %p765 = scmp.ne.s32.totalorder %s748, %s764
      %p766 = scmp.eq.s32.totalorder %s90, 0
      %p767 = por %p765, %p766
      %p768 = scmp.le.s32.totalorder 1, %s84
      %p769 = scmp.lt.s32.totalorder %s84, 3
      %p770 = pnand %p768, %p769
      %p771 = pneg %p770
      // Predicated region
      $region9: #{tpu_custom_call.1} parent=5 // pred_check
        _
      $region10: #{tpu_custom_call.1} parent=5 // pred_check_branch
        %773 = sbr.rel (%p770) target = $region12
      $region11: #{tpu_custom_call.1} parent=5 // pred_region
        %s774 = ssub.s32 %s84, 1
        // Predicated region
        $region13: #{tpu_custom_call.1} parent=11 // pred_check
          %p775 = pneg %p209
        $region14: #{tpu_custom_call.1} parent=11 // pred_check_branch
          %777 = sbr.rel (%p775) target = $region16
        $region15: #{tpu_custom_call.1} parent=11 // pred_region
          %779 = vsyncadd [#allocation9], 0
          %s780 = sshll.u32 %s9, 4
          %s781 = int_to_ptr.hbm [resolvable:$true] %s780
          %s782 = sshll.u32 [#allocation10], 4
          %s783 = int_to_ptr.vmem [resolvable:$true] %s782
          %788 = dma.hbm_to_vmem [thread:$0]  %s781, 1024, %s783, [#allocation9], 64, 64, 4
        $region16: #{tpu_custom_call.1} parent=11 // pred_fallthru
          _
        // Predicated region
        $region17: #{tpu_custom_call.1} parent=11 // pred_check
          %p789 = pneg %p230
        $region18: #{tpu_custom_call.1} parent=11 // pred_check_branch
          %791 = sbr.rel (%p789) target = $region20
        $region19: #{tpu_custom_call.1} parent=11 // pred_region
          _
        $region20: #{tpu_custom_call.1} parent=11 // pred_fallthru
          _
        // Predicated region
        $region21: #{tpu_custom_call.1} parent=11 // pred_check
          %p792 = pneg %p251
        $region22: #{tpu_custom_call.1} parent=11 // pred_check_branch
          %794 = sbr.rel (%p792) target = $region24
        $region23: #{tpu_custom_call.1} parent=11 // pred_region
          %796 = vsyncadd [#allocation12], 0
          %s797 = sshll.u32 %s13, 4
          %s798 = int_to_ptr.hbm [resolvable:$true] %s797
          %s799 = sshll.u32 [#allocation11], 4
          %s800 = int_to_ptr.vmem [resolvable:$true] %s799
          %805 = dma.hbm_to_vmem [thread:$0]  %s798, 1024, %s800, [#allocation12], 64, 64, 4
        $region24: #{tpu_custom_call.1} parent=11 // pred_fallthru
          _
        // Predicated region
        $region25: #{tpu_custom_call.1} parent=11 // pred_check
          %p806 = pneg %p272
        $region26: #{tpu_custom_call.1} parent=11 // pred_check_branch
          %808 = sbr.rel (%p806) target = $region28
        $region27: #{tpu_custom_call.1} parent=11 // pred_region
          _
        $region28: #{tpu_custom_call.1} parent=11 // pred_fallthru
          _
        // Predicated region
        $region29: #{tpu_custom_call.1} parent=11 // pred_check
          %p809 = pneg %p293
        $region30: #{tpu_custom_call.1} parent=11 // pred_check_branch
          %811 = sbr.rel (%p809) target = $region32
        $region31: #{tpu_custom_call.1} parent=11 // pred_region
          %813 = vsyncadd [#allocation12], 0
          %s814 = sshll.u32 %s17, 4
          %s815 = int_to_ptr.hbm [resolvable:$true] %s814
          %s816 = sshll.u32 [#allocation13], 4
          %s817 = int_to_ptr.vmem [resolvable:$true] %s816
          %822 = dma.hbm_to_vmem [thread:$0]  %s815, 1024, %s817, [#allocation12], 64, 64, 4
        $region32: #{tpu_custom_call.1} parent=11 // pred_fallthru
          _
        // Predicated region
        $region33: #{tpu_custom_call.1} parent=11 // pred_check
          %p823 = pneg %p314
        $region34: #{tpu_custom_call.1} parent=11 // pred_check_branch
          %825 = sbr.rel (%p823) target = $region36
        $region35: #{tpu_custom_call.1} parent=11 // pred_region
          _
        $region36: #{tpu_custom_call.1} parent=11 // pred_fallthru
          _
        // Predicated region
        $region37: #{tpu_custom_call.1} parent=11 // pred_check
          %p826 = pneg %p335
        $region38: #{tpu_custom_call.1} parent=11 // pred_check_branch
          %828 = sbr.rel (%p826) target = $region40
        $region39: #{tpu_custom_call.1} parent=11 // pred_region
          %830 = vsyncadd [#allocation15], 0
          %s831 = sshll.u32 %s21, 4
          %s832 = int_to_ptr.hbm [resolvable:$true] %s831
          %s833 = sshll.u32 [#allocation14], 4
          %s834 = int_to_ptr.vmem [resolvable:$true] %s833
          %839 = dma.hbm_to_vmem [thread:$0]  %s832, 1024, %s834, [#allocation15], 64, 64, 4
        $region40: #{tpu_custom_call.1} parent=11 // pred_fallthru
          _
        // Predicated region
        $region41: #{tpu_custom_call.1} parent=11 // pred_check
          %p840 = pneg %p356
        $region42: #{tpu_custom_call.1} parent=11 // pred_check_branch
          %842 = sbr.rel (%p840) target = $region44
        $region43: #{tpu_custom_call.1} parent=11 // pred_region
          _
        $region44: #{tpu_custom_call.1} parent=11 // pred_fallthru
          _
        // Predicated region
        $region45: #{tpu_custom_call.1} parent=11 // pred_check
          %p843 = pneg %p377
        $region46: #{tpu_custom_call.1} parent=11 // pred_check_branch
          %845 = sbr.rel (%p843) target = $region48
        $region47: #{tpu_custom_call.1} parent=11 // pred_region
          _
        $region48: #{tpu_custom_call.1} parent=11 // pred_fallthru
          _
        // Predicated region
        $region49: #{tpu_custom_call.1} parent=11 // pred_check
          %p846 = pneg %p398
        $region50: #{tpu_custom_call.1} parent=11 // pred_check_branch
          %848 = sbr.rel (%p846) target = $region52
        $region51: #{tpu_custom_call.1} parent=11 // pred_region
          _
        $region52: #{tpu_custom_call.1} parent=11 // pred_fallthru
          _
        // Predicated region
        $region53: #{tpu_custom_call.1} parent=11 // pred_check
          %p849 = pneg %p419
        $region54: #{tpu_custom_call.1} parent=11 // pred_check_branch
          %851 = sbr.rel (%p849) target = $region56
        $region55: #{tpu_custom_call.1} parent=11 // pred_region
          %853 = vsyncadd [#allocation15], 0
          %s854 = sshll.u32 %s29, 4
          %s855 = int_to_ptr.hbm [resolvable:$true] %s854
          %s856 = sshll.u32 [#allocation16], 4
          %s857 = int_to_ptr.vmem [resolvable:$true] %s856
          %862 = dma.hbm_to_vmem [thread:$0]  %s855, 1024, %s857, [#allocation15], 64, 64, 4
        $region56: #{tpu_custom_call.1} parent=11 // pred_fallthru
          _
        // Predicated region
        $region57: #{tpu_custom_call.1} parent=11 // pred_check
          %p863 = pneg %p440
        $region58: #{tpu_custom_call.1} parent=11 // pred_check_branch
          %865 = sbr.rel (%p863) target = $region60
        $region59: #{tpu_custom_call.1} parent=11 // pred_region
          _
        $region60: #{tpu_custom_call.1} parent=11 // pred_fallthru
          _
        // Predicated region
        $region61: #{tpu_custom_call.1} parent=11 // pred_check
          %p866 = pneg %p461
        $region62: #{tpu_custom_call.1} parent=11 // pred_check_branch
          %868 = sbr.rel (%p866) target = $region64
        $region63: #{tpu_custom_call.1} parent=11 // pred_region
          %870 = vsyncadd [#allocation18], 0
          %s871 = sshll.u32 %s33, 4
          %s872 = int_to_ptr.hbm [resolvable:$true] %s871
          %s873 = sshll.u32 [#allocation17], 4
          %s874 = int_to_ptr.vmem [resolvable:$true] %s873
          %879 = dma.hbm_to_vmem [thread:$0]  %s872, 1024, %s874, [#allocation18], 64, 64, 4
        $region64: #{tpu_custom_call.1} parent=11 // pred_fallthru
          _
        // Predicated region
        $region65: #{tpu_custom_call.1} parent=11 // pred_check
          %p880 = pneg %p482
        $region66: #{tpu_custom_call.1} parent=11 // pred_check_branch
          %882 = sbr.rel (%p880) target = $region68
        $region67: #{tpu_custom_call.1} parent=11 // pred_region
          _
        $region68: #{tpu_custom_call.1} parent=11 // pred_fallthru
          _
        // Predicated region
        $region69: #{tpu_custom_call.1} parent=11 // pred_check
          %p883 = pneg %p503
        $region70: #{tpu_custom_call.1} parent=11 // pred_check_branch
          %885 = sbr.rel (%p883) target = $region72
        $region71: #{tpu_custom_call.1} parent=11 // pred_region
          %887 = vsyncadd [#allocation18], 0
          %s888 = sshll.u32 %s37, 4
          %s889 = int_to_ptr.hbm [resolvable:$true] %s888
          %s890 = sshll.u32 [#allocation19], 4
          %s891 = int_to_ptr.vmem [resolvable:$true] %s890
          %896 = dma.hbm_to_vmem [thread:$0]  %s889, 1024, %s891, [#allocation18], 64, 64, 4
        $region72: #{tpu_custom_call.1} parent=11 // pred_fallthru
          _
        // Predicated region
        $region73: #{tpu_custom_call.1} parent=11 // pred_check
          %p897 = pneg %p524
        $region74: #{tpu_custom_call.1} parent=11 // pred_check_branch
          %899 = sbr.rel (%p897) target = $region76
        $region75: #{tpu_custom_call.1} parent=11 // pred_region
          _
        $region76: #{tpu_custom_call.1} parent=11 // pred_fallthru
          _
        // Predicated region
        $region77: #{tpu_custom_call.1} parent=11 // pred_check
          %p900 = pneg %p545
        $region78: #{tpu_custom_call.1} parent=11 // pred_check_branch
          %902 = sbr.rel (%p900) target = $region80
        $region79: #{tpu_custom_call.1} parent=11 // pred_region
          %904 = vsyncadd [#allocation21], 0
          %s905 = sshll.u32 %s41, 4
          %s906 = int_to_ptr.hbm [resolvable:$true] %s905
          %s907 = sshll.u32 [#allocation20], 4
          %s908 = int_to_ptr.vmem [resolvable:$true] %s907
          %913 = dma.hbm_to_vmem [thread:$0]  %s906, 1024, %s908, [#allocation21], 64, 64, 4
        $region80: #{tpu_custom_call.1} parent=11 // pred_fallthru
          _
        // Predicated region
        $region81: #{tpu_custom_call.1} parent=11 // pred_check
          %p914 = pneg %p566
        $region82: #{tpu_custom_call.1} parent=11 // pred_check_branch
          %916 = sbr.rel (%p914) target = $region84
        $region83: #{tpu_custom_call.1} parent=11 // pred_region
          _
        $region84: #{tpu_custom_call.1} parent=11 // pred_fallthru
          _
        // Predicated region
        $region85: #{tpu_custom_call.1} parent=11 // pred_check
          %p917 = pneg %p587
        $region86: #{tpu_custom_call.1} parent=11 // pred_check_branch
          %919 = sbr.rel (%p917) target = $region88
        $region87: #{tpu_custom_call.1} parent=11 // pred_region
          _
        $region88: #{tpu_custom_call.1} parent=11 // pred_fallthru
          _
        // Predicated region
        $region89: #{tpu_custom_call.1} parent=11 // pred_check
          %p920 = pneg %p608
        $region90: #{tpu_custom_call.1} parent=11 // pred_check_branch
          %922 = sbr.rel (%p920) target = $region92
        $region91: #{tpu_custom_call.1} parent=11 // pred_region
          _
        $region92: #{tpu_custom_call.1} parent=11 // pred_fallthru
          _
        // Predicated region
        $region93: #{tpu_custom_call.1} parent=11 // pred_check
          %p923 = pneg %p629
        $region94: #{tpu_custom_call.1} parent=11 // pred_check_branch
          %925 = sbr.rel (%p923) target = $region96
        $region95: #{tpu_custom_call.1} parent=11 // pred_region
          %927 = vsyncadd [#allocation21], 0
          %s928 = sshll.u32 %s49, 4
          %s929 = int_to_ptr.hbm [resolvable:$true] %s928
          %s930 = sshll.u32 [#allocation22], 4
          %s931 = int_to_ptr.vmem [resolvable:$true] %s930
          %936 = dma.hbm_to_vmem [thread:$0]  %s929, 2048, %s931, [#allocation21], 128, 128, 8
        $region96: #{tpu_custom_call.1} parent=11 // pred_fallthru
          _
        // Predicated region
        $region97: #{tpu_custom_call.1} parent=11 // pred_check
          %p937 = pneg %p650
        $region98: #{tpu_custom_call.1} parent=11 // pred_check_branch
          %939 = sbr.rel (%p937) target = $region100
        $region99: #{tpu_custom_call.1} parent=11 // pred_region
          _
        $region100: #{tpu_custom_call.1} parent=11 // pred_fallthru
          _
        // Predicated region
        $region101: #{tpu_custom_call.1} parent=11 // pred_check
          %p940 = pneg %p671
        $region102: #{tpu_custom_call.1} parent=11 // pred_check_branch
          %942 = sbr.rel (%p940) target = $region104
        $region103: #{tpu_custom_call.1} parent=11 // pred_region
          %944 = vsyncadd [#allocation24], 0
          %s945 = sshll.u32 %s53, 4
          %s946 = int_to_ptr.hbm [resolvable:$true] %s945
          %s947 = sshll.u32 [#allocation23], 4
          %s948 = int_to_ptr.vmem [resolvable:$true] %s947
          %953 = dma.hbm_to_vmem [thread:$0]  %s946, 2048, %s948, [#allocation24], 64, 64, 4
        $region104: #{tpu_custom_call.1} parent=11 // pred_fallthru
          _
        // Predicated region
        $region105: #{tpu_custom_call.1} parent=11 // pred_check
          %p954 = pneg %p692
        $region106: #{tpu_custom_call.1} parent=11 // pred_check_branch
          %956 = sbr.rel (%p954) target = $region108
        $region107: #{tpu_custom_call.1} parent=11 // pred_region
          _
        $region108: #{tpu_custom_call.1} parent=11 // pred_fallthru
          _
        // Predicated region
        $region109: #{tpu_custom_call.1} parent=11 // pred_check
          %p957 = pneg %p713
        $region110: #{tpu_custom_call.1} parent=11 // pred_check_branch
          %959 = sbr.rel (%p957) target = $region112
        $region111: #{tpu_custom_call.1} parent=11 // pred_region
          _
        $region112: #{tpu_custom_call.1} parent=11 // pred_fallthru
          _
        // Predicated region
        $region113: #{tpu_custom_call.1} parent=11 // pred_check
          %p960 = pneg %p734
        $region114: #{tpu_custom_call.1} parent=11 // pred_check_branch
          %962 = sbr.rel (%p960) target = $region116
        $region115: #{tpu_custom_call.1} parent=11 // pred_region
          _
        $region116: #{tpu_custom_call.1} parent=11 // pred_fallthru
          _
      $region12: #{tpu_custom_call.1} parent=5 // pred_fallthru
        _
      %p963 = scmp.lt.s32.totalorder %s84, 2
      // Predicated region
      $region117: #{tpu_custom_call.1} parent=5 // pred_check
        %p964 = pneg %p963
      $region118: #{tpu_custom_call.1} parent=5 // pred_check_branch
        %966 = sbr.rel (%p964) target = $region120
      $region119: #{tpu_custom_call.1} parent=5 // pred_region
        // Predicated region
        $region121: #{tpu_custom_call.1} parent=119 // pred_check
          %p967 = pneg %p104
        $region122: #{tpu_custom_call.1} parent=119 // pred_check_branch
          %969 = sbr.rel (%p967) target = $region124
        $region123: #{tpu_custom_call.1} parent=119 // pred_region
          %s970 = sand.u32 %s94, 1
          %s971 = scalar_lea.sflag [#allocation3], %s970
          %s972 = sand.u32 %s94, 1
          %s973 = smul.addr %s972, 8
          %s974 = scalar_lea.vmem [#allocation2], %s973
          %976 = vsyncadd %s971, 0
          %s977 = smul.addr %s84, 8
          %s978 = scalar_lea.hbm %s1, %s977
          %s980 = sshll.u32 %s978, 4
          %s981 = int_to_ptr.hbm [resolvable:$true] %s980
          %s982 = sshll.u32 %s974, 4
          %s983 = int_to_ptr.vmem [resolvable:$true] %s982
          %985 = dma.hbm_to_vmem [thread:$0]  %s981, 128, %s983, %s971
        $region124: #{tpu_custom_call.1} parent=119 // pred_fallthru
          _
        // Predicated region
        $region125: #{tpu_custom_call.1} parent=119 // pred_check
          %p986 = pneg %p130
        $region126: #{tpu_custom_call.1} parent=119 // pred_check_branch
          %988 = sbr.rel (%p986) target = $region128
        $region127: #{tpu_custom_call.1} parent=119 // pred_region
          %s989 = sand.u32 %s84, 1
          %s990 = scalar_lea.sflag [#allocation6], %s989
          %s991 = sand.u32 %s120, 1
          %s992 = smul.addr %s991, 16
          %s993 = scalar_lea.vmem [#allocation5], %s992
          %995 = vsyncadd %s990, 0
          %s996 = smul.addr %s84, 2
          %s997 = smul.addr %s996, 8
          %s998 = scalar_lea.hbm %s3, %s997
          %s999 = sshll.u32 %s998, 4
          %s1000 = int_to_ptr.hbm [resolvable:$true] %s999
          %s1001 = sshll.u32 %s993, 4
          %s1002 = int_to_ptr.vmem [resolvable:$true] %s1001
          %1007 = dma.hbm_to_vmem [thread:$0]  %s1000, 256, %s1002, %s990, 128, 128, 8
        $region128: #{tpu_custom_call.1} parent=119 // pred_fallthru
          _
        // Predicated region
        $region129: #{tpu_custom_call.1} parent=119 // pred_check
          %p1008 = pneg %p156
        $region130: #{tpu_custom_call.1} parent=119 // pred_check_branch
          %1010 = sbr.rel (%p1008) target = $region132
        $region131: #{tpu_custom_call.1} parent=119 // pred_region
          %s1011 = sand.u32 %s84, 1
          %s1012 = scalar_lea.sflag [#allocation6], %s1011
          %s1013 = sand.u32 %s146, 1
          %s1014 = smul.addr %s1013, 4
          %s1015 = scalar_lea.vmem [#allocation7], %s1014
          %1017 = vsyncadd %s1012, 0
          %s1018 = smul.addr %s84, 4
          %s1019 = scalar_lea.hbm %s5, %s1018
          %s1021 = sshll.u32 %s1019, 4
          %s1022 = int_to_ptr.hbm [resolvable:$true] %s1021
          %s1023 = sshll.u32 %s1015, 4
          %s1024 = int_to_ptr.vmem [resolvable:$true] %s1023
          %1026 = dma.hbm_to_vmem [thread:$0]  %s1022, 64, %s1024, %s1012
        $region132: #{tpu_custom_call.1} parent=119 // pred_fallthru
          _
        // Predicated region
        $region133: #{tpu_custom_call.1} parent=119 // pred_check
          %p1027 = pneg %p182
        $region134: #{tpu_custom_call.1} parent=119 // pred_check_branch
          %1029 = sbr.rel (%p1027) target = $region136
        $region135: #{tpu_custom_call.1} parent=119 // pred_region
          %s1030 = sand.u32 %s84, 1
          %s1031 = scalar_lea.sflag [#allocation9], %s1030
          %s1032 = sand.u32 %s172, 1
          %s1033 = smul.addr %s1032, 4
          %s1034 = scalar_lea.vmem [#allocation8], %s1033
          %1036 = vsyncadd %s1031, 0
          %s1037 = smul.addr %s84, 4
          %s1038 = scalar_lea.hbm %s7, %s1037
          %s1040 = sshll.u32 %s1038, 4
          %s1041 = int_to_ptr.hbm [resolvable:$true] %s1040
          %s1042 = sshll.u32 %s1034, 4
          %s1043 = int_to_ptr.vmem [resolvable:$true] %s1042
          %1045 = dma.hbm_to_vmem [thread:$0]  %s1041, 64, %s1043, %s1031
        $region136: #{tpu_custom_call.1} parent=119 // pred_fallthru
          _
      $region120: #{tpu_custom_call.1} parent=5 // pred_fallthru
        _
      %p1046 = scmp.le.s32.totalorder 1, %s84
      %p1047 = scmp.lt.s32.totalorder %s84, 3
      %p1048 = pnand %p1046, %p1047
      %p1049 = pneg %p1048
      // Predicated region
      $region137: #{tpu_custom_call.1} parent=5 // pred_check
        _
      $region138: #{tpu_custom_call.1} parent=5 // pred_check_branch
        %1051 = sbr.rel (%p1048) target = $region140
      $region139: #{tpu_custom_call.1} parent=5 // pred_region
        %s1052 = ssub.s32 %s84, 1
        %s1053 = sand.u32 %s97, 1
        %s1054 = scalar_lea.sflag [#allocation3], %s1053
        %s1055 = sand.u32 %s97, 1
        %s1056 = smul.addr %s1055, 8
        %s1057 = scalar_lea.vmem [#allocation2], %s1056
        // Predicated region
        $region141: #{tpu_custom_call.1} parent=139 // pred_check
          %p1058 = pneg %p110
        $region142: #{tpu_custom_call.1} parent=139 // pred_check_branch
          %1060 = sbr.rel (%p1058) target = $region144
        $region143: #{tpu_custom_call.1} parent=139 // pred_region
          %1062 = dma.done %s1054, 128
        $region144: #{tpu_custom_call.1} parent=139 // pred_fallthru
          _
        %s1063 = sand.u32 %s89, 1
        %s1064 = scalar_lea.sflag [#allocation6], %s1063
        %s1065 = sand.u32 %s123, 1
        %s1066 = smul.addr %s1065, 16
        %s1067 = scalar_lea.vmem [#allocation5], %s1066
        // Predicated region
        $region145: #{tpu_custom_call.1} parent=139 // pred_check
          %p1068 = pneg %p136
        $region146: #{tpu_custom_call.1} parent=139 // pred_check_branch
          %1070 = sbr.rel (%p1068) target = $region148
        $region147: #{tpu_custom_call.1} parent=139 // pred_region
          %1072 = dma.done %s1064, 256
        $region148: #{tpu_custom_call.1} parent=139 // pred_fallthru
          _
        %s1073 = sand.u32 %s89, 1
        %s1074 = scalar_lea.sflag [#allocation6], %s1073
        %s1075 = sand.u32 %s149, 1
        %s1076 = smul.addr %s1075, 4
        %s1077 = scalar_lea.vmem [#allocation7], %s1076
        // Predicated region
        $region149: #{tpu_custom_call.1} parent=139 // pred_check
          %p1078 = pneg %p162
        $region150: #{tpu_custom_call.1} parent=139 // pred_check_branch
          %1080 = sbr.rel (%p1078) target = $region152
        $region151: #{tpu_custom_call.1} parent=139 // pred_region
          %1082 = dma.done %s1074, 64
        $region152: #{tpu_custom_call.1} parent=139 // pred_fallthru
          _
        %s1083 = sand.u32 %s89, 1
        %s1084 = scalar_lea.sflag [#allocation9], %s1083
        %s1085 = sand.u32 %s175, 1
        %s1086 = smul.addr %s1085, 4
        %s1087 = scalar_lea.vmem [#allocation8], %s1086
        // Predicated region
        $region153: #{tpu_custom_call.1} parent=139 // pred_check
          %p1088 = pneg %p188
        $region154: #{tpu_custom_call.1} parent=139 // pred_check_branch
          %1090 = sbr.rel (%p1088) target = $region156
        $region155: #{tpu_custom_call.1} parent=139 // pred_region
          %1092 = dma.done %s1084, 64
        $region156: #{tpu_custom_call.1} parent=139 // pred_fallthru
          _
        // Predicated region
        $region157: #{tpu_custom_call.1} parent=139 // pred_check
          %p1093 = pneg %p209
        $region158: #{tpu_custom_call.1} parent=139 // pred_check_branch
          %1095 = sbr.rel (%p1093) target = $region160
        $region159: #{tpu_custom_call.1} parent=139 // pred_region
          %1097 = dma.done [#allocation9], 1024
        $region160: #{tpu_custom_call.1} parent=139 // pred_fallthru
          _
        // Predicated region
        $region161: #{tpu_custom_call.1} parent=139 // pred_check
          %p1098 = pneg %p251
        $region162: #{tpu_custom_call.1} parent=139 // pred_check_branch
          %1100 = sbr.rel (%p1098) target = $region164
        $region163: #{tpu_custom_call.1} parent=139 // pred_region
          %1102 = dma.done [#allocation12], 1024
        $region164: #{tpu_custom_call.1} parent=139 // pred_fallthru
          _
        // Predicated region
        $region165: #{tpu_custom_call.1} parent=139 // pred_check
          %p1103 = pneg %p293
        $region166: #{tpu_custom_call.1} parent=139 // pred_check_branch
          %1105 = sbr.rel (%p1103) target = $region168
        $region167: #{tpu_custom_call.1} parent=139 // pred_region
          %1107 = dma.done [#allocation12], 1024
        $region168: #{tpu_custom_call.1} parent=139 // pred_fallthru
          _
        // Predicated region
        $region169: #{tpu_custom_call.1} parent=139 // pred_check
          %p1108 = pneg %p335
        $region170: #{tpu_custom_call.1} parent=139 // pred_check_branch
          %1110 = sbr.rel (%p1108) target = $region172
        $region171: #{tpu_custom_call.1} parent=139 // pred_region
          %1112 = dma.done [#allocation15], 1024
        $region172: #{tpu_custom_call.1} parent=139 // pred_fallthru
          _
        // Predicated region
        $region173: #{tpu_custom_call.1} parent=139 // pred_check
          %p1113 = pneg %p419
        $region174: #{tpu_custom_call.1} parent=139 // pred_check_branch
          %1115 = sbr.rel (%p1113) target = $region176
        $region175: #{tpu_custom_call.1} parent=139 // pred_region
          %1117 = dma.done [#allocation15], 1024
        $region176: #{tpu_custom_call.1} parent=139 // pred_fallthru
          _
        // Predicated region
        $region177: #{tpu_custom_call.1} parent=139 // pred_check
          %p1118 = pneg %p461
        $region178: #{tpu_custom_call.1} parent=139 // pred_check_branch
          %1120 = sbr.rel (%p1118) target = $region180
        $region179: #{tpu_custom_call.1} parent=139 // pred_region
          %1122 = dma.done [#allocation18], 1024
        $region180: #{tpu_custom_call.1} parent=139 // pred_fallthru
          _
        // Predicated region
        $region181: #{tpu_custom_call.1} parent=139 // pred_check
          %p1123 = pneg %p503
        $region182: #{tpu_custom_call.1} parent=139 // pred_check_branch
          %1125 = sbr.rel (%p1123) target = $region184
        $region183: #{tpu_custom_call.1} parent=139 // pred_region
          %1127 = dma.done [#allocation18], 1024
        $region184: #{tpu_custom_call.1} parent=139 // pred_fallthru
          _
        // Predicated region
        $region185: #{tpu_custom_call.1} parent=139 // pred_check
          %p1128 = pneg %p545
        $region186: #{tpu_custom_call.1} parent=139 // pred_check_branch
          %1130 = sbr.rel (%p1128) target = $region188
        $region187: #{tpu_custom_call.1} parent=139 // pred_region
          %1132 = dma.done [#allocation21], 1024
        $region188: #{tpu_custom_call.1} parent=139 // pred_fallthru
          _
        // Predicated region
        $region189: #{tpu_custom_call.1} parent=139 // pred_check
          %p1133 = pneg %p629
        $region190: #{tpu_custom_call.1} parent=139 // pred_check_branch
          %1135 = sbr.rel (%p1133) target = $region192
        $region191: #{tpu_custom_call.1} parent=139 // pred_region
          %1137 = dma.done [#allocation21], 2048
        $region192: #{tpu_custom_call.1} parent=139 // pred_fallthru
          _
        // Predicated region
        $region193: #{tpu_custom_call.1} parent=139 // pred_check
          %p1138 = pneg %p671
        $region194: #{tpu_custom_call.1} parent=139 // pred_check_branch
          %1140 = sbr.rel (%p1138) target = $region196
        $region195: #{tpu_custom_call.1} parent=139 // pred_region
          %1142 = dma.done [#allocation24], 2048
        $region196: #{tpu_custom_call.1} parent=139 // pred_fallthru
          _
        %s1143 = sand.u32 %s97, 1
        %s1144 = scalar_lea.sflag [#allocation3], %s1143
        %s1145 = sand.u32 %s97, 1
        %s1146 = smul.addr %s1145, 8
        %s1147 = scalar_lea.vmem [#allocation2], %s1146
        %p1148 = pneg %p110
        %p1149 = pneg %p107
        %s1150 = sand.u32 %s89, 1
        %s1151 = scalar_lea.sflag [#allocation6], %s1150
        %s1152 = sand.u32 %s123, 1
        %s1153 = smul.addr %s1152, 16
        %s1154 = scalar_lea.vmem [#allocation5], %s1153
        %p1155 = pneg %p136
        %p1156 = pneg %p133
        %s1157 = sand.u32 %s89, 1
        %s1158 = scalar_lea.sflag [#allocation6], %s1157
        %s1159 = sand.u32 %s149, 1
        %s1160 = smul.addr %s1159, 4
        %s1161 = scalar_lea.vmem [#allocation7], %s1160
        %p1162 = pneg %p162
        %p1163 = pneg %p159
        %s1164 = sand.u32 %s89, 1
        %s1165 = scalar_lea.sflag [#allocation9], %s1164
        %s1166 = sand.u32 %s175, 1
        %s1167 = smul.addr %s1166, 4
        %s1168 = scalar_lea.vmem [#allocation8], %s1167
        %p1169 = pneg %p188
        %p1170 = pneg %p185
        %p1171 = pneg %p209
        %p1172 = pneg %p206
        %p1173 = pneg %p230
        %p1174 = pneg %p227
        %p1175 = pneg %p251
        %p1176 = pneg %p248
        %p1177 = pneg %p272
        %p1178 = pneg %p269
        %p1179 = pneg %p293
        %p1180 = pneg %p290
        %p1181 = pneg %p314
        %p1182 = pneg %p311
        %p1183 = pneg %p335
        %p1184 = pneg %p332
        %p1185 = pneg %p356
        %p1186 = pneg %p353
        %p1187 = pneg %p377
        %p1188 = pneg %p374
        %p1189 = pneg %p398
        %p1190 = pneg %p395
        %p1191 = pneg %p419
        %p1192 = pneg %p416
        %p1193 = pneg %p440
        %p1194 = pneg %p437
        %p1195 = pneg %p461
        %p1196 = pneg %p458
        %p1197 = pneg %p482
        %p1198 = pneg %p479
        %p1199 = pneg %p503
        %p1200 = pneg %p500
        %p1201 = pneg %p524
        %p1202 = pneg %p521
        %p1203 = pneg %p545
        %p1204 = pneg %p542
        %p1205 = pneg %p566
        %p1206 = pneg %p563
        %p1207 = pneg %p587
        %p1208 = pneg %p584
        %p1209 = pneg %p608
        %p1210 = pneg %p605
        %p1211 = pneg %p629
        %p1212 = pneg %p626
        %p1213 = pneg %p650
        %p1214 = pneg %p647
        %p1215 = pneg %p671
        %p1216 = pneg %p668
        %p1217 = pneg %p692
        %p1218 = pneg %p689
        %p1219 = pneg %p713
        %p1220 = pneg %p710
        %p1221 = pneg %p734
        %p1222 = pneg %p731
        %p1223 = pneg %p760
        %p1224 = pneg %p757
        %s1225 = sand.u32 %s747, 1
        %s1226 = scalar_lea.sflag [#allocation4], %s1225
        %s1227 = sand.u32 %s747, 1
        %s1228 = smul.addr %s1227, 8
        %s1229 = scalar_lea.vmem [#allocation25], %s1228
        %v1231 = vld [vmem:[%s1057] sm:$0xff]
        %v1232 = vld [vmem:[%s1067] sm:$0xff]
        %v1233 = vld [vmem:[%s1067 + $0x8] sm:$0xff]
        %v1234 = vld [vmem:[%s1077] sm:$0xf]
        %v1235 = vunpack.c.l.bf16 %v1234
        %v1236 = vld [vmem:[%s1087] sm:$0xf]
        %v1237 = vunpack.c.l.bf16 %v1236
        %v1238 = vld [vmem:[#allocation10] sm:$0xf]
        %v1239 = vld [vmem:[#allocation10 + $0x4] sm:$0xf]
        %v1240 = vld [vmem:[#allocation10 + $0x8] sm:$0xf]
        %v1241 = vld [vmem:[#allocation10 + $0xc] sm:$0xf]
        %v1242 = vld [vmem:[#allocation10 + $0x10] sm:$0xf]
        %v1243 = vld [vmem:[#allocation10 + $0x14] sm:$0xf]
        %v1244 = vld [vmem:[#allocation10 + $0x18] sm:$0xf]
        %v1245 = vld [vmem:[#allocation10 + $0x1c] sm:$0xf]
        %v1246 = vld [vmem:[#allocation10 + $0x20] sm:$0xf]
        %v1247 = vld [vmem:[#allocation10 + $0x24] sm:$0xf]
        %v1248 = vld [vmem:[#allocation10 + $0x28] sm:$0xf]
        %v1249 = vld [vmem:[#allocation10 + $0x2c] sm:$0xf]
        %v1250 = vld [vmem:[#allocation10 + $0x30] sm:$0xf]
        %v1251 = vld [vmem:[#allocation10 + $0x34] sm:$0xf]
        %v1252 = vld [vmem:[#allocation10 + $0x38] sm:$0xf]
        %v1253 = vld [vmem:[#allocation10 + $0x3c] sm:$0xf]
        %v1254 = vld [vmem:[%s11] sm:$0x1]
        %v1255 = vld [vmem:[#allocation11] sm:$0xf]
        %v1256 = vld [vmem:[#allocation11 + $0x4] sm:$0xf]
        %v1257 = vld [vmem:[#allocation11 + $0x8] sm:$0xf]
        %v1258 = vld [vmem:[#allocation11 + $0xc] sm:$0xf]
        %v1259 = vld [vmem:[#allocation11 + $0x10] sm:$0xf]
        %v1260 = vld [vmem:[#allocation11 + $0x14] sm:$0xf]
        %v1261 = vld [vmem:[#allocation11 + $0x18] sm:$0xf]
        %v1262 = vld [vmem:[#allocation11 + $0x1c] sm:$0xf]
        %v1263 = vld [vmem:[#allocation11 + $0x20] sm:$0xf]
        %v1264 = vld [vmem:[#allocation11 + $0x24] sm:$0xf]
        %v1265 = vld [vmem:[#allocation11 + $0x28] sm:$0xf]
        %v1266 = vld [vmem:[#allocation11 + $0x2c] sm:$0xf]
        %v1267 = vld [vmem:[#allocation11 + $0x30] sm:$0xf]
        %v1268 = vld [vmem:[#allocation11 + $0x34] sm:$0xf]
        %v1269 = vld [vmem:[#allocation11 + $0x38] sm:$0xf]
        %v1270 = vld [vmem:[#allocation11 + $0x3c] sm:$0xf]
        %v1271 = vld [vmem:[%s15] sm:$0x1]
        %v1272 = vld [vmem:[#allocation13] sm:$0xf]
        %v1273 = vld [vmem:[#allocation13 + $0x4] sm:$0xf]
        %v1274 = vld [vmem:[#allocation13 + $0x8] sm:$0xf]
        %v1275 = vld [vmem:[#allocation13 + $0xc] sm:$0xf]
        %v1276 = vld [vmem:[#allocation13 + $0x10] sm:$0xf]
        %v1277 = vld [vmem:[#allocation13 + $0x14] sm:$0xf]
        %v1278 = vld [vmem:[#allocation13 + $0x18] sm:$0xf]
        %v1279 = vld [vmem:[#allocation13 + $0x1c] sm:$0xf]
        %v1280 = vld [vmem:[#allocation13 + $0x20] sm:$0xf]
        %v1281 = vld [vmem:[#allocation13 + $0x24] sm:$0xf]
        %v1282 = vld [vmem:[#allocation13 + $0x28] sm:$0xf]
        %v1283 = vld [vmem:[#allocation13 + $0x2c] sm:$0xf]
        %v1284 = vld [vmem:[#allocation13 + $0x30] sm:$0xf]
        %v1285 = vld [vmem:[#allocation13 + $0x34] sm:$0xf]
        %v1286 = vld [vmem:[#allocation13 + $0x38] sm:$0xf]
        %v1287 = vld [vmem:[#allocation13 + $0x3c] sm:$0xf]
        %v1288 = vld [vmem:[%s19] sm:$0x1]
        %v1289 = vld [vmem:[#allocation14] sm:$0xf]
        %v1290 = vld [vmem:[#allocation14 + $0x4] sm:$0xf]
        %v1291 = vld [vmem:[#allocation14 + $0x8] sm:$0xf]
        %v1292 = vld [vmem:[#allocation14 + $0xc] sm:$0xf]
        %v1293 = vld [vmem:[#allocation14 + $0x10] sm:$0xf]
        %v1294 = vld [vmem:[#allocation14 + $0x14] sm:$0xf]
        %v1295 = vld [vmem:[#allocation14 + $0x18] sm:$0xf]
        %v1296 = vld [vmem:[#allocation14 + $0x1c] sm:$0xf]
        %v1297 = vld [vmem:[#allocation14 + $0x20] sm:$0xf]
        %v1298 = vld [vmem:[#allocation14 + $0x24] sm:$0xf]
        %v1299 = vld [vmem:[#allocation14 + $0x28] sm:$0xf]
        %v1300 = vld [vmem:[#allocation14 + $0x2c] sm:$0xf]
        %v1301 = vld [vmem:[#allocation14 + $0x30] sm:$0xf]
        %v1302 = vld [vmem:[#allocation14 + $0x34] sm:$0xf]
        %v1303 = vld [vmem:[#allocation14 + $0x38] sm:$0xf]
        %v1304 = vld [vmem:[#allocation14 + $0x3c] sm:$0xf]
        %v1305 = vld [vmem:[%s23] sm:$0x1]
        %v1306 = vpack.c.bf16 %v1231, %v1231
        %v1308 = vperm.slane %v1254, 0
        %v1326 = vunpack.c.l.b16 %v1238
        %v1327 = vunpack.c.l.b16 %v1239
        %v1328 = vunpack.c.l.b16 %v1240
        %v1329 = vunpack.c.l.b16 %v1241
        %v1330 = vunpack.c.l.b16 %v1242
        %v1331 = vunpack.c.l.b16 %v1243
        %v1332 = vunpack.c.l.b16 %v1244
        %v1333 = vunpack.c.l.b16 %v1245
        %v1334 = vunpack.c.l.b16 %v1246
        %v1335 = vunpack.c.l.b16 %v1247
        %v1336 = vunpack.c.l.b16 %v1248
        %v1337 = vunpack.c.l.b16 %v1249
        %v1338 = vunpack.c.l.b16 %v1250
        %v1339 = vunpack.c.l.b16 %v1251
        %v1340 = vunpack.c.l.b16 %v1252
        %v1341 = vunpack.c.l.b16 %v1253
        %v1342 = vpack.c.b16 %v1327, %v1326
        %v1343 = vpack.c.b16 %v1329, %v1328
        %v1344 = vpack.c.b16 %v1331, %v1330
        %v1345 = vpack.c.b16 %v1333, %v1332
        %v1346 = vpack.c.b16 %v1335, %v1334
        %v1347 = vpack.c.b16 %v1337, %v1336
        %v1348 = vpack.c.b16 %v1339, %v1338
        %v1349 = vpack.c.b16 %v1341, %v1340
        %1358 = vmatpush.bf16.msra.mxu0 %v1349
        %1359 = vmatpush.bf16.msra.mxu0 %v1348
        %1360 = vmatpush.bf16.msra.mxu0 %v1347
        %1361 = vmatpush.bf16.msra.mxu0 %v1346
        %1362 = vmatpush.bf16.msra.mxu0 %v1345
        %1363 = vmatpush.bf16.msra.mxu0 %v1344
        %1364 = vmatpush.bf16.msra.mxu0 %v1343
        %1365 = vmatpush.bf16.msra.mxu0 %v1342
        %1366 = vmatmul.bf16.gmra.mxu0 %v1306
        %v1367 = vpop.f32.mrf.mxu0
        %v1368 = vadd.f32 %v1308, %v1367
        %v1369 = vpop.f32.mrf.mxu0
        %1370 = vdwg.mxu0
        %v1371 = vmul.f32 %v1368, 0.17677669
        %v1373 = vperm.slane %v1271, 0
        %v1391 = vunpack.c.l.b16 %v1255
        %v1392 = vunpack.c.l.b16 %v1256
        %v1393 = vunpack.c.l.b16 %v1257
        %v1394 = vunpack.c.l.b16 %v1258
        %v1395 = vunpack.c.l.b16 %v1259
        %v1396 = vunpack.c.l.b16 %v1260
        %v1397 = vunpack.c.l.b16 %v1261
        %v1398 = vunpack.c.l.b16 %v1262
        %v1399 = vunpack.c.l.b16 %v1263
        %v1400 = vunpack.c.l.b16 %v1264
        %v1401 = vunpack.c.l.b16 %v1265
        %v1402 = vunpack.c.l.b16 %v1266
        %v1403 = vunpack.c.l.b16 %v1267
        %v1404 = vunpack.c.l.b16 %v1268
        %v1405 = vunpack.c.l.b16 %v1269
        %v1406 = vunpack.c.l.b16 %v1270
        %v1407 = vpack.c.b16 %v1392, %v1391
        %v1408 = vpack.c.b16 %v1394, %v1393
        %v1409 = vpack.c.b16 %v1396, %v1395
        %v1410 = vpack.c.b16 %v1398, %v1397
        %v1411 = vpack.c.b16 %v1400, %v1399
        %v1412 = vpack.c.b16 %v1402, %v1401
        %v1413 = vpack.c.b16 %v1404, %v1403
        %v1414 = vpack.c.b16 %v1406, %v1405
        %1423 = vmatpush.bf16.msra.mxu0 %v1414
        %1424 = vmatpush.bf16.msra.mxu0 %v1413
        %1425 = vmatpush.bf16.msra.mxu0 %v1412
        %1426 = vmatpush.bf16.msra.mxu0 %v1411
        %1427 = vmatpush.bf16.msra.mxu0 %v1410
        %1428 = vmatpush.bf16.msra.mxu0 %v1409
        %1429 = vmatpush.bf16.msra.mxu0 %v1408
        %1430 = vmatpush.bf16.msra.mxu0 %v1407
        %1431 = vmatmul.bf16.gmra.mxu0 %v1306
        %v1432 = vpop.f32.mrf.mxu0
        %v1433 = vadd.f32 %v1373, %v1432
        %v1434 = vpop.f32.mrf.mxu0
        %1435 = vdwg.mxu0
        %v1437 = vperm.slane %v1288, 0
        %v1455 = vunpack.c.l.b16 %v1272
        %v1456 = vunpack.c.l.b16 %v1273
        %v1457 = vunpack.c.l.b16 %v1274
        %v1458 = vunpack.c.l.b16 %v1275
        %v1459 = vunpack.c.l.b16 %v1276
        %v1460 = vunpack.c.l.b16 %v1277
        %v1461 = vunpack.c.l.b16 %v1278
        %v1462 = vunpack.c.l.b16 %v1279
        %v1463 = vunpack.c.l.b16 %v1280
        %v1464 = vunpack.c.l.b16 %v1281
        %v1465 = vunpack.c.l.b16 %v1282
        %v1466 = vunpack.c.l.b16 %v1283
        %v1467 = vunpack.c.l.b16 %v1284
        %v1468 = vunpack.c.l.b16 %v1285
        %v1469 = vunpack.c.l.b16 %v1286
        %v1470 = vunpack.c.l.b16 %v1287
        %v1471 = vpack.c.b16 %v1456, %v1455
        %v1472 = vpack.c.b16 %v1458, %v1457
        %v1473 = vpack.c.b16 %v1460, %v1459
        %v1474 = vpack.c.b16 %v1462, %v1461
        %v1475 = vpack.c.b16 %v1464, %v1463
        %v1476 = vpack.c.b16 %v1466, %v1465
        %v1477 = vpack.c.b16 %v1468, %v1467
        %v1478 = vpack.c.b16 %v1470, %v1469
        %1487 = vmatpush.bf16.msra.mxu0 %v1478
        %1488 = vmatpush.bf16.msra.mxu0 %v1477
        %1489 = vmatpush.bf16.msra.mxu0 %v1476
        %1490 = vmatpush.bf16.msra.mxu0 %v1475
        %1491 = vmatpush.bf16.msra.mxu0 %v1474
        %1492 = vmatpush.bf16.msra.mxu0 %v1473
        %1493 = vmatpush.bf16.msra.mxu0 %v1472
        %1494 = vmatpush.bf16.msra.mxu0 %v1471
        %1495 = vmatmul.bf16.gmra.mxu0 %v1306
        %v1496 = vpop.f32.mrf.mxu0
        %v1497 = vadd.f32 %v1437, %v1496
        %v1498 = vpop.f32.mrf.mxu0
        %1499 = vdwg.mxu0
        %v1500 = vpack.c.bf16 %v1371, %v1371
        %v1501 = vpack.c.bf16 %v1433, %v1433
        %v1502 = vpack.c.bf16 %v1497, %v1497
        %1504 = vrot.lane.b32.xlu0 %v1500, 96
        %v1505 = vpop.permute.xlu0 %1504
        %1506 = vrot.lane.b32.xlu0 %v1500, 64
        %v1507 = vpop.permute.xlu0 %1506
        %1508 = vrot.lane.b32.xlu0 %v1500, 32
        %v1509 = vpop.permute.xlu0 %1508
        %1511 = vrot.lane.b32.xlu0 %v1501, 96
        %v1512 = vpop.permute.xlu0 %1511
        %1513 = vrot.lane.b32.xlu0 %v1501, 64
        %v1514 = vpop.permute.xlu0 %1513
        %1515 = vrot.lane.b32.xlu0 %v1501, 32
        %v1516 = vpop.permute.xlu0 %1515
        %1518 = vrot.lane.b32.xlu0 %v1502, 96
        %v1519 = vpop.permute.xlu0 %1518
        %1520 = vrot.lane.b32.xlu0 %v1502, 64
        %v1521 = vpop.permute.xlu0 %1520
        %1522 = vrot.lane.b32.xlu0 %v1502, 32
        %v1523 = vpop.permute.xlu0 %1522
        %vm1524 = vcmask 261120
        %v1526 = vsel %vm1524, %v1500, 0
        %v1529 = vsel %vm1524, %v1501, 0
        %1531 = vmatpush.bf16.xpose.msra.mxu0 0
        %1532 = vmatpush.bf16.xpose.msra.mxu0 0
        %1533 = vmatpush.bf16.xpose.msra.mxu0 0
        %1534 = vmatpush.bf16.xpose.msra.mxu0 0
        %1535 = vmatpush.bf16.xpose.msra.mxu0 0
        %1536 = vmatpush.bf16.xpose.msra.mxu0 0
        %1537 = vmatpush.bf16.xpose.msra.mxu0 0
        %1538 = vmatpush.bf16.xpose.msra.mxu0 %v1529
        %1539 = vmatmul.bf16.gmra.mxu0 %v1526
        %v1540 = vpop.f32.mrf.mxu0
        %v1541 = vadd.f32 %v1235, %v1540
        %v1542 = vpop.f32.mrf.mxu0
        %1543 = vdwg.mxu0
        %v1545 = vsel %vm1524, %v1505, 0
        %v1548 = vsel %vm1524, %v1512, 0
        %1550 = vmatpush.bf16.xpose.msra.mxu0 0
        %1551 = vmatpush.bf16.xpose.msra.mxu0 0
        %1552 = vmatpush.bf16.xpose.msra.mxu0 0
        %1553 = vmatpush.bf16.xpose.msra.mxu0 0
        %1554 = vmatpush.bf16.xpose.msra.mxu0 0
        %1555 = vmatpush.bf16.xpose.msra.mxu0 0
        %1556 = vmatpush.bf16.xpose.msra.mxu0 0
        %1557 = vmatpush.bf16.xpose.msra.mxu0 %v1548
        %1558 = vmatmul.bf16.gmra.mxu0 %v1545
        %v1559 = vpop.f32.mrf.mxu0
        %v1560 = vadd.f32 %v1235, %v1559
        %v1561 = vpop.f32.mrf.mxu0
        %1562 = vdwg.mxu0
        %v1564 = vsel %vm1524, %v1507, 0
        %v1567 = vsel %vm1524, %v1514, 0
        %1569 = vmatpush.bf16.xpose.msra.mxu0 0
        %1570 = vmatpush.bf16.xpose.msra.mxu0 0
        %1571 = vmatpush.bf16.xpose.msra.mxu0 0
        %1572 = vmatpush.bf16.xpose.msra.mxu0 0
        %1573 = vmatpush.bf16.xpose.msra.mxu0 0
        %1574 = vmatpush.bf16.xpose.msra.mxu0 0
        %1575 = vmatpush.bf16.xpose.msra.mxu0 0
        %1576 = vmatpush.bf16.xpose.msra.mxu0 %v1567
        %1577 = vmatmul.bf16.gmra.mxu0 %v1564
        %v1578 = vpop.f32.mrf.mxu0
        %v1579 = vadd.f32 %v1235, %v1578
        %v1580 = vpop.f32.mrf.mxu0
        %1581 = vdwg.mxu0
        %v1583 = vsel %vm1524, %v1509, 0
        %v1586 = vsel %vm1524, %v1516, 0
        %1588 = vmatpush.bf16.xpose.msra.mxu0 0
        %1589 = vmatpush.bf16.xpose.msra.mxu0 0
        %1590 = vmatpush.bf16.xpose.msra.mxu0 0
        %1591 = vmatpush.bf16.xpose.msra.mxu0 0
        %1592 = vmatpush.bf16.xpose.msra.mxu0 0
        %1593 = vmatpush.bf16.xpose.msra.mxu0 0
        %1594 = vmatpush.bf16.xpose.msra.mxu0 0
        %1595 = vmatpush.bf16.xpose.msra.mxu0 %v1586
        %1596 = vmatmul.bf16.gmra.mxu0 %v1583
        %v1597 = vpop.f32.mrf.mxu0
        %v1598 = vadd.f32 %v1235, %v1597
        %v1599 = vpop.f32.mrf.mxu0
        %1600 = vdwg.mxu0
        %vm1601 = vcmask 64512
        %v1602 = vsel %vm1601, %v1541, -inf
        %1603 = vmax.xlane.f32.xlu0 %v1602
        %v1604 = vpop.xlane.xlu0 %1603
        %v1605 = vsel %vm1601, %v1560, -inf
        %1606 = vmax.xlane.f32.xlu0 %v1605
        %v1607 = vpop.xlane.xlu0 %1606
        %v1608 = vsel %vm1601, %v1579, -inf
        %1609 = vmax.xlane.f32.xlu0 %v1608
        %v1610 = vpop.xlane.xlu0 %1609
        %v1611 = vsel %vm1601, %v1598, -inf
        %1612 = vmax.xlane.f32.xlu0 %v1611
        %v1613 = vpop.xlane.xlu0 %1612
        %v1614 = vsub.f32 %v1541, %v1604
        %v1615 = vsub.f32 %v1560, %v1607
        %v1616 = vsub.f32 %v1579, %v1610
        %v1617 = vsub.f32 %v1598, %v1613
        %v1618 = vmul.f32 %v1614, 1.442695
        %v1619 = vpow.pop %v1618
        %v1620 = vmul.f32 %v1615, 1.442695
        %v1621 = vpow.pop %v1620
        %v1622 = vmul.f32 %v1616, 1.442695
        %v1623 = vpow.pop %v1622
        %v1624 = vmul.f32 %v1617, 1.442695
        %v1625 = vpow.pop %v1624
        %v1626 = vsel %vm1601, %v1619, 0.0
        %1627 = vadd.xlane.f32.xlu0 %v1626
        %v1628 = vpop.xlane.xlu0 %1627
        %v1629 = vsel %vm1601, %v1621, 0.0
        %1630 = vadd.xlane.f32.xlu0 %v1629
        %v1631 = vpop.xlane.xlu0 %1630
        %v1632 = vsel %vm1601, %v1623, 0.0
        %1633 = vadd.xlane.f32.xlu0 %v1632
        %v1634 = vpop.xlane.xlu0 %1633
        %v1635 = vsel %vm1601, %v1625, 0.0
        %1636 = vadd.xlane.f32.xlu0 %v1635
        %v1637 = vpop.xlane.xlu0 %1636
        %v1638 = vrcp.pop %v1628
        %v1639 = vrcp.pop %v1631
        %v1640 = vrcp.pop %v1634
        %v1641 = vrcp.pop %v1637
        %v1642 = vmul.f32 %v1619, %v1638
        %v1643 = vmul.f32 %v1621, %v1639
        %v1644 = vmul.f32 %v1623, %v1640
        %v1645 = vmul.f32 %v1625, %v1641
        %v1646 = vpack.c.bf16 %v1642, %v1642
        %v1647 = vpack.c.bf16 %v1643, %v1643
        %v1648 = vpack.c.bf16 %v1644, %v1644
        %v1649 = vpack.c.bf16 %v1645, %v1645
        %v1651 = vsel %vm1601, %v1646, 0
        %vm1653 = vcmask 1043456
        %v1655 = vsel %vm1653, %v1502, 0
        %1657 = vmatpush.bf16.msra.mxu0 0
        %1658 = vmatpush.bf16.msra.mxu0 0
        %1659 = vmatpush.bf16.msra.mxu0 0
        %1660 = vmatpush.bf16.msra.mxu0 0
        %1661 = vmatpush.bf16.msra.mxu0 0
        %1662 = vmatpush.bf16.msra.mxu0 0
        %1663 = vmatpush.bf16.msra.mxu0 0
        %1664 = vmatpush.bf16.msra.mxu0 %v1655
        %1665 = vmatmul.bf16.gmra.mxu0 %v1651
        %v1666 = vpop.f32.mrf.mxu0
        %v1667 = vadd.f32 0.0, %v1666
        %v1668 = vpop.f32.mrf.mxu0
        %1669 = vdwg.mxu0
        %v1671 = vsel %vm1601, %v1647, 0
        %v1674 = vsel %vm1653, %v1519, 0
        %1676 = vmatpush.bf16.msra.mxu0 0
        %1677 = vmatpush.bf16.msra.mxu0 0
        %1678 = vmatpush.bf16.msra.mxu0 0
        %1679 = vmatpush.bf16.msra.mxu0 0
        %1680 = vmatpush.bf16.msra.mxu0 0
        %1681 = vmatpush.bf16.msra.mxu0 0
        %1682 = vmatpush.bf16.msra.mxu0 0
        %1683 = vmatpush.bf16.msra.mxu0 %v1674
        %1684 = vmatmul.bf16.gmra.mxu0 %v1671
        %v1685 = vpop.f32.mrf.mxu0
        %v1686 = vadd.f32 0.0, %v1685
        %v1687 = vpop.f32.mrf.mxu0
        %1688 = vdwg.mxu0
        %v1690 = vsel %vm1601, %v1648, 0
        %v1693 = vsel %vm1653, %v1521, 0
        %1695 = vmatpush.bf16.msra.mxu0 0
        %1696 = vmatpush.bf16.msra.mxu0 0
        %1697 = vmatpush.bf16.msra.mxu0 0
        %1698 = vmatpush.bf16.msra.mxu0 0
        %1699 = vmatpush.bf16.msra.mxu0 0
        %1700 = vmatpush.bf16.msra.mxu0 0
        %1701 = vmatpush.bf16.msra.mxu0 0
        %1702 = vmatpush.bf16.msra.mxu0 %v1693
        %1703 = vmatmul.bf16.gmra.mxu0 %v1690
        %v1704 = vpop.f32.mrf.mxu0
        %v1705 = vadd.f32 0.0, %v1704
        %v1706 = vpop.f32.mrf.mxu0
        %1707 = vdwg.mxu0
        %v1709 = vsel %vm1601, %v1649, 0
        %v1712 = vsel %vm1653, %v1523, 0
        %1714 = vmatpush.bf16.msra.mxu0 0
        %1715 = vmatpush.bf16.msra.mxu0 0
        %1716 = vmatpush.bf16.msra.mxu0 0
        %1717 = vmatpush.bf16.msra.mxu0 0
        %1718 = vmatpush.bf16.msra.mxu0 0
        %1719 = vmatpush.bf16.msra.mxu0 0
        %1720 = vmatpush.bf16.msra.mxu0 0
        %1721 = vmatpush.bf16.msra.mxu0 %v1712
        %1722 = vmatmul.bf16.gmra.mxu0 %v1709
        %v1723 = vpop.f32.mrf.mxu0
        %v1724 = vadd.f32 0.0, %v1723
        %v1725 = vpop.f32.mrf.mxu0
        %1726 = vdwg.mxu0
        %1728 = vrot.lane.b32.xlu0 %v1686, 32
        %v1729 = vpop.permute.xlu0 %1728
        %1732 = vrot.lane.b32.xlu0 %v1705, 64
        %v1733 = vpop.permute.xlu0 %1732
        %1736 = vrot.lane.b32.xlu0 %v1724, 96
        %v1737 = vpop.permute.xlu0 %1736
        %v1739 = vsel %vm1524, %v1667, %v1729
        %vm1740 = vcmask 523264
        %v1741 = vsel %vm1740, %v1739, %v1733
        %vm1742 = vcmask 785408
        %v1743 = vsel %vm1742, %v1741, %v1737
        %v1744 = vpack.c.bf16 %v1743, %v1743
        %v1746 = vperm.slane %v1305, 0
        %v1764 = vunpack.c.l.b16 %v1289
        %v1765 = vunpack.c.l.b16 %v1290
        %v1766 = vunpack.c.l.b16 %v1291
        %v1767 = vunpack.c.l.b16 %v1292
        %v1768 = vunpack.c.l.b16 %v1293
        %v1769 = vunpack.c.l.b16 %v1294
        %v1770 = vunpack.c.l.b16 %v1295
        %v1771 = vunpack.c.l.b16 %v1296
        %v1772 = vunpack.c.l.b16 %v1297
        %v1773 = vunpack.c.l.b16 %v1298
        %v1774 = vunpack.c.l.b16 %v1299
        %v1775 = vunpack.c.l.b16 %v1300
        %v1776 = vunpack.c.l.b16 %v1301
        %v1777 = vunpack.c.l.b16 %v1302
        %v1778 = vunpack.c.l.b16 %v1303
        %v1779 = vunpack.c.l.b16 %v1304
        %v1780 = vpack.c.b16 %v1765, %v1764
        %v1781 = vpack.c.b16 %v1767, %v1766
        %v1782 = vpack.c.b16 %v1769, %v1768
        %v1783 = vpack.c.b16 %v1771, %v1770
        %v1784 = vpack.c.b16 %v1773, %v1772
        %v1785 = vpack.c.b16 %v1775, %v1774
        %v1786 = vpack.c.b16 %v1777, %v1776
        %v1787 = vpack.c.b16 %v1779, %v1778
        %1796 = vmatpush.bf16.msra.mxu0 %v1787
        %1797 = vmatpush.bf16.msra.mxu0 %v1786
        %1798 = vmatpush.bf16.msra.mxu0 %v1785
        %1799 = vmatpush.bf16.msra.mxu0 %v1784
        %1800 = vmatpush.bf16.msra.mxu0 %v1783
        %1801 = vmatpush.bf16.msra.mxu0 %v1782
        %1802 = vmatpush.bf16.msra.mxu0 %v1781
        %1803 = vmatpush.bf16.msra.mxu0 %v1780
        %1804 = vmatmul.bf16.gmra.mxu0 %v1744
        %v1805 = vpop.f32.mrf.mxu0
        %v1806 = vadd.f32 %v1746, %v1805
        %v1807 = vpop.f32.mrf.mxu0
        %1808 = vdwg.mxu0
        %v1809 = vld [vmem:[%s25] sm:$0x1]
        %v1810 = vld [vmem:[%s27] sm:$0x1]
        %v1811 = vadd.f32 %v1806, %v1231
        %1812 = vadd.xlane.f32.xlu0 %v1811
        %v1813 = vpop.xlane.xlu0 %1812
        %v1814 = vrcp.pop 128.0
        %v1815 = vmul.f32 128.0, %v1814
        %v1816 = vsub.f32 1.0, %v1815
        %v1817 = vmul.f32 %v1814, %v1816
        %v1818 = vadd.f32 %v1814, %v1817
        %vm1819 = vweird.f32 %v1814
        %v1820 = vsel %vm1819, %v1814, %v1818
        %v1821 = vmul.f32 %v1813, %v1820
        %v1822 = vsub.f32 %v1811, %v1821
        %v1823 = vmul.f32 %v1822, %v1822
        %1824 = vadd.xlane.f32.xlu0 %v1823
        %v1825 = vpop.xlane.xlu0 %1824
        %v1826 = vmul.f32 %v1825, %v1820
        %v1827 = vadd.f32 %v1826, 1e-05
        %v1828 = vrsqrt.pop %v1827
        %v1829 = vmul.f32 %v1828, %v1827
        %v1830 = vmul.f32 %v1829, %v1828
        %v1831 = vmul.f32 0.5, %v1830
        %v1832 = vsub.f32 1.5, %v1831
        %v1833 = vmul.f32 %v1828, %v1832
        %vm1834 = vweird.f32 %v1827
        %vm1835 = vweird.f32 %v1828
        %vm1836 = vmor %vm1834, %vm1835
        %v1837 = vsel %vm1836, %v1828, %v1833
        %v1838 = vmul.f32 %v1822, %v1837
        %v1840 = vperm.slane %v1809, 0
        %v1842 = vmul.f32 %v1838, %v1840
        %v1844 = vperm.slane %v1810, 0
        %v1846 = vadd.f32 %v1842, %v1844
        %v1847 = vld [vmem:[#allocation16] sm:$0xf]
        %v1848 = vld [vmem:[#allocation16 + $0x4] sm:$0xf]
        %v1849 = vld [vmem:[#allocation16 + $0x8] sm:$0xf]
        %v1850 = vld [vmem:[#allocation16 + $0xc] sm:$0xf]
        %v1851 = vld [vmem:[#allocation16 + $0x10] sm:$0xf]
        %v1852 = vld [vmem:[#allocation16 + $0x14] sm:$0xf]
        %v1853 = vld [vmem:[#allocation16 + $0x18] sm:$0xf]
        %v1854 = vld [vmem:[#allocation16 + $0x1c] sm:$0xf]
        %v1855 = vld [vmem:[#allocation16 + $0x20] sm:$0xf]
        %v1856 = vld [vmem:[#allocation16 + $0x24] sm:$0xf]
        %v1857 = vld [vmem:[#allocation16 + $0x28] sm:$0xf]
        %v1858 = vld [vmem:[#allocation16 + $0x2c] sm:$0xf]
        %v1859 = vld [vmem:[#allocation16 + $0x30] sm:$0xf]
        %v1860 = vld [vmem:[#allocation16 + $0x34] sm:$0xf]
        %v1861 = vld [vmem:[#allocation16 + $0x38] sm:$0xf]
        %v1862 = vld [vmem:[#allocation16 + $0x3c] sm:$0xf]
        %v1863 = vld [vmem:[%s31] sm:$0x1]
        %v1864 = vld [vmem:[#allocation17] sm:$0xf]
        %v1865 = vld [vmem:[#allocation17 + $0x4] sm:$0xf]
        %v1866 = vld [vmem:[#allocation17 + $0x8] sm:$0xf]
        %v1867 = vld [vmem:[#allocation17 + $0xc] sm:$0xf]
        %v1868 = vld [vmem:[#allocation17 + $0x10] sm:$0xf]
        %v1869 = vld [vmem:[#allocation17 + $0x14] sm:$0xf]
        %v1870 = vld [vmem:[#allocation17 + $0x18] sm:$0xf]
        %v1871 = vld [vmem:[#allocation17 + $0x1c] sm:$0xf]
        %v1872 = vld [vmem:[#allocation17 + $0x20] sm:$0xf]
        %v1873 = vld [vmem:[#allocation17 + $0x24] sm:$0xf]
        %v1874 = vld [vmem:[#allocation17 + $0x28] sm:$0xf]
        %v1875 = vld [vmem:[#allocation17 + $0x2c] sm:$0xf]
        %v1876 = vld [vmem:[#allocation17 + $0x30] sm:$0xf]
        %v1877 = vld [vmem:[#allocation17 + $0x34] sm:$0xf]
        %v1878 = vld [vmem:[#allocation17 + $0x38] sm:$0xf]
        %v1879 = vld [vmem:[#allocation17 + $0x3c] sm:$0xf]
        %v1880 = vld [vmem:[%s35] sm:$0x1]
        %v1881 = vld [vmem:[#allocation19] sm:$0xf]
        %v1882 = vld [vmem:[#allocation19 + $0x4] sm:$0xf]
        %v1883 = vld [vmem:[#allocation19 + $0x8] sm:$0xf]
        %v1884 = vld [vmem:[#allocation19 + $0xc] sm:$0xf]
        %v1885 = vld [vmem:[#allocation19 + $0x10] sm:$0xf]
        %v1886 = vld [vmem:[#allocation19 + $0x14] sm:$0xf]
        %v1887 = vld [vmem:[#allocation19 + $0x18] sm:$0xf]
        %v1888 = vld [vmem:[#allocation19 + $0x1c] sm:$0xf]
        %v1889 = vld [vmem:[#allocation19 + $0x20] sm:$0xf]
        %v1890 = vld [vmem:[#allocation19 + $0x24] sm:$0xf]
        %v1891 = vld [vmem:[#allocation19 + $0x28] sm:$0xf]
        %v1892 = vld [vmem:[#allocation19 + $0x2c] sm:$0xf]
        %v1893 = vld [vmem:[#allocation19 + $0x30] sm:$0xf]
        %v1894 = vld [vmem:[#allocation19 + $0x34] sm:$0xf]
        %v1895 = vld [vmem:[#allocation19 + $0x38] sm:$0xf]
        %v1896 = vld [vmem:[#allocation19 + $0x3c] sm:$0xf]
        %v1897 = vld [vmem:[%s39] sm:$0x1]
        %v1898 = vld [vmem:[#allocation20] sm:$0xf]
        %v1899 = vld [vmem:[#allocation20 + $0x4] sm:$0xf]
        %v1900 = vld [vmem:[#allocation20 + $0x8] sm:$0xf]
        %v1901 = vld [vmem:[#allocation20 + $0xc] sm:$0xf]
        %v1902 = vld [vmem:[#allocation20 + $0x10] sm:$0xf]
        %v1903 = vld [vmem:[#allocation20 + $0x14] sm:$0xf]
        %v1904 = vld [vmem:[#allocation20 + $0x18] sm:$0xf]
        %v1905 = vld [vmem:[#allocation20 + $0x1c] sm:$0xf]
        %v1906 = vld [vmem:[#allocation20 + $0x20] sm:$0xf]
        %v1907 = vld [vmem:[#allocation20 + $0x24] sm:$0xf]
        %v1908 = vld [vmem:[#allocation20 + $0x28] sm:$0xf]
        %v1909 = vld [vmem:[#allocation20 + $0x2c] sm:$0xf]
        %v1910 = vld [vmem:[#allocation20 + $0x30] sm:$0xf]
        %v1911 = vld [vmem:[#allocation20 + $0x34] sm:$0xf]
        %v1912 = vld [vmem:[#allocation20 + $0x38] sm:$0xf]
        %v1913 = vld [vmem:[#allocation20 + $0x3c] sm:$0xf]
        %v1914 = vld [vmem:[%s43] sm:$0x1]
        %v1915 = vpack.c.bf16 %v1846, %v1846
        %v1916 = vpack.c.bf16 %v1233, %v1232
        %v1918 = vperm.slane %v1863, 0
        %v1936 = vunpack.c.l.b16 %v1847
        %v1937 = vunpack.c.l.b16 %v1848
        %v1938 = vunpack.c.l.b16 %v1849
        %v1939 = vunpack.c.l.b16 %v1850
        %v1940 = vunpack.c.l.b16 %v1851
        %v1941 = vunpack.c.l.b16 %v1852
        %v1942 = vunpack.c.l.b16 %v1853
        %v1943 = vunpack.c.l.b16 %v1854
        %v1944 = vunpack.c.l.b16 %v1855
        %v1945 = vunpack.c.l.b16 %v1856
        %v1946 = vunpack.c.l.b16 %v1857
        %v1947 = vunpack.c.l.b16 %v1858
        %v1948 = vunpack.c.l.b16 %v1859
        %v1949 = vunpack.c.l.b16 %v1860
        %v1950 = vunpack.c.l.b16 %v1861
        %v1951 = vunpack.c.l.b16 %v1862
        %v1952 = vpack.c.b16 %v1937, %v1936
        %v1953 = vpack.c.b16 %v1939, %v1938
        %v1954 = vpack.c.b16 %v1941, %v1940
        %v1955 = vpack.c.b16 %v1943, %v1942
        %v1956 = vpack.c.b16 %v1945, %v1944
        %v1957 = vpack.c.b16 %v1947, %v1946
        %v1958 = vpack.c.b16 %v1949, %v1948
        %v1959 = vpack.c.b16 %v1951, %v1950
        %1968 = vmatpush.bf16.msra.mxu0 %v1959
        %1969 = vmatpush.bf16.msra.mxu0 %v1958
        %1970 = vmatpush.bf16.msra.mxu0 %v1957
        %1971 = vmatpush.bf16.msra.mxu0 %v1956
        %1972 = vmatpush.bf16.msra.mxu0 %v1955
        %1973 = vmatpush.bf16.msra.mxu0 %v1954
        %1974 = vmatpush.bf16.msra.mxu0 %v1953
        %1975 = vmatpush.bf16.msra.mxu0 %v1952
        %1976 = vmatmul.bf16.gmra.mxu0 %v1915
        %v1977 = vpop.f32.mrf.mxu0
        %v1978 = vadd.f32 %v1918, %v1977
        %v1979 = vpop.f32.mrf.mxu0
        %1980 = vdwg.mxu0
        %v1981 = vmul.f32 %v1978, 0.17677669
        %v1983 = vperm.slane %v1880, 0
        %v2001 = vunpack.c.l.b16 %v1864
        %v2002 = vunpack.c.l.b16 %v1865
        %v2003 = vunpack.c.l.b16 %v1866
        %v2004 = vunpack.c.l.b16 %v1867
        %v2005 = vunpack.c.l.b16 %v1868
        %v2006 = vunpack.c.l.b16 %v1869
        %v2007 = vunpack.c.l.b16 %v1870
        %v2008 = vunpack.c.l.b16 %v1871
        %v2009 = vunpack.c.l.b16 %v1872
        %v2010 = vunpack.c.l.b16 %v1873
        %v2011 = vunpack.c.l.b16 %v1874
        %v2012 = vunpack.c.l.b16 %v1875
        %v2013 = vunpack.c.l.b16 %v1876
        %v2014 = vunpack.c.l.b16 %v1877
        %v2015 = vunpack.c.l.b16 %v1878
        %v2016 = vunpack.c.l.b16 %v1879
        %v2017 = vpack.c.b16 %v2002, %v2001
        %v2018 = vpack.c.b16 %v2004, %v2003
        %v2019 = vpack.c.b16 %v2006, %v2005
        %v2020 = vpack.c.b16 %v2008, %v2007
        %v2021 = vpack.c.b16 %v2010, %v2009
        %v2022 = vpack.c.b16 %v2012, %v2011
        %v2023 = vpack.c.b16 %v2014, %v2013
        %v2024 = vpack.c.b16 %v2016, %v2015
        %2033 = vmatpush.bf16.msra.mxu0 %v2024
        %2034 = vmatpush.bf16.msra.mxu0 %v2023
        %2035 = vmatpush.bf16.msra.mxu0 %v2022
        %2036 = vmatpush.bf16.msra.mxu0 %v2021
        %2037 = vmatpush.bf16.msra.mxu0 %v2020
        %2038 = vmatpush.bf16.msra.mxu0 %v2019
        %2039 = vmatpush.bf16.msra.mxu0 %v2018
        %2040 = vmatpush.bf16.msra.mxu0 %v2017
        %2041 = vmatmul.bf16.gmra.mxu0 %v1916
        %v2042 = vpop.f32.mrf.mxu0
        %v2043 = vadd.f32 %v1983, %v2042
        %v2044 = vpop.f32.mrf.mxu0
        %v2045 = vadd.f32 %v1983, %v2044
        %2046 = vdwg.mxu0
        %v2048 = vperm.slane %v1897, 0
        %v2066 = vunpack.c.l.b16 %v1881
        %v2067 = vunpack.c.l.b16 %v1882
        %v2068 = vunpack.c.l.b16 %v1883
        %v2069 = vunpack.c.l.b16 %v1884
        %v2070 = vunpack.c.l.b16 %v1885
        %v2071 = vunpack.c.l.b16 %v1886
        %v2072 = vunpack.c.l.b16 %v1887
        %v2073 = vunpack.c.l.b16 %v1888
        %v2074 = vunpack.c.l.b16 %v1889
        %v2075 = vunpack.c.l.b16 %v1890
        %v2076 = vunpack.c.l.b16 %v1891
        %v2077 = vunpack.c.l.b16 %v1892
        %v2078 = vunpack.c.l.b16 %v1893
        %v2079 = vunpack.c.l.b16 %v1894
        %v2080 = vunpack.c.l.b16 %v1895
        %v2081 = vunpack.c.l.b16 %v1896
        %v2082 = vpack.c.b16 %v2067, %v2066
        %v2083 = vpack.c.b16 %v2069, %v2068
        %v2084 = vpack.c.b16 %v2071, %v2070
        %v2085 = vpack.c.b16 %v2073, %v2072
        %v2086 = vpack.c.b16 %v2075, %v2074
        %v2087 = vpack.c.b16 %v2077, %v2076
        %v2088 = vpack.c.b16 %v2079, %v2078
        %v2089 = vpack.c.b16 %v2081, %v2080
        %2098 = vmatpush.bf16.msra.mxu0 %v2089
        %2099 = vmatpush.bf16.msra.mxu0 %v2088
        %2100 = vmatpush.bf16.msra.mxu0 %v2087
        %2101 = vmatpush.bf16.msra.mxu0 %v2086
        %2102 = vmatpush.bf16.msra.mxu0 %v2085
        %2103 = vmatpush.bf16.msra.mxu0 %v2084
        %2104 = vmatpush.bf16.msra.mxu0 %v2083
        %2105 = vmatpush.bf16.msra.mxu0 %v2082
        %2106 = vmatmul.bf16.gmra.mxu0 %v1916
        %v2107 = vpop.f32.mrf.mxu0
        %v2108 = vadd.f32 %v2048, %v2107
        %v2109 = vpop.f32.mrf.mxu0
        %v2110 = vadd.f32 %v2048, %v2109
        %2111 = vdwg.mxu0
        %v2112 = vpack.c.bf16 %v1981, %v1981
        %v2113 = vpack.c.bf16 %v2043, %v2043
        %v2114 = vpack.c.bf16 %v2045, %v2045
        %v2115 = vpack.c.bf16 %v2108, %v2108
        %v2116 = vpack.c.bf16 %v2110, %v2110
        %2118 = vrot.lane.b32.xlu0 %v2112, 96
        %v2119 = vpop.permute.xlu0 %2118
        %2120 = vrot.lane.b32.xlu0 %v2112, 64
        %v2121 = vpop.permute.xlu0 %2120
        %2122 = vrot.lane.b32.xlu0 %v2112, 32
        %v2123 = vpop.permute.xlu0 %2122
        %2126 = vrot.lane.b32.xlu0 %v2113, 96
        %v2127 = vpop.permute.xlu0 %2126
        %2128 = vrot.lane.b32.xlu0 %v2114, 96
        %v2129 = vpop.permute.xlu0 %2128
        %2130 = vrot.lane.b32.xlu0 %v2113, 64
        %v2131 = vpop.permute.xlu0 %2130
        %2132 = vrot.lane.b32.xlu0 %v2114, 64
        %v2133 = vpop.permute.xlu0 %2132
        %2134 = vrot.lane.b32.xlu0 %v2113, 32
        %v2135 = vpop.permute.xlu0 %2134
        %2136 = vrot.lane.b32.xlu0 %v2114, 32
        %v2137 = vpop.permute.xlu0 %2136
        %2140 = vrot.lane.b32.xlu0 %v2115, 96
        %v2141 = vpop.permute.xlu0 %2140
        %2142 = vrot.lane.b32.xlu0 %v2116, 96
        %v2143 = vpop.permute.xlu0 %2142
        %2144 = vrot.lane.b32.xlu0 %v2115, 64
        %v2145 = vpop.permute.xlu0 %2144
        %2146 = vrot.lane.b32.xlu0 %v2116, 64
        %v2147 = vpop.permute.xlu0 %2146
        %2148 = vrot.lane.b32.xlu0 %v2115, 32
        %v2149 = vpop.permute.xlu0 %2148
        %2150 = vrot.lane.b32.xlu0 %v2116, 32
        %v2151 = vpop.permute.xlu0 %2150
        %v2152 = vunpack.c.l.b16 %v2113
        %v2153 = vunpack.c.l.b16 %v2114
        %v2154 = vpack.c.b16 %v2153, %v2152
        %v2156 = vsel %vm1524, %v2112, 0
        %v2159 = vsel %vm1524, %v2154, 0
        %2161 = vmatpush.bf16.xpose.msra.mxu0 0
        %2162 = vmatpush.bf16.xpose.msra.mxu0 0
        %2163 = vmatpush.bf16.xpose.msra.mxu0 0
        %2164 = vmatpush.bf16.xpose.msra.mxu0 0
        %2165 = vmatpush.bf16.xpose.msra.mxu0 0
        %2166 = vmatpush.bf16.xpose.msra.mxu0 0
        %2167 = vmatpush.bf16.xpose.msra.mxu0 0
        %2168 = vmatpush.bf16.xpose.msra.mxu0 %v2159
        %2169 = vmatmul.bf16.gmra.mxu0 %v2156
        %v2170 = vpop.f32.mrf.mxu0
        %v2171 = vadd.f32 %v1237, %v2170
        %v2172 = vpop.f32.mrf.mxu0
        %2173 = vdwg.mxu0
        %v2174 = vunpack.c.l.b16 %v2127
        %v2175 = vunpack.c.l.b16 %v2129
        %v2176 = vpack.c.b16 %v2175, %v2174
        %v2178 = vsel %vm1524, %v2119, 0
        %v2181 = vsel %vm1524, %v2176, 0
        %2183 = vmatpush.bf16.xpose.msra.mxu0 0
        %2184 = vmatpush.bf16.xpose.msra.mxu0 0
        %2185 = vmatpush.bf16.xpose.msra.mxu0 0
        %2186 = vmatpush.bf16.xpose.msra.mxu0 0
        %2187 = vmatpush.bf16.xpose.msra.mxu0 0
        %2188 = vmatpush.bf16.xpose.msra.mxu0 0
        %2189 = vmatpush.bf16.xpose.msra.mxu0 0
        %2190 = vmatpush.bf16.xpose.msra.mxu0 %v2181
        %2191 = vmatmul.bf16.gmra.mxu0 %v2178
        %v2192 = vpop.f32.mrf.mxu0
        %v2193 = vadd.f32 %v1237, %v2192
        %v2194 = vpop.f32.mrf.mxu0
        %2195 = vdwg.mxu0
        %v2196 = vunpack.c.l.b16 %v2131
        %v2197 = vunpack.c.l.b16 %v2133
        %v2198 = vpack.c.b16 %v2197, %v2196
        %v2200 = vsel %vm1524, %v2121, 0
        %v2203 = vsel %vm1524, %v2198, 0
        %2205 = vmatpush.bf16.xpose.msra.mxu0 0
        %2206 = vmatpush.bf16.xpose.msra.mxu0 0
        %2207 = vmatpush.bf16.xpose.msra.mxu0 0
        %2208 = vmatpush.bf16.xpose.msra.mxu0 0
        %2209 = vmatpush.bf16.xpose.msra.mxu0 0
        %2210 = vmatpush.bf16.xpose.msra.mxu0 0
        %2211 = vmatpush.bf16.xpose.msra.mxu0 0
        %2212 = vmatpush.bf16.xpose.msra.mxu0 %v2203
        %2213 = vmatmul.bf16.gmra.mxu0 %v2200
        %v2214 = vpop.f32.mrf.mxu0
        %v2215 = vadd.f32 %v1237, %v2214
        %v2216 = vpop.f32.mrf.mxu0
        %2217 = vdwg.mxu0
        %v2218 = vunpack.c.l.b16 %v2135
        %v2219 = vunpack.c.l.b16 %v2137
        %v2220 = vpack.c.b16 %v2219, %v2218
        %v2222 = vsel %vm1524, %v2123, 0
        %v2225 = vsel %vm1524, %v2220, 0
        %2227 = vmatpush.bf16.xpose.msra.mxu0 0
        %2228 = vmatpush.bf16.xpose.msra.mxu0 0
        %2229 = vmatpush.bf16.xpose.msra.mxu0 0
        %2230 = vmatpush.bf16.xpose.msra.mxu0 0
        %2231 = vmatpush.bf16.xpose.msra.mxu0 0
        %2232 = vmatpush.bf16.xpose.msra.mxu0 0
        %2233 = vmatpush.bf16.xpose.msra.mxu0 0
        %2234 = vmatpush.bf16.xpose.msra.mxu0 %v2225
        %2235 = vmatmul.bf16.gmra.mxu0 %v2222
        %v2236 = vpop.f32.mrf.mxu0
        %v2237 = vadd.f32 %v1237, %v2236
        %v2238 = vpop.f32.mrf.mxu0
        %2239 = vdwg.mxu0
        %vm2240 = vcmask 130048
        %v2241 = vsel %vm2240, %v2171, -inf
        %2242 = vmax.xlane.f32.xlu0 %v2241
        %v2243 = vpop.xlane.xlu0 %2242
        %v2244 = vsel %vm2240, %v2193, -inf
        %2245 = vmax.xlane.f32.xlu0 %v2244
        %v2246 = vpop.xlane.xlu0 %2245
        %v2247 = vsel %vm2240, %v2215, -inf
        %2248 = vmax.xlane.f32.xlu0 %v2247
        %v2249 = vpop.xlane.xlu0 %2248
        %v2250 = vsel %vm2240, %v2237, -inf
        %2251 = vmax.xlane.f32.xlu0 %v2250
        %v2252 = vpop.xlane.xlu0 %2251
        %v2253 = vsub.f32 %v2171, %v2243
        %v2254 = vsub.f32 %v2193, %v2246
        %v2255 = vsub.f32 %v2215, %v2249
        %v2256 = vsub.f32 %v2237, %v2252
        %v2257 = vmul.f32 %v2253, 1.442695
        %v2258 = vpow.pop %v2257
        %v2259 = vmul.f32 %v2254, 1.442695
        %v2260 = vpow.pop %v2259
        %v2261 = vmul.f32 %v2255, 1.442695
        %v2262 = vpow.pop %v2261
        %v2263 = vmul.f32 %v2256, 1.442695
        %v2264 = vpow.pop %v2263
        %v2265 = vsel %vm2240, %v2258, 0.0
        %2266 = vadd.xlane.f32.xlu0 %v2265
        %v2267 = vpop.xlane.xlu0 %2266
        %v2268 = vsel %vm2240, %v2260, 0.0
        %2269 = vadd.xlane.f32.xlu0 %v2268
        %v2270 = vpop.xlane.xlu0 %2269
        %v2271 = vsel %vm2240, %v2262, 0.0
        %2272 = vadd.xlane.f32.xlu0 %v2271
        %v2273 = vpop.xlane.xlu0 %2272
        %v2274 = vsel %vm2240, %v2264, 0.0
        %2275 = vadd.xlane.f32.xlu0 %v2274
        %v2276 = vpop.xlane.xlu0 %2275
        %v2277 = vrcp.pop %v2267
        %v2278 = vrcp.pop %v2270
        %v2279 = vrcp.pop %v2273
        %v2280 = vrcp.pop %v2276
        %v2281 = vmul.f32 %v2258, %v2277
        %v2282 = vmul.f32 %v2260, %v2278
        %v2283 = vmul.f32 %v2262, %v2279
        %v2284 = vmul.f32 %v2264, %v2280
        %v2285 = vpack.c.bf16 %v2281, %v2281
        %v2286 = vpack.c.bf16 %v2282, %v2282
        %v2287 = vpack.c.bf16 %v2283, %v2283
        %v2288 = vpack.c.bf16 %v2284, %v2284
        %v2289 = vunpack.c.l.b16 %v2115
        %v2290 = vunpack.c.l.b16 %v2116
        %v2291 = vpack.c.b16 %v2290, %v2289
        %v2294 = vsel %vm2240, %v2285, 0
        %2296 = vmatpush.bf16.msra.mxu0 0
        %2297 = vmatpush.bf16.msra.mxu0 0
        %2298 = vmatpush.bf16.msra.mxu0 0
        %2299 = vmatpush.bf16.msra.mxu0 0
        %2300 = vmatpush.bf16.msra.mxu0 0
        %2301 = vmatpush.bf16.msra.mxu0 0
        %2302 = vmatpush.bf16.msra.mxu0 0
        %2303 = vmatpush.bf16.msra.mxu0 %v2291
        %2304 = vmatmul.bf16.gmra.mxu0 %v2294
        %v2305 = vpop.f32.mrf.mxu0
        %v2306 = vadd.f32 0.0, %v2305
        %v2307 = vpop.f32.mrf.mxu0
        %2308 = vdwg.mxu0
        %v2309 = vunpack.c.l.b16 %v2141
        %v2310 = vunpack.c.l.b16 %v2143
        %v2311 = vpack.c.b16 %v2310, %v2309
        %v2314 = vsel %vm2240, %v2286, 0
        %2316 = vmatpush.bf16.msra.mxu0 0
        %2317 = vmatpush.bf16.msra.mxu0 0
        %2318 = vmatpush.bf16.msra.mxu0 0
        %2319 = vmatpush.bf16.msra.mxu0 0
        %2320 = vmatpush.bf16.msra.mxu0 0
        %2321 = vmatpush.bf16.msra.mxu0 0
        %2322 = vmatpush.bf16.msra.mxu0 0
        %2323 = vmatpush.bf16.msra.mxu0 %v2311
        %2324 = vmatmul.bf16.gmra.mxu0 %v2314
        %v2325 = vpop.f32.mrf.mxu0
        %v2326 = vadd.f32 0.0, %v2325
        %v2327 = vpop.f32.mrf.mxu0
        %2328 = vdwg.mxu0
        %v2329 = vunpack.c.l.b16 %v2145
        %v2330 = vunpack.c.l.b16 %v2147
        %v2331 = vpack.c.b16 %v2330, %v2329
        %v2334 = vsel %vm2240, %v2287, 0
        %2336 = vmatpush.bf16.msra.mxu0 0
        %2337 = vmatpush.bf16.msra.mxu0 0
        %2338 = vmatpush.bf16.msra.mxu0 0
        %2339 = vmatpush.bf16.msra.mxu0 0
        %2340 = vmatpush.bf16.msra.mxu0 0
        %2341 = vmatpush.bf16.msra.mxu0 0
        %2342 = vmatpush.bf16.msra.mxu0 0
        %2343 = vmatpush.bf16.msra.mxu0 %v2331
        %2344 = vmatmul.bf16.gmra.mxu0 %v2334
        %v2345 = vpop.f32.mrf.mxu0
        %v2346 = vadd.f32 0.0, %v2345
        %v2347 = vpop.f32.mrf.mxu0
        %2348 = vdwg.mxu0
        %v2349 = vunpack.c.l.b16 %v2149
        %v2350 = vunpack.c.l.b16 %v2151
        %v2351 = vpack.c.b16 %v2350, %v2349
        %v2354 = vsel %vm2240, %v2288, 0
        %2356 = vmatpush.bf16.msra.mxu0 0
        %2357 = vmatpush.bf16.msra.mxu0 0
        %2358 = vmatpush.bf16.msra.mxu0 0
        %2359 = vmatpush.bf16.msra.mxu0 0
        %2360 = vmatpush.bf16.msra.mxu0 0
        %2361 = vmatpush.bf16.msra.mxu0 0
        %2362 = vmatpush.bf16.msra.mxu0 0
        %2363 = vmatpush.bf16.msra.mxu0 %v2351
        %2364 = vmatmul.bf16.gmra.mxu0 %v2354
        %v2365 = vpop.f32.mrf.mxu0
        %v2366 = vadd.f32 0.0, %v2365
        %v2367 = vpop.f32.mrf.mxu0
        %2368 = vdwg.mxu0
        %2370 = vrot.lane.b32.xlu0 %v2326, 32
        %v2371 = vpop.permute.xlu0 %2370
        %2374 = vrot.lane.b32.xlu0 %v2346, 64
        %v2375 = vpop.permute.xlu0 %2374
        %2378 = vrot.lane.b32.xlu0 %v2366, 96
        %v2379 = vpop.permute.xlu0 %2378
        %v2381 = vsel %vm1524, %v2306, %v2371
        %v2382 = vsel %vm1740, %v2381, %v2375
        %v2383 = vsel %vm1742, %v2382, %v2379
        %v2384 = vpack.c.bf16 %v2383, %v2383
        %v2386 = vperm.slane %v1914, 0
        %v2404 = vunpack.c.l.b16 %v1898
        %v2405 = vunpack.c.l.b16 %v1899
        %v2406 = vunpack.c.l.b16 %v1900
        %v2407 = vunpack.c.l.b16 %v1901
        %v2408 = vunpack.c.l.b16 %v1902
        %v2409 = vunpack.c.l.b16 %v1903
        %v2410 = vunpack.c.l.b16 %v1904
        %v2411 = vunpack.c.l.b16 %v1905
        %v2412 = vunpack.c.l.b16 %v1906
        %v2413 = vunpack.c.l.b16 %v1907
        %v2414 = vunpack.c.l.b16 %v1908
        %v2415 = vunpack.c.l.b16 %v1909
        %v2416 = vunpack.c.l.b16 %v1910
        %v2417 = vunpack.c.l.b16 %v1911
        %v2418 = vunpack.c.l.b16 %v1912
        %v2419 = vunpack.c.l.b16 %v1913
        %v2420 = vpack.c.b16 %v2405, %v2404
        %v2421 = vpack.c.b16 %v2407, %v2406
        %v2422 = vpack.c.b16 %v2409, %v2408
        %v2423 = vpack.c.b16 %v2411, %v2410
        %v2424 = vpack.c.b16 %v2413, %v2412
        %v2425 = vpack.c.b16 %v2415, %v2414
        %v2426 = vpack.c.b16 %v2417, %v2416
        %v2427 = vpack.c.b16 %v2419, %v2418
        %2436 = vmatpush.bf16.msra.mxu0 %v2427
        %2437 = vmatpush.bf16.msra.mxu0 %v2426
        %2438 = vmatpush.bf16.msra.mxu0 %v2425
        %2439 = vmatpush.bf16.msra.mxu0 %v2424
        %2440 = vmatpush.bf16.msra.mxu0 %v2423
        %2441 = vmatpush.bf16.msra.mxu0 %v2422
        %2442 = vmatpush.bf16.msra.mxu0 %v2421
        %2443 = vmatpush.bf16.msra.mxu0 %v2420
        %2444 = vmatmul.bf16.gmra.mxu0 %v2384
        %v2445 = vpop.f32.mrf.mxu0
        %v2446 = vadd.f32 %v2386, %v2445
        %v2447 = vpop.f32.mrf.mxu0
        %2448 = vdwg.mxu0
        %v2449 = vld [vmem:[%s45] sm:$0x1]
        %v2450 = vld [vmem:[%s47] sm:$0x1]
        %v2451 = vadd.f32 %v2446, %v1846
        %2452 = vadd.xlane.f32.xlu0 %v2451
        %v2453 = vpop.xlane.xlu0 %2452
        %v2454 = vmul.f32 %v2453, %v1820
        %v2455 = vsub.f32 %v2451, %v2454
        %v2456 = vmul.f32 %v2455, %v2455
        %2457 = vadd.xlane.f32.xlu0 %v2456
        %v2458 = vpop.xlane.xlu0 %2457
        %v2459 = vmul.f32 %v2458, %v1820
        %v2460 = vadd.f32 %v2459, 1e-05
        %v2461 = vrsqrt.pop %v2460
        %v2462 = vmul.f32 %v2461, %v2460
        %v2463 = vmul.f32 %v2462, %v2461
        %v2464 = vmul.f32 0.5, %v2463
        %v2465 = vsub.f32 1.5, %v2464
        %v2466 = vmul.f32 %v2461, %v2465
        %vm2467 = vweird.f32 %v2460
        %vm2468 = vweird.f32 %v2461
        %vm2469 = vmor %vm2467, %vm2468
        %v2470 = vsel %vm2469, %v2461, %v2466
        %v2471 = vmul.f32 %v2455, %v2470
        %v2473 = vperm.slane %v2449, 0
        %v2475 = vmul.f32 %v2471, %v2473
        %v2477 = vperm.slane %v2450, 0
        %v2479 = vadd.f32 %v2475, %v2477
        %v2480 = vpack.c.bf16 %v2479, %v2479
        %v2481 = vld [vmem:[#allocation22] sm:$0xff]
        %v2482 = vld [vmem:[#allocation22 + $0x8] sm:$0xff]
        %v2483 = vld [vmem:[#allocation22 + $0x10] sm:$0xff]
        %v2484 = vld [vmem:[#allocation22 + $0x18] sm:$0xff]
        %v2485 = vld [vmem:[#allocation22 + $0x20] sm:$0xff]
        %v2486 = vld [vmem:[#allocation22 + $0x28] sm:$0xff]
        %v2487 = vld [vmem:[#allocation22 + $0x30] sm:$0xff]
        %v2488 = vld [vmem:[#allocation22 + $0x38] sm:$0xff]
        %v2489 = vld [vmem:[#allocation22 + $0x40] sm:$0xff]
        %v2490 = vld [vmem:[#allocation22 + $0x48] sm:$0xff]
        %v2491 = vld [vmem:[#allocation22 + $0x50] sm:$0xff]
        %v2492 = vld [vmem:[#allocation22 + $0x58] sm:$0xff]
        %v2493 = vld [vmem:[#allocation22 + $0x60] sm:$0xff]
        %v2494 = vld [vmem:[#allocation22 + $0x68] sm:$0xff]
        %v2495 = vld [vmem:[#allocation22 + $0x70] sm:$0xff]
        %v2496 = vld [vmem:[#allocation22 + $0x78] sm:$0xff]
        %v2497 = vld [vmem:[%s51] sm:$0x3]
        %v2499 = vperm.slane %v2497, 0
        %v2500 = vperm.slane %v2497, 1
        %v2519 = vunpack.c.l.b16 %v2481
        %v2520 = vunpack.c.h.b16 %v2481
        %v2521 = vunpack.c.l.b16 %v2482
        %v2522 = vunpack.c.h.b16 %v2482
        %v2523 = vunpack.c.l.b16 %v2483
        %v2524 = vunpack.c.h.b16 %v2483
        %v2525 = vunpack.c.l.b16 %v2484
        %v2526 = vunpack.c.h.b16 %v2484
        %v2527 = vunpack.c.l.b16 %v2485
        %v2528 = vunpack.c.h.b16 %v2485
        %v2529 = vunpack.c.l.b16 %v2486
        %v2530 = vunpack.c.h.b16 %v2486
        %v2531 = vunpack.c.l.b16 %v2487
        %v2532 = vunpack.c.h.b16 %v2487
        %v2533 = vunpack.c.l.b16 %v2488
        %v2534 = vunpack.c.h.b16 %v2488
        %v2535 = vunpack.c.l.b16 %v2489
        %v2536 = vunpack.c.h.b16 %v2489
        %v2537 = vunpack.c.l.b16 %v2490
        %v2538 = vunpack.c.h.b16 %v2490
        %v2539 = vunpack.c.l.b16 %v2491
        %v2540 = vunpack.c.h.b16 %v2491
        %v2541 = vunpack.c.l.b16 %v2492
        %v2542 = vunpack.c.h.b16 %v2492
        %v2543 = vunpack.c.l.b16 %v2493
        %v2544 = vunpack.c.h.b16 %v2493
        %v2545 = vunpack.c.l.b16 %v2494
        %v2546 = vunpack.c.h.b16 %v2494
        %v2547 = vunpack.c.l.b16 %v2495
        %v2548 = vunpack.c.h.b16 %v2495
        %v2549 = vunpack.c.l.b16 %v2496
        %v2550 = vunpack.c.h.b16 %v2496
        %v2551 = vpack.c.b16 %v2521, %v2519
        %v2552 = vpack.c.b16 %v2522, %v2520
        %v2553 = vpack.c.b16 %v2525, %v2523
        %v2554 = vpack.c.b16 %v2526, %v2524
        %v2555 = vpack.c.b16 %v2529, %v2527
        %v2556 = vpack.c.b16 %v2530, %v2528
        %v2557 = vpack.c.b16 %v2533, %v2531
        %v2558 = vpack.c.b16 %v2534, %v2532
        %v2559 = vpack.c.b16 %v2537, %v2535
        %v2560 = vpack.c.b16 %v2538, %v2536
        %v2561 = vpack.c.b16 %v2541, %v2539
        %v2562 = vpack.c.b16 %v2542, %v2540
        %v2563 = vpack.c.b16 %v2545, %v2543
        %v2564 = vpack.c.b16 %v2546, %v2544
        %v2565 = vpack.c.b16 %v2549, %v2547
        %v2566 = vpack.c.b16 %v2550, %v2548
        %2583 = vmatpush.bf16.msra.mxu0 %v2565
        %2584 = vmatpush.bf16.msra.mxu0 %v2563
        %2585 = vmatpush.bf16.msra.mxu0 %v2561
        %2586 = vmatpush.bf16.msra.mxu0 %v2559
        %2587 = vmatpush.bf16.msra.mxu0 %v2557
        %2588 = vmatpush.bf16.msra.mxu0 %v2555
        %2589 = vmatpush.bf16.msra.mxu0 %v2553
        %2590 = vmatpush.bf16.msra.mxu0 %v2551
        %2591 = vmatmul.bf16.gmra.mxu0 %v2480
        %v2592 = vpop.f32.mrf.mxu0
        %v2593 = vadd.f32 %v2499, %v2592
        %v2594 = vpop.f32.mrf.mxu0
        %2595 = vdwg.mxu0
        %2596 = vmatpush.bf16.msra.mxu0 %v2566
        %2597 = vmatpush.bf16.msra.mxu0 %v2564
        %2598 = vmatpush.bf16.msra.mxu0 %v2562
        %2599 = vmatpush.bf16.msra.mxu0 %v2560
        %2600 = vmatpush.bf16.msra.mxu0 %v2558
        %2601 = vmatpush.bf16.msra.mxu0 %v2556
        %2602 = vmatpush.bf16.msra.mxu0 %v2554
        %2603 = vmatpush.bf16.msra.mxu0 %v2552
        %2604 = vmatmul.bf16.gmra.mxu0 %v2480
        %v2605 = vpop.f32.mrf.mxu0
        %v2606 = vadd.f32 %v2500, %v2605
        %v2607 = vpop.f32.mrf.mxu0
        %2608 = vdwg.mxu0
        %v2609 = vmax.f32 %v2593, 0.0
        %v2610 = vmax.f32 %v2606, 0.0
        %v2611 = vpack.c.bf16 %v2609, %v2609
        %v2612 = vpack.c.bf16 %v2610, %v2610
        %v2613 = vld [vmem:[#allocation23] sm:$0xf]
        %v2614 = vld [vmem:[#allocation23 + $0x4] sm:$0xf]
        %v2615 = vld [vmem:[#allocation23 + $0x8] sm:$0xf]
        %v2616 = vld [vmem:[#allocation23 + $0xc] sm:$0xf]
        %v2617 = vld [vmem:[#allocation23 + $0x10] sm:$0xf]
        %v2618 = vld [vmem:[#allocation23 + $0x14] sm:$0xf]
        %v2619 = vld [vmem:[#allocation23 + $0x18] sm:$0xf]
        %v2620 = vld [vmem:[#allocation23 + $0x1c] sm:$0xf]
        %v2621 = vld [vmem:[#allocation23 + $0x20] sm:$0xf]
        %v2622 = vld [vmem:[#allocation23 + $0x24] sm:$0xf]
        %v2623 = vld [vmem:[#allocation23 + $0x28] sm:$0xf]
        %v2624 = vld [vmem:[#allocation23 + $0x2c] sm:$0xf]
        %v2625 = vld [vmem:[#allocation23 + $0x30] sm:$0xf]
        %v2626 = vld [vmem:[#allocation23 + $0x34] sm:$0xf]
        %v2627 = vld [vmem:[#allocation23 + $0x38] sm:$0xf]
        %v2628 = vld [vmem:[#allocation23 + $0x3c] sm:$0xf]
        %v2629 = vld [vmem:[#allocation23 + $0x40] sm:$0xf]
        %v2630 = vld [vmem:[#allocation23 + $0x44] sm:$0xf]
        %v2631 = vld [vmem:[#allocation23 + $0x48] sm:$0xf]
        %v2632 = vld [vmem:[#allocation23 + $0x4c] sm:$0xf]
        %v2633 = vld [vmem:[#allocation23 + $0x50] sm:$0xf]
        %v2634 = vld [vmem:[#allocation23 + $0x54] sm:$0xf]
        %v2635 = vld [vmem:[#allocation23 + $0x58] sm:$0xf]
        %v2636 = vld [vmem:[#allocation23 + $0x5c] sm:$0xf]
        %v2637 = vld [vmem:[#allocation23 + $0x60] sm:$0xf]
        %v2638 = vld [vmem:[#allocation23 + $0x64] sm:$0xf]
        %v2639 = vld [vmem:[#allocation23 + $0x68] sm:$0xf]
        %v2640 = vld [vmem:[#allocation23 + $0x6c] sm:$0xf]
        %v2641 = vld [vmem:[#allocation23 + $0x70] sm:$0xf]
        %v2642 = vld [vmem:[#allocation23 + $0x74] sm:$0xf]
        %v2643 = vld [vmem:[#allocation23 + $0x78] sm:$0xf]
        %v2644 = vld [vmem:[#allocation23 + $0x7c] sm:$0xf]
        %v2645 = vld [vmem:[%s55] sm:$0x1]
        %v2647 = vperm.slane %v2645, 0
        %v2681 = vunpack.c.l.b16 %v2613
        %v2682 = vunpack.c.l.b16 %v2614
        %v2683 = vunpack.c.l.b16 %v2615
        %v2684 = vunpack.c.l.b16 %v2616
        %v2685 = vunpack.c.l.b16 %v2617
        %v2686 = vunpack.c.l.b16 %v2618
        %v2687 = vunpack.c.l.b16 %v2619
        %v2688 = vunpack.c.l.b16 %v2620
        %v2689 = vunpack.c.l.b16 %v2621
        %v2690 = vunpack.c.l.b16 %v2622
        %v2691 = vunpack.c.l.b16 %v2623
        %v2692 = vunpack.c.l.b16 %v2624
        %v2693 = vunpack.c.l.b16 %v2625
        %v2694 = vunpack.c.l.b16 %v2626
        %v2695 = vunpack.c.l.b16 %v2627
        %v2696 = vunpack.c.l.b16 %v2628
        %v2697 = vunpack.c.l.b16 %v2629
        %v2698 = vunpack.c.l.b16 %v2630
        %v2699 = vunpack.c.l.b16 %v2631
        %v2700 = vunpack.c.l.b16 %v2632
        %v2701 = vunpack.c.l.b16 %v2633
        %v2702 = vunpack.c.l.b16 %v2634
        %v2703 = vunpack.c.l.b16 %v2635
        %v2704 = vunpack.c.l.b16 %v2636
        %v2705 = vunpack.c.l.b16 %v2637
        %v2706 = vunpack.c.l.b16 %v2638
        %v2707 = vunpack.c.l.b16 %v2639
        %v2708 = vunpack.c.l.b16 %v2640
        %v2709 = vunpack.c.l.b16 %v2641
        %v2710 = vunpack.c.l.b16 %v2642
        %v2711 = vunpack.c.l.b16 %v2643
        %v2712 = vunpack.c.l.b16 %v2644
        %v2713 = vpack.c.b16 %v2682, %v2681
        %v2714 = vpack.c.b16 %v2684, %v2683
        %v2715 = vpack.c.b16 %v2686, %v2685
        %v2716 = vpack.c.b16 %v2688, %v2687
        %v2717 = vpack.c.b16 %v2690, %v2689
        %v2718 = vpack.c.b16 %v2692, %v2691
        %v2719 = vpack.c.b16 %v2694, %v2693
        %v2720 = vpack.c.b16 %v2696, %v2695
        %v2721 = vpack.c.b16 %v2698, %v2697
        %v2722 = vpack.c.b16 %v2700, %v2699
        %v2723 = vpack.c.b16 %v2702, %v2701
        %v2724 = vpack.c.b16 %v2704, %v2703
        %v2725 = vpack.c.b16 %v2706, %v2705
        %v2726 = vpack.c.b16 %v2708, %v2707
        %v2727 = vpack.c.b16 %v2710, %v2709
        %v2728 = vpack.c.b16 %v2712, %v2711
        %2745 = vmatpush.bf16.msra.mxu0 %v2720
        %2746 = vmatpush.bf16.msra.mxu0 %v2719
        %2747 = vmatpush.bf16.msra.mxu0 %v2718
        %2748 = vmatpush.bf16.msra.mxu0 %v2717
        %2749 = vmatpush.bf16.msra.mxu0 %v2716
        %2750 = vmatpush.bf16.msra.mxu0 %v2715
        %2751 = vmatpush.bf16.msra.mxu0 %v2714
        %2752 = vmatpush.bf16.msra.mxu0 %v2713
        %2753 = vmatmul.bf16.gmra.mxu0 %v2611
        %v2754 = vpop.f32.mrf.mxu0
        %v2755 = vadd.f32 %v2647, %v2754
        %v2756 = vpop.f32.mrf.mxu0
        %2757 = vdwg.mxu0
        %2758 = vmatpush.bf16.msra.mxu0 %v2728
        %2759 = vmatpush.bf16.msra.mxu0 %v2727
        %2760 = vmatpush.bf16.msra.mxu0 %v2726
        %2761 = vmatpush.bf16.msra.mxu0 %v2725
        %2762 = vmatpush.bf16.msra.mxu0 %v2724
        %2763 = vmatpush.bf16.msra.mxu0 %v2723
        %2764 = vmatpush.bf16.msra.mxu0 %v2722
        %2765 = vmatpush.bf16.msra.mxu0 %v2721
        %2766 = vmatmul.bf16.gmra.mxu0 %v2612
        %v2767 = vpop.f32.mrf.mxu0
        %v2768 = vadd.f32 %v2755, %v2767
        %v2769 = vpop.f32.mrf.mxu0
        %2770 = vdwg.mxu0
        %v2771 = vld [vmem:[%s57] sm:$0x1]
        %v2772 = vld [vmem:[%s59] sm:$0x1]
        %v2773 = vadd.f32 %v2768, %v2479
        %2774 = vadd.xlane.f32.xlu0 %v2773
        %v2775 = vpop.xlane.xlu0 %2774
        %v2776 = vmul.f32 %v2775, %v1820
        %v2777 = vsub.f32 %v2773, %v2776
        %v2778 = vmul.f32 %v2777, %v2777
        %2779 = vadd.xlane.f32.xlu0 %v2778
        %v2780 = vpop.xlane.xlu0 %2779
        %v2781 = vmul.f32 %v2780, %v1820
        %v2782 = vadd.f32 %v2781, 1e-05
        %v2783 = vrsqrt.pop %v2782
        %v2784 = vmul.f32 %v2783, %v2782
        %v2785 = vmul.f32 %v2784, %v2783
        %v2786 = vmul.f32 0.5, %v2785
        %v2787 = vsub.f32 1.5, %v2786
        %v2788 = vmul.f32 %v2783, %v2787
        %vm2789 = vweird.f32 %v2782
        %vm2790 = vweird.f32 %v2783
        %vm2791 = vmor %vm2789, %vm2790
        %v2792 = vsel %vm2791, %v2783, %v2788
        %v2793 = vmul.f32 %v2777, %v2792
        %v2795 = vperm.slane %v2771, 0
        %v2797 = vmul.f32 %v2793, %v2795
        %v2799 = vperm.slane %v2772, 0
        %v2801 = vadd.f32 %v2797, %v2799
        %2802 = vst [vmem:[%s1229] sm:$0xff] %v2801
        %s2803 = sand.u32 %s747, 1
        %s2804 = scalar_lea.sflag [#allocation4], %s2803
        %s2805 = sand.u32 %s747, 1
        %s2806 = smul.addr %s2805, 8
        %s2807 = scalar_lea.vmem [#allocation25], %s2806
        // Predicated region
        $region197: #{tpu_custom_call.1} parent=139 // pred_check
          %p2808 = pneg %p757
        $region198: #{tpu_custom_call.1} parent=139 // pred_check_branch
          %2810 = sbr.rel (%p2808) target = $region200
        $region199: #{tpu_custom_call.1} parent=139 // pred_region
          %2812 = vsyncadd %s2804, 0
          %s2813 = smul.addr %s89, 8
          %s2814 = scalar_lea.hbm %s61, %s2813
          %s2816 = sshll.u32 %s2807, 4
          %s2817 = int_to_ptr.vmem [resolvable:$true] %s2816
          %s2818 = sshll.u32 %s2814, 4
          %s2819 = int_to_ptr.hbm [resolvable:$true] %s2818
          %2821 = dma.vmem_to_hbm [thread:$0]  %s2817, 128, %s2819, %s2804
        $region200: #{tpu_custom_call.1} parent=139 // pred_fallthru
          _
      $region140: #{tpu_custom_call.1} parent=5 // pred_fallthru
        _
      %p2822 = scmp.le.s32.totalorder 2, %s84
      // Predicated region
      $region201: #{tpu_custom_call.1} parent=5 // pred_check
        %p2823 = pneg %p2822
      $region202: #{tpu_custom_call.1} parent=5 // pred_check_branch
        %2825 = sbr.rel (%p2823) target = $region204
      $region203: #{tpu_custom_call.1} parent=5 // pred_region
        %s2826 = ssub.s32 %s84, 2
        // Predicated region
        $region205: #{tpu_custom_call.1} parent=203 // pred_check
          %p2827 = pneg %p763
        $region206: #{tpu_custom_call.1} parent=203 // pred_check_branch
          %2829 = sbr.rel (%p2827) target = $region208
        $region207: #{tpu_custom_call.1} parent=203 // pred_region
          %s2830 = sand.u32 %s748, 1
          %s2831 = scalar_lea.sflag [#allocation4], %s2830
          %s2832 = sand.u32 %s748, 1
          %s2833 = smul.addr %s2832, 8
          %s2834 = scalar_lea.vmem [#allocation25], %s2833
          %2836 = dma.done %s2831, 128
        $region208: #{tpu_custom_call.1} parent=203 // pred_fallthru
          _
      $region204: #{tpu_custom_call.1} parent=5 // pred_fallthru
        _
    $region6: #{tpu_custom_call.1} parent=1 // loop_footer
      %s88 = sadd.s32 1, %s84
    $region7: #{tpu_custom_call.1} parent=1 // loop_footer_branch
      %83 = sbr.rel target = $region3
    $region8: #{tpu_custom_call.1} parent=1 // loop_exit
      _
    %2837 = vsyncpa [#allocation3], 1
    %s2838 = scalar_lea.sflag [#allocation3], 1
    %2839 = vsyncpa %s2838, 1
    %2840 = vsyncpa [#allocation6], 1
    %s2841 = scalar_lea.sflag [#allocation6], 1
    %2842 = vsyncpa %s2841, 1
    %2843 = vsyncpa [#allocation9], 1
    %s2844 = scalar_lea.sflag [#allocation9], 1
    %2845 = vsyncpa %s2844, 1
    %2846 = vsyncpa [#allocation12], 1
    %2847 = vsyncpa [#allocation15], 1
    %2848 = vsyncpa [#allocation18], 1
    %2849 = vsyncpa [#allocation21], 1
    %2850 = vsyncpa [#allocation24], 1
    %2851 = vsyncpa [#allocation4], 1
    %s2852 = scalar_lea.sflag [#allocation4], 1
    %2853 = vsyncpa %s2852, 1

</llo_original>
